<compile_context>
chip_gen: v6e
topology: v6e:2x2x1
jax: 0.10.0
libtpu: 0.0.40
codegen_flags: <defaults>
</compile_context>

<pallas_src>
import jax
import jax.numpy as jnp
import numpy as np
from jax.experimental import pallas as pl
from jax.experimental.pallas import tpu as pltpu

H_IN = W_IN = 28   # spatial size implied by the arithmetic (3x3 before final pool)


def _round_up(x, m):
    return ((x + m - 1) // m) * m


# Wrap-around safety of the lane shifts (see shl() in the kernel): for every
# stage, the largest per-sample source column a VALID output column ever reads
# is  max_valid_out_col + col_stride * max_taps, and it must stay strictly
# below the per-sample column pitch W_IN (=28), so lanes that wrap around the
# block edge only ever land in per-sample garbage columns.
#   stage             max_valid_out_col  col_stride  max_taps
#   conv1 (k=5)              23              1          4
#   pool1 col half           22              1          1
#   conv2 (k=3)              18              2          2
#   pool2 col half           16              2          1
#   conv3 (k=3)               8              4          2
#   pool3 col half            0              4          2
_SHIFT_READS = ((23, 1, 4), (22, 1, 1), (18, 2, 2), (16, 2, 1), (8, 4, 2), (0, 4, 2))
assert all(w + s * t < W_IN for w, s, t in _SHIFT_READS), \
    "lane-shift wrap-around would corrupt valid columns"


# ----------------------------------------------------------------------------
# Host-side construction of the small, batch-independent left matrices.
# ----------------------------------------------------------------------------
def _conv_left_mats(w, h_in):
    """w: (Cout, Cin, k, k) OIHW.  Returns (k, Cout*Hout, Cin*Hin) f32 with
    mats[kw, co*Hout + i, ci*Hin + h] = w[co, ci, h - i, kw] for 0 <= h-i < k.
    Left-multiplying the (Cin*Hin, B*28) activation slab by mats[kw] performs
    the contraction over (ci, kh); the kw contribution comes from a lane shift.
    """
    c_out, c_in, k, _ = w.shape
    h_out = h_in - k + 1
    ind = np.zeros((k, h_out, h_in), np.float32)
    for kh in range(k):
        for i in range(h_out):
            ind[kh, i, i + kh] = 1.0
    m = jnp.einsum('ocab,aih->boich', w.astype(jnp.float32), jnp.asarray(ind))
    return m.reshape(k, c_out * h_out, c_in * h_in)


def _pool_row_sel(c, h_in):
    """0/1 selectors for the row half of a 2x2 max-pool, all channels at once.
    Returns (2, C*Hout, C*Hin): [0] picks even input rows, [1] odd input rows."""
    h_out = h_in // 2
    p = np.zeros((2, c * h_out, c * h_in), np.float32)
    for ch in range(c):
        for i in range(h_out):
            p[0, ch * h_out + i, ch * h_in + 2 * i] = 1.0
            p[1, ch * h_out + i, ch * h_in + 2 * i + 1] = 1.0
    return p


def _final_row_sel():
    """(3, 2, 6) selectors: [i] picks row i of each channel's 3x3 conv3 map."""
    s = np.zeros((3, 2, 6), np.float32)
    for i in range(3):
        for ch in range(2):
            s[i, ch, ch * 3 + i] = 1.0
    return s


def _default_block_b():
    """Per-generation default samples per grid step."""
    try:
        kind = jax.devices()[0].device_kind.lower()
    except Exception:
        return 256
    # v5e-class (and older) parts: smaller working set; v6e / v7x: 512.
    if ("v5" in kind) or ("v4" in kind) or ("v3" in kind) or ("v2" in kind):
        return 256
    return 512


# ----------------------------------------------------------------------------
# Kernel
# ----------------------------------------------------------------------------
def net_kernel(x_ref, q1_ref, q2_ref, q3_ref, out_ref):
    def shl(a, d):
        # Left-shift columns by `d` lanes on the otherwise-idle XLU.
        # pltpu.roll follows jnp.roll semantics (out[j] = in[(j - shift) % n]),
        # so a left shift by d is a roll by (n - d).  Wrapped lanes only land
        # in per-sample garbage columns (see _SHIFT_READS invariant).
        n = a.shape[-1]
        return pltpu.roll(a, n - d, a.ndim - 1)

    x = x_ref[...]                                                    # (28, L)

    # Stage 1: conv1(k5) + 2x2 max-pool + relu.  Pool-row selection and the
    # (ci,kh) contraction are folded into q1; the 5 kw taps are stacked along
    # the contraction axis -> ONE deep matmul for both pool parities.
    a1 = jnp.concatenate([x] + [shl(x, kw) for kw in range(1, 5)], axis=0)   # (140, L)
    y1 = jnp.dot(q1_ref[...], a1, preferred_element_type=jnp.float32)        # (96, L)
    h1 = jnp.maximum(y1[0:48], y1[48:96])        # pool rows (even/odd parity)
    h1 = jnp.maximum(h1, shl(h1, 1))             # pool cols (deferred stride -> 2)
    h1 = jnp.maximum(h1, 0.0)                    # relu

    # Stage 2: conv2(k3, lane stride 2) + 2x2 max-pool + relu.
    a2 = jnp.concatenate([h1, shl(h1, 2), shl(h1, 4)], axis=0)               # (144, L)
    h2 = jnp.maximum(
        jnp.dot(q2_ref[0], a2, preferred_element_type=jnp.float32),
        jnp.dot(q2_ref[1], a2, preferred_element_type=jnp.float32))          # (20, L)
    h2 = jnp.maximum(h2, shl(h2, 2))             # pool cols (stride -> 4)
    h2 = jnp.maximum(h2, 0.0)

    # Stage 3: conv3(k3, lane stride 4) + 3x3 max-pool (= global max of the
    # 3x3 map).  Row selection folded into q3 (row 2*i + ch = conv3 row i).
    a3 = jnp.concatenate([h2, shl(h2, 4), shl(h2, 8)], axis=0)               # (60, L)
    u = jnp.dot(q3_ref[...], a3, preferred_element_type=jnp.float32)         # (6, L)
    t = jnp.maximum(jnp.maximum(u[0:2], u[2:4]), u[4:6])                     # max over rows
    t = jnp.maximum(jnp.maximum(t, shl(t, 4)), shl(t, 8))                    # max over cols

    # log_softmax over the two channel rows.
    r0 = t[0:1, :]
    r1 = t[1:2, :]
    m = jnp.maximum(r0, r1)
    lse = m + jnp.log(jnp.exp(r0 - m) + jnp.exp(r1 - m))
    out_ref[...] = jnp.concatenate([r0 - lse, r1 - lse], axis=0)             # (2, L)


# ----------------------------------------------------------------------------
# Wrapper
# ----------------------------------------------------------------------------
def net_forward(x_nchw, w1, w2, w3, block_b=None):
    """x_nchw: (N, 1, 28, 28); w1: (4,1,5,5); w2: (4,4,3,3); w3: (2,4,3,3).

    Returns (N, 2) log-probabilities matching PyTorch Net.forward (fc1 is
    declared but unused by the reference forward, so it is omitted).

    block_b = samples per grid step.  Defaults: 512 on v6e/v7x, 256 on
    v5e-class parts.  The B=512 working set is ~20-30 MB of VMEM temporaries,
    which fits under the 48 MiB scoped limit set below and well under v7x's
    64 MiB *physical* VMEM (v6e/v5e have 128 MiB physical).  B is also capped
    so the grid keeps >= 2 steps whenever N allows, letting the "parallel"
    batch axis shard across both v7x TensorCores.
    """
    N = x_nchw.shape[0]
    if block_b is None:
        block_b = _default_block_b()
    # B must be a multiple of 32 so every block's lane width (B*28) is a
    # multiple of 128.
    B = _round_up(max(int(block_b), 1), 32)
    B = min(B, max(32, _round_up(-(-N // 2), 32)))   # keep >= 2 grid steps if possible
    n_pad = _round_up(N, B)
    L = B * W_IN

    x = x_nchw.reshape(N, H_IN, W_IN).astype(jnp.float32)
    if n_pad != N:
        x = jnp.concatenate(
            [x, jnp.zeros((n_pad - N, H_IN, W_IN), jnp.float32)], axis=0)
    # Layout: rows = image row h, cols = b*28 + w (batch on lanes).  This is a
    # single XLA copy; doing it in-kernel needs a sublane<->lane relayout that
    # Mosaic lowers poorly, and input DMA is already fully hidden (see review).
    xt = x.transpose(1, 0, 2).reshape(H_IN, n_pad * W_IN)

    # Per-kw conv matrices and pool/final row selectors.
    m1 = _conv_left_mats(w1, 28)             # (5, 96, 28)
    m2 = _conv_left_mats(w2, 12)             # (3, 40, 48)
    m3 = _conv_left_mats(w3, 5)              # (3, 6, 20)
    p1 = jnp.asarray(_pool_row_sel(4, 24))   # (2, 48, 96)
    p2 = jnp.asarray(_pool_row_sel(4, 10))   # (2, 20, 40)
    s3 = jnp.asarray(_final_row_sel())       # (3, 2, 6)

    # Fold the (linear) pooling / final row selectors into the conv matrices
    # and stack the kw taps along the contraction axis: one deep matmul per
    # stage (per pool parity) instead of chains of shallow dots.
    q1 = jnp.einsum('pri,kij->prkj', p1, m1).reshape(96, 5 * 28)      # (96, 140)
    q2 = jnp.einsum('pri,kij->prkj', p2, m2).reshape(2, 20, 3 * 48)   # (2, 20, 144)
    q3 = jnp.einsum('pri,kij->prkj', s3, m3).reshape(6, 3 * 20)       # (6, 60)

    out = pl.pallas_call(
        net_kernel,
        out_shape=jax.ShapeDtypeStruct((2, n_pad * W_IN), jnp.float32),
        grid=(n_pad // B,),
        in_specs=[
            pl.BlockSpec((H_IN, L), lambda n: (0, n)),
            pl.BlockSpec(q1.shape, lambda n: (0, 0)),        # whole array in VMEM
            pl.BlockSpec(q2.shape, lambda n: (0, 0, 0)),
            pl.BlockSpec(q3.shape, lambda n: (0, 0)),
        ],
        out_specs=pl.BlockSpec((2, L), lambda n: (0, n)),
        compiler_params=pltpu.CompilerParams(
            dimension_semantics=("parallel",),
            vmem_limit_bytes=48 * 1024 * 1024),
    )(xt, q1, q2, q3)

    logits = out[:, ::W_IN]          # column b*28 of each sample holds its logits
    return logits.T[:N]              # (N, 2)


# ----------------------------------------------------------------------------
# Pure-JAX reference matching the PyTorch forward (NCHW).
# ----------------------------------------------------------------------------
def _reference(x, w1, w2, w3):
    def conv(y, w):
        dn = jax.lax.conv_dimension_numbers(y.shape, w.shape,
                                            ("NCHW", "OIHW", "NCHW"))
        return jax.lax.conv_general_dilated(y, w, (1, 1), "VALID",
                                            dimension_numbers=dn)

    def pool(y, k):
        return jax.lax.reduce_window(y, -jnp.inf, jax.lax.max,
                                     (1, 1, k, k), (1, 1, k, k), "VALID")

    y = jnp.maximum(pool(conv(x, w1), 2), 0.0)
    y = jnp.maximum(pool(conv(y, w2), 2), 0.0)
    y = pool(conv(y, w3), 3)
    y = y.reshape(-1, 2)
    return jax.nn.log_softmax(y, axis=1)


if __name__ == "__main__":
    key = jax.random.PRNGKey(0)
    kx, k1, k2, k3 = jax.random.split(key, 4)

    N = 2
    x = jax.random.normal(kx, (N, 1, H_IN, W_IN), dtype=jnp.float32)

    # Deterministic weight init (uniform, kaiming-like scale); shapes from __init__.
    def init(k, shape):
        fan_in = int(np.prod(shape[1:]))
        bound = 1.0 / np.sqrt(fan_in)
        return jax.random.uniform(k, shape, jnp.float32, -bound, bound)

    w1 = init(k1, (4, 1, 5, 5))
    w2 = init(k2, (4, 4, 3, 3))
    w3 = init(k3, (2, 4, 3, 3))

    out = jax.block_until_ready(net_forward(x, w1, w2, w3))
    ref = jax.block_until_ready(_reference(x, w1, w2, w3))
    np.testing.assert_allclose(np.asarray(out), np.asarray(ref),
                               rtol=1e-4, atol=1e-4)

    # Multi-block path (grid > 1, batch padding, both-TensorCore sharding).
    N2 = 40
    x2 = jax.random.normal(kx, (N2, 1, H_IN, W_IN), dtype=jnp.float32)
    out2 = jax.block_until_ready(net_forward(x2, w1, w2, w3, block_b=32))
    ref2 = jax.block_until_ready(_reference(x2, w1, w2, w3))
    np.testing.assert_allclose(np.asarray(out2), np.asarray(ref2),
                               rtol=1e-4, atol=1e-4)

    print("KERNEL_OK")
</pallas_src>

<mosaic_0001>
module attributes {stable_mosaic.version = 11 : i64} {
  func.func @net_kernel(%arg0: i32, %arg1: memref<28x896xf32, #tpu.memory_space<vmem>>, %arg2: memref<96x140xf32, #tpu.memory_space<vmem>>, %arg3: memref<2x20x144xf32, #tpu.memory_space<vmem>>, %arg4: memref<6x60xf32, #tpu.memory_space<vmem>>, %arg5: memref<2x896xf32, #tpu.memory_space<vmem>>) attributes {dimension_semantics = [#tpu.dimension_semantics<parallel>], iteration_bounds = array<i64: 1>, scalar_prefetch = 0 : i64, scratch_operands = 0 : i64, tpu.core_type = #tpu.core_type<tc>, window_params = [{transform_indices = @transform_0, window_bounds = array<i64: 28, 896>}, {pipeline_mode = #tpu.pipeline_mode<synchronous>, transform_indices = @transform_1, window_bounds = array<i64: 96, 140>}, {pipeline_mode = #tpu.pipeline_mode<synchronous>, transform_indices = @transform_2, window_bounds = array<i64: 2, 20, 144>}, {pipeline_mode = #tpu.pipeline_mode<synchronous>, transform_indices = @transform_3, window_bounds = array<i64: 6, 60>}, {transform_indices = @transform_4, window_bounds = array<i64: 2, 896>}]} {
    %c0 = arith.constant 0 : index
    %c0_0 = arith.constant 0 : index
    %0 = vector.load %arg1[%c0, %c0_0] : memref<28x896xf32, #tpu.memory_space<vmem>>, vector<28x896xf32>
    %c895_i32 = arith.constant 895 : i32
    %1 = tpu.dynamic_rotate %0 by %c895_i32 dim 1 : vector<28x896xf32>, i32 -> vector<28x896xf32>
    %c894_i32 = arith.constant 894 : i32
    %2 = tpu.dynamic_rotate %0 by %c894_i32 dim 1 : vector<28x896xf32>, i32 -> vector<28x896xf32>
    %c893_i32 = arith.constant 893 : i32
    %3 = tpu.dynamic_rotate %0 by %c893_i32 dim 1 : vector<28x896xf32>, i32 -> vector<28x896xf32>
    %c892_i32 = arith.constant 892 : i32
    %4 = tpu.dynamic_rotate %0 by %c892_i32 dim 1 : vector<28x896xf32>, i32 -> vector<28x896xf32>
    %5 = tpu.concatenate %0, %1, %2, %3, %4 in 0 : vector<28x896xf32>, vector<28x896xf32>, vector<28x896xf32>, vector<28x896xf32>, vector<28x896xf32> -> vector<140x896xf32>
    %c0_1 = arith.constant 0 : index
    %c0_2 = arith.constant 0 : index
    %6 = vector.load %arg2[%c0_1, %c0_2] : memref<96x140xf32, #tpu.memory_space<vmem>>, vector<96x140xf32>
    %cst = arith.constant dense<0.000000e+00> : vector<96x896xf32>
    %7 = tpu.matmul %6, %5, %cst {dimension_numbers = #tpu.dot_dimension_numbers<[1], [0], [0], [1], [0, 0, 1, 1], [], []>} : vector<96x140xf32>, vector<140x896xf32>, vector<96x896xf32> -> vector<96x896xf32>
    %8 = vector.extract_strided_slice %7 {offsets = [0, 0], sizes = [48, 896], strides = [1, 1]} : vector<96x896xf32> to vector<48x896xf32>
    %9 = vector.extract_strided_slice %7 {offsets = [48, 0], sizes = [48, 896], strides = [1, 1]} : vector<96x896xf32> to vector<48x896xf32>
    %10 = arith.maximumf %8, %9 : vector<48x896xf32>
    %c895_i32_3 = arith.constant 895 : i32
    %11 = tpu.dynamic_rotate %10 by %c895_i32_3 dim 1 : vector<48x896xf32>, i32 -> vector<48x896xf32>
    %12 = arith.maximumf %10, %11 : vector<48x896xf32>
    %cst_4 = arith.constant 0.000000e+00 : f32
    %13 = vector.broadcast %cst_4 : f32 to vector<48x896xf32>
    %14 = arith.maximumf %12, %13 : vector<48x896xf32>
    %c894_i32_5 = arith.constant 894 : i32
    %15 = tpu.dynamic_rotate %14 by %c894_i32_5 dim 1 : vector<48x896xf32>, i32 -> vector<48x896xf32>
    %c892_i32_6 = arith.constant 892 : i32
    %16 = tpu.dynamic_rotate %14 by %c892_i32_6 dim 1 : vector<48x896xf32>, i32 -> vector<48x896xf32>
    %17 = tpu.concatenate %14, %15, %16 in 0 : vector<48x896xf32>, vector<48x896xf32>, vector<48x896xf32> -> vector<144x896xf32>
    %c0_7 = arith.constant 0 : index
    %c0_8 = arith.constant 0 : index
    %c0_9 = arith.constant 0 : index
    %18 = vector.load %arg3[%c0_7, %c0_8, %c0_9] : memref<2x20x144xf32, #tpu.memory_space<vmem>>, vector<1x20x144xf32>
    %19 = vector.shape_cast %18 : vector<1x20x144xf32> to vector<20x144xf32>
    %cst_10 = arith.constant dense<0.000000e+00> : vector<20x896xf32>
    %20 = tpu.matmul %19, %17, %cst_10 {dimension_numbers = #tpu.dot_dimension_numbers<[1], [0], [0], [1], [0, 0, 1, 1], [], []>} : vector<20x144xf32>, vector<144x896xf32>, vector<20x896xf32> -> vector<20x896xf32>
    %c1 = arith.constant 1 : index
    %c0_11 = arith.constant 0 : index
    %c0_12 = arith.constant 0 : index
    %21 = vector.load %arg3[%c1, %c0_11, %c0_12] : memref<2x20x144xf32, #tpu.memory_space<vmem>>, vector<1x20x144xf32>
    %22 = vector.shape_cast %21 : vector<1x20x144xf32> to vector<20x144xf32>
    %cst_13 = arith.constant dense<0.000000e+00> : vector<20x896xf32>
    %23 = tpu.matmul %22, %17, %cst_13 {dimension_numbers = #tpu.dot_dimension_numbers<[1], [0], [0], [1], [0, 0, 1, 1], [], []>} : vector<20x144xf32>, vector<144x896xf32>, vector<20x896xf32> -> vector<20x896xf32>
    %24 = arith.maximumf %20, %23 : vector<20x896xf32>
    %c894_i32_14 = arith.constant 894 : i32
    %25 = tpu.dynamic_rotate %24 by %c894_i32_14 dim 1 : vector<20x896xf32>, i32 -> vector<20x896xf32>
    %26 = arith.maximumf %24, %25 : vector<20x896xf32>
    %cst_15 = arith.constant 0.000000e+00 : f32
    %27 = vector.broadcast %cst_15 : f32 to vector<20x896xf32>
    %28 = arith.maximumf %26, %27 : vector<20x896xf32>
    %c892_i32_16 = arith.constant 892 : i32
    %29 = tpu.dynamic_rotate %28 by %c892_i32_16 dim 1 : vector<20x896xf32>, i32 -> vector<20x896xf32>
    %c888_i32 = arith.constant 888 : i32
    %30 = tpu.dynamic_rotate %28 by %c888_i32 dim 1 : vector<20x896xf32>, i32 -> vector<20x896xf32>
    %31 = tpu.concatenate %28, %29, %30 in 0 : vector<20x896xf32>, vector<20x896xf32>, vector<20x896xf32> -> vector<60x896xf32>
    %c0_17 = arith.constant 0 : index
    %c0_18 = arith.constant 0 : index
    %32 = vector.load %arg4[%c0_17, %c0_18] : memref<6x60xf32, #tpu.memory_space<vmem>>, vector<6x60xf32>
    %cst_19 = arith.constant dense<0.000000e+00> : vector<6x896xf32>
    %33 = tpu.matmul %32, %31, %cst_19 {dimension_numbers = #tpu.dot_dimension_numbers<[1], [0], [0], [1], [0, 0, 1, 1], [], []>} : vector<6x60xf32>, vector<60x896xf32>, vector<6x896xf32> -> vector<6x896xf32>
    %34 = vector.extract_strided_slice %33 {offsets = [0, 0], sizes = [2, 896], strides = [1, 1]} : vector<6x896xf32> to vector<2x896xf32>
    %35 = vector.extract_strided_slice %33 {offsets = [2, 0], sizes = [2, 896], strides = [1, 1]} : vector<6x896xf32> to vector<2x896xf32>
    %36 = arith.maximumf %34, %35 : vector<2x896xf32>
    %37 = vector.extract_strided_slice %33 {offsets = [4, 0], sizes = [2, 896], strides = [1, 1]} : vector<6x896xf32> to vector<2x896xf32>
    %38 = arith.maximumf %36, %37 : vector<2x896xf32>
    %c892_i32_20 = arith.constant 892 : i32
    %39 = tpu.dynamic_rotate %38 by %c892_i32_20 dim 1 : vector<2x896xf32>, i32 -> vector<2x896xf32>
    %40 = arith.maximumf %38, %39 : vector<2x896xf32>
    %c888_i32_21 = arith.constant 888 : i32
    %41 = tpu.dynamic_rotate %38 by %c888_i32_21 dim 1 : vector<2x896xf32>, i32 -> vector<2x896xf32>
    %42 = arith.maximumf %40, %41 : vector<2x896xf32>
    %43 = vector.extract_strided_slice %42 {offsets = [0, 0], sizes = [1, 896], strides = [1, 1]} : vector<2x896xf32> to vector<1x896xf32>
    %44 = vector.extract_strided_slice %42 {offsets = [1, 0], sizes = [1, 896], strides = [1, 1]} : vector<2x896xf32> to vector<1x896xf32>
    %45 = arith.maximumf %43, %44 : vector<1x896xf32>
    %46 = arith.subf %43, %45 : vector<1x896xf32>
    %47 = math.exp %46 : vector<1x896xf32>
    %48 = arith.subf %44, %45 : vector<1x896xf32>
    %49 = math.exp %48 : vector<1x896xf32>
    %50 = arith.addf %47, %49 : vector<1x896xf32>
    %51 = math.log %50 : vector<1x896xf32>
    %52 = arith.addf %45, %51 : vector<1x896xf32>
    %53 = arith.subf %43, %52 : vector<1x896xf32>
    %54 = arith.subf %44, %52 : vector<1x896xf32>
    %55 = tpu.concatenate %53, %54 in 0 : vector<1x896xf32>, vector<1x896xf32> -> vector<2x896xf32>
    %c0_22 = arith.constant 0 : index
    %c0_23 = arith.constant 0 : index
    %56 = vector.load %arg5[%c0_22, %c0_23] : memref<2x896xf32, #tpu.memory_space<vmem>>, vector<2x896xf32>
    tpu.vector_store %arg5[%c0_22, %c0_23], %55 {strides = array<i32>} : memref<2x896xf32, #tpu.memory_space<vmem>>, vector<2x896xf32>,
    return
  }
  func.func @transform_0(%arg0: i32) -> (i32, i32) {
    %c0_i32 = arith.constant 0 : i32
    %c0_i32_0 = arith.constant 0 : i32
    return %c0_i32, %arg0 : i32, i32
  }
  func.func @transform_1(%arg0: i32) -> (i32, i32) {
    %c0_i32 = arith.constant 0 : i32
    %c0_i32_0 = arith.constant 0 : i32
    %c0_i32_1 = arith.constant 0 : i32
    return %c0_i32, %c0_i32_0 : i32, i32
  }
  func.func @transform_2(%arg0: i32) -> (i32, i32, i32) {
    %c0_i32 = arith.constant 0 : i32
    %c0_i32_0 = arith.constant 0 : i32
    %c0_i32_1 = arith.constant 0 : i32
    %c0_i32_2 = arith.constant 0 : i32
    return %c0_i32, %c0_i32_0, %c0_i32_1 : i32, i32, i32
  }
  func.func @transform_3(%arg0: i32) -> (i32, i32) {
    %c0_i32 = arith.constant 0 : i32
    %c0_i32_0 = arith.constant 0 : i32
    %c0_i32_1 = arith.constant 0 : i32
    return %c0_i32, %c0_i32_0 : i32, i32
  }
  func.func @transform_4(%arg0: i32) -> (i32, i32) {
    %c0_i32 = arith.constant 0 : i32
    %c0_i32_0 = arith.constant 0 : i32
    return %c0_i32, %arg0 : i32, i32
  }
}

</mosaic_0001>

<llo_original>
// kernel: tpu_custom_call.1
$region0: #{tpu_custom_call.1}
  #allocation0 [shape = 'u32[]', space=smem, size = 0x4, offset = 0x4, fixed_abs, tag = 'smem constant byte address 0x4 - core index']
  #allocation1 [shape = 'u32[144,128]{1,0:T(1,128)}', space=vmem, size = 0x12000, scoped, tag = 'internal scratch']
  %s0 = inlined_call_operand.vmem [shape: f32[28,896], index: 0, kind: input, shape index: {}]
  %s1 = inlined_call_operand.vmem [shape: f32[96,140], index: 1, kind: input, shape index: {}]
  %s2 = inlined_call_operand.vmem [shape: f32[2,20,144], index: 2, kind: input, shape index: {}]
  %s3 = inlined_call_operand.vmem [shape: f32[6,60], index: 3, kind: input, shape index: {}]
  %s4 = inlined_call_operand.hbm [shape: f32[2,896], index: 4, kind: output, shape index: {}]
  %s5 = sld [smem:[#allocation0]]
  $region26: #{tpu_custom_call.1} parent=0
    _
  %s7 = ssub.s32 1, %s5
  %s8 = scalar_select 0, %s7, %s5
  $region1: #{tpu_custom_call.1} parent=0
    #allocation2 [shape = 'u8[7168]{0}', space=vmem, size = 0x1c00, scoped, tag = 'output window, operand 0, single buffered']
    #allocation3 [shape = 's32[1]{0}', space=sflag, size = 0x4, scoped, tag = 'scoped memory for tpu_custom_call.1']
    %9 = vsyncpa [#allocation3], 0
    // Predicated region
    $region2: #{tpu_custom_call.1} parent=1 // pred_check
      _
    $region3: #{tpu_custom_call.1} parent=1 // pred_check_branch
      %11 = sbr.rel (0) target = $region5
    $region4: #{tpu_custom_call.1} parent=1 // pred_region
      _
    $region5: #{tpu_custom_call.1} parent=1 // pred_fallthru
      _
    // Predicated region
    $region6: #{tpu_custom_call.1} parent=1 // pred_check
      _
    $region7: #{tpu_custom_call.1} parent=1 // pred_check_branch
      %13 = sbr.rel (0) target = $region9
    $region8: #{tpu_custom_call.1} parent=1 // pred_region
      _
    $region9: #{tpu_custom_call.1} parent=1 // pred_fallthru
      _
    // Predicated region
    $region10: #{tpu_custom_call.1} parent=1 // pred_check
      _
    $region11: #{tpu_custom_call.1} parent=1 // pred_check_branch
      %15 = sbr.rel (0) target = $region13
    $region12: #{tpu_custom_call.1} parent=1 // pred_region
      _
    $region13: #{tpu_custom_call.1} parent=1 // pred_fallthru
      _
    // Predicated region
    $region14: #{tpu_custom_call.1} parent=1 // pred_check
      _
    $region15: #{tpu_custom_call.1} parent=1 // pred_check_branch
      %17 = sbr.rel (0) target = $region17
    $region16: #{tpu_custom_call.1} parent=1 // pred_region
      _
    $region17: #{tpu_custom_call.1} parent=1 // pred_fallthru
      _
    %v18 = vld [vmem:[%s0] sm:$0xff]
    %v19 = vld [vmem:[%s0 + $0x8] sm:$0xff]
    %v20 = vld [vmem:[%s0 + $0x10] sm:$0xff]
    %v21 = vld [vmem:[%s0 + $0x18] sm:$0xff]
    %v22 = vld [vmem:[%s0 + $0x20] sm:$0xff]
    %v23 = vld [vmem:[%s0 + $0x28] sm:$0xff]
    %v24 = vld [vmem:[%s0 + $0x30] sm:$0xff]
    %v25 = vld [vmem:[%s0 + $0x38] sm:$0xff]
    %v26 = vld [vmem:[%s0 + $0x40] sm:$0xff]
    %v27 = vld [vmem:[%s0 + $0x48] sm:$0xff]
    %v28 = vld [vmem:[%s0 + $0x50] sm:$0xff]
    %v29 = vld [vmem:[%s0 + $0x58] sm:$0xff]
    %v30 = vld [vmem:[%s0 + $0x60] sm:$0xff]
    %v31 = vld [vmem:[%s0 + $0x68] sm:$0xff]
    %v32 = vld [vmem:[%s0 + $0x70] sm:$0xff]
    %v33 = vld [vmem:[%s0 + $0x78] sm:$0xff]
    %v34 = vld [vmem:[%s0 + $0x80] sm:$0xff]
    %v35 = vld [vmem:[%s0 + $0x88] sm:$0xff]
    %v36 = vld [vmem:[%s0 + $0x90] sm:$0xff]
    %v37 = vld [vmem:[%s0 + $0x98] sm:$0xff]
    %v38 = vld [vmem:[%s0 + $0xa0] sm:$0xff]
    %v39 = vld [vmem:[%s0 + $0xa8] sm:$0xf]
    %v40 = vld [vmem:[%s0 + $0xb0] sm:$0xf]
    %v41 = vld [vmem:[%s0 + $0xb8] sm:$0xf]
    %v42 = vld [vmem:[%s0 + $0xc0] sm:$0xf]
    %v43 = vld [vmem:[%s0 + $0xc8] sm:$0xf]
    %v44 = vld [vmem:[%s0 + $0xd0] sm:$0xf]
    %v45 = vld [vmem:[%s0 + $0xd8] sm:$0xf]
    %46 = vrot.lane.b32.xlu0 %v18, 127
    %v47 = vpop.permute.xlu0 %46
    %48 = vrot.lane.b32.xlu0 %v25, 127
    %v49 = vpop.permute.xlu0 %48
    %50 = vrot.lane.b32.xlu0 %v32, 127
    %v51 = vpop.permute.xlu0 %50
    %52 = vrot.lane.b32.xlu0 %v39, 127
    %v53 = vpop.permute.xlu0 %52
    %54 = vrot.lane.b32.xlu0 %v19, 127
    %v55 = vpop.permute.xlu0 %54
    %56 = vrot.lane.b32.xlu0 %v26, 127
    %v57 = vpop.permute.xlu0 %56
    %58 = vrot.lane.b32.xlu0 %v33, 127
    %v59 = vpop.permute.xlu0 %58
    %60 = vrot.lane.b32.xlu0 %v40, 127
    %v61 = vpop.permute.xlu0 %60
    %62 = vrot.lane.b32.xlu0 %v20, 127
    %v63 = vpop.permute.xlu0 %62
    %64 = vrot.lane.b32.xlu0 %v27, 127
    %v65 = vpop.permute.xlu0 %64
    %66 = vrot.lane.b32.xlu0 %v34, 127
    %v67 = vpop.permute.xlu0 %66
    %68 = vrot.lane.b32.xlu0 %v41, 127
    %v69 = vpop.permute.xlu0 %68
    %70 = vrot.lane.b32.xlu0 %v21, 127
    %v71 = vpop.permute.xlu0 %70
    %72 = vrot.lane.b32.xlu0 %v28, 127
    %v73 = vpop.permute.xlu0 %72
    %74 = vrot.lane.b32.xlu0 %v35, 127
    %v75 = vpop.permute.xlu0 %74
    %76 = vrot.lane.b32.xlu0 %v42, 127
    %v77 = vpop.permute.xlu0 %76
    %78 = vrot.lane.b32.xlu0 %v22, 127
    %v79 = vpop.permute.xlu0 %78
    %80 = vrot.lane.b32.xlu0 %v29, 127
    %v81 = vpop.permute.xlu0 %80
    %82 = vrot.lane.b32.xlu0 %v36, 127
    %v83 = vpop.permute.xlu0 %82
    %84 = vrot.lane.b32.xlu0 %v43, 127
    %v85 = vpop.permute.xlu0 %84
    %86 = vrot.lane.b32.xlu0 %v23, 127
    %v87 = vpop.permute.xlu0 %86
    %88 = vrot.lane.b32.xlu0 %v30, 127
    %v89 = vpop.permute.xlu0 %88
    %90 = vrot.lane.b32.xlu0 %v37, 127
    %v91 = vpop.permute.xlu0 %90
    %92 = vrot.lane.b32.xlu0 %v44, 127
    %v93 = vpop.permute.xlu0 %92
    %94 = vrot.lane.b32.xlu0 %v24, 127
    %v95 = vpop.permute.xlu0 %94
    %96 = vrot.lane.b32.xlu0 %v31, 127
    %v97 = vpop.permute.xlu0 %96
    %98 = vrot.lane.b32.xlu0 %v38, 127
    %v99 = vpop.permute.xlu0 %98
    %100 = vrot.lane.b32.xlu0 %v45, 127
    %v101 = vpop.permute.xlu0 %100
    %v102 = vlaneseq
    %v103 = vand.u32 %v102, 127
    %vm104 = vcmp.lt.s32.totalorder %v103, 127
    %v105 = vsel %vm104, %v87, %v95
    %v106 = vsel %vm104, %v89, %v97
    %v107 = vsel %vm104, %v91, %v99
    %v108 = vsel %vm104, %v93, %v101
    %v109 = vsel %vm104, %v79, %v87
    %v110 = vsel %vm104, %v81, %v89
    %v111 = vsel %vm104, %v83, %v91
    %v112 = vsel %vm104, %v85, %v93
    %v113 = vsel %vm104, %v71, %v79
    %v114 = vsel %vm104, %v73, %v81
    %v115 = vsel %vm104, %v75, %v83
    %v116 = vsel %vm104, %v77, %v85
    %v117 = vsel %vm104, %v63, %v71
    %v118 = vsel %vm104, %v65, %v73
    %v119 = vsel %vm104, %v67, %v75
    %v120 = vsel %vm104, %v69, %v77
    %v121 = vsel %vm104, %v55, %v63
    %v122 = vsel %vm104, %v57, %v65
    %v123 = vsel %vm104, %v59, %v67
    %v124 = vsel %vm104, %v61, %v69
    %v125 = vsel %vm104, %v47, %v55
    %v126 = vsel %vm104, %v49, %v57
    %v127 = vsel %vm104, %v51, %v59
    %v128 = vsel %vm104, %v53, %v61
    %v129 = vsel %vm104, %v95, %v47
    %v130 = vsel %vm104, %v97, %v49
    %v131 = vsel %vm104, %v99, %v51
    %v132 = vsel %vm104, %v101, %v53
    %133 = vrot.lane.b32.xlu0 %v18, 126
    %v134 = vpop.permute.xlu0 %133
    %135 = vrot.lane.b32.xlu0 %v25, 126
    %v136 = vpop.permute.xlu0 %135
    %137 = vrot.lane.b32.xlu0 %v32, 126
    %v138 = vpop.permute.xlu0 %137
    %139 = vrot.lane.b32.xlu0 %v39, 126
    %v140 = vpop.permute.xlu0 %139
    %141 = vrot.lane.b32.xlu0 %v19, 126
    %v142 = vpop.permute.xlu0 %141
    %143 = vrot.lane.b32.xlu0 %v26, 126
    %v144 = vpop.permute.xlu0 %143
    %145 = vrot.lane.b32.xlu0 %v33, 126
    %v146 = vpop.permute.xlu0 %145
    %147 = vrot.lane.b32.xlu0 %v40, 126
    %v148 = vpop.permute.xlu0 %147
    %149 = vrot.lane.b32.xlu0 %v20, 126
    %v150 = vpop.permute.xlu0 %149
    %151 = vrot.lane.b32.xlu0 %v27, 126
    %v152 = vpop.permute.xlu0 %151
    %153 = vrot.lane.b32.xlu0 %v34, 126
    %v154 = vpop.permute.xlu0 %153
    %155 = vrot.lane.b32.xlu0 %v41, 126
    %v156 = vpop.permute.xlu0 %155
    %157 = vrot.lane.b32.xlu0 %v21, 126
    %v158 = vpop.permute.xlu0 %157
    %159 = vrot.lane.b32.xlu0 %v28, 126
    %v160 = vpop.permute.xlu0 %159
    %161 = vrot.lane.b32.xlu0 %v35, 126
    %v162 = vpop.permute.xlu0 %161
    %163 = vrot.lane.b32.xlu0 %v42, 126
    %v164 = vpop.permute.xlu0 %163
    %165 = vrot.lane.b32.xlu0 %v22, 126
    %v166 = vpop.permute.xlu0 %165
    %167 = vrot.lane.b32.xlu0 %v29, 126
    %v168 = vpop.permute.xlu0 %167
    %169 = vrot.lane.b32.xlu0 %v36, 126
    %v170 = vpop.permute.xlu0 %169
    %171 = vrot.lane.b32.xlu0 %v43, 126
    %v172 = vpop.permute.xlu0 %171
    %173 = vrot.lane.b32.xlu0 %v23, 126
    %v174 = vpop.permute.xlu0 %173
    %175 = vrot.lane.b32.xlu0 %v30, 126
    %v176 = vpop.permute.xlu0 %175
    %177 = vrot.lane.b32.xlu0 %v37, 126
    %v178 = vpop.permute.xlu0 %177
    %179 = vrot.lane.b32.xlu0 %v44, 126
    %v180 = vpop.permute.xlu0 %179
    %181 = vrot.lane.b32.xlu0 %v24, 126
    %v182 = vpop.permute.xlu0 %181
    %183 = vrot.lane.b32.xlu0 %v31, 126
    %v184 = vpop.permute.xlu0 %183
    %185 = vrot.lane.b32.xlu0 %v38, 126
    %v186 = vpop.permute.xlu0 %185
    %187 = vrot.lane.b32.xlu0 %v45, 126
    %v188 = vpop.permute.xlu0 %187
    %vm189 = vcmp.lt.s32.totalorder %v103, 126
    %v190 = vsel %vm189, %v174, %v182
    %v191 = vsel %vm189, %v176, %v184
    %v192 = vsel %vm189, %v178, %v186
    %v193 = vsel %vm189, %v180, %v188
    %v194 = vsel %vm189, %v166, %v174
    %v195 = vsel %vm189, %v168, %v176
    %v196 = vsel %vm189, %v170, %v178
    %v197 = vsel %vm189, %v172, %v180
    %v198 = vsel %vm189, %v158, %v166
    %v199 = vsel %vm189, %v160, %v168
    %v200 = vsel %vm189, %v162, %v170
    %v201 = vsel %vm189, %v164, %v172
    %v202 = vsel %vm189, %v150, %v158
    %v203 = vsel %vm189, %v152, %v160
    %v204 = vsel %vm189, %v154, %v162
    %v205 = vsel %vm189, %v156, %v164
    %v206 = vsel %vm189, %v142, %v150
    %v207 = vsel %vm189, %v144, %v152
    %v208 = vsel %vm189, %v146, %v154
    %v209 = vsel %vm189, %v148, %v156
    %v210 = vsel %vm189, %v134, %v142
    %v211 = vsel %vm189, %v136, %v144
    %v212 = vsel %vm189, %v138, %v146
    %v213 = vsel %vm189, %v140, %v148
    %v214 = vsel %vm189, %v182, %v134
    %v215 = vsel %vm189, %v184, %v136
    %v216 = vsel %vm189, %v186, %v138
    %v217 = vsel %vm189, %v188, %v140
    %218 = vrot.lane.b32.xlu0 %v18, 125
    %v219 = vpop.permute.xlu0 %218
    %220 = vrot.lane.b32.xlu0 %v25, 125
    %v221 = vpop.permute.xlu0 %220
    %222 = vrot.lane.b32.xlu0 %v32, 125
    %v223 = vpop.permute.xlu0 %222
    %224 = vrot.lane.b32.xlu0 %v39, 125
    %v225 = vpop.permute.xlu0 %224
    %226 = vrot.lane.b32.xlu0 %v19, 125
    %v227 = vpop.permute.xlu0 %226
    %228 = vrot.lane.b32.xlu0 %v26, 125
    %v229 = vpop.permute.xlu0 %228
    %230 = vrot.lane.b32.xlu0 %v33, 125
    %v231 = vpop.permute.xlu0 %230
    %232 = vrot.lane.b32.xlu0 %v40, 125
    %v233 = vpop.permute.xlu0 %232
    %234 = vrot.lane.b32.xlu0 %v20, 125
    %v235 = vpop.permute.xlu0 %234
    %236 = vrot.lane.b32.xlu0 %v27, 125
    %v237 = vpop.permute.xlu0 %236
    %238 = vrot.lane.b32.xlu0 %v34, 125
    %v239 = vpop.permute.xlu0 %238
    %240 = vrot.lane.b32.xlu0 %v41, 125
    %v241 = vpop.permute.xlu0 %240
    %242 = vrot.lane.b32.xlu0 %v21, 125
    %v243 = vpop.permute.xlu0 %242
    %244 = vrot.lane.b32.xlu0 %v28, 125
    %v245 = vpop.permute.xlu0 %244
    %246 = vrot.lane.b32.xlu0 %v35, 125
    %v247 = vpop.permute.xlu0 %246
    %248 = vrot.lane.b32.xlu0 %v42, 125
    %v249 = vpop.permute.xlu0 %248
    %250 = vrot.lane.b32.xlu0 %v22, 125
    %v251 = vpop.permute.xlu0 %250
    %252 = vrot.lane.b32.xlu0 %v29, 125
    %v253 = vpop.permute.xlu0 %252
    %254 = vrot.lane.b32.xlu0 %v36, 125
    %v255 = vpop.permute.xlu0 %254
    %256 = vrot.lane.b32.xlu0 %v43, 125
    %v257 = vpop.permute.xlu0 %256
    %258 = vrot.lane.b32.xlu0 %v23, 125
    %v259 = vpop.permute.xlu0 %258
    %260 = vrot.lane.b32.xlu0 %v30, 125
    %v261 = vpop.permute.xlu0 %260
    %262 = vrot.lane.b32.xlu0 %v37, 125
    %v263 = vpop.permute.xlu0 %262
    %264 = vrot.lane.b32.xlu0 %v44, 125
    %v265 = vpop.permute.xlu0 %264
    %266 = vrot.lane.b32.xlu0 %v24, 125
    %v267 = vpop.permute.xlu0 %266
    %268 = vrot.lane.b32.xlu0 %v31, 125
    %v269 = vpop.permute.xlu0 %268
    %270 = vrot.lane.b32.xlu0 %v38, 125
    %v271 = vpop.permute.xlu0 %270
    %272 = vrot.lane.b32.xlu0 %v45, 125
    %v273 = vpop.permute.xlu0 %272
    %vm274 = vcmp.lt.s32.totalorder %v103, 125
    %v275 = vsel %vm274, %v259, %v267
    %v276 = vsel %vm274, %v261, %v269
    %v277 = vsel %vm274, %v263, %v271
    %v278 = vsel %vm274, %v265, %v273
    %v279 = vsel %vm274, %v251, %v259
    %v280 = vsel %vm274, %v253, %v261
    %v281 = vsel %vm274, %v255, %v263
    %v282 = vsel %vm274, %v257, %v265
    %v283 = vsel %vm274, %v243, %v251
    %v284 = vsel %vm274, %v245, %v253
    %v285 = vsel %vm274, %v247, %v255
    %v286 = vsel %vm274, %v249, %v257
    %v287 = vsel %vm274, %v235, %v243
    %v288 = vsel %vm274, %v237, %v245
    %v289 = vsel %vm274, %v239, %v247
    %v290 = vsel %vm274, %v241, %v249
    %v291 = vsel %vm274, %v227, %v235
    %v292 = vsel %vm274, %v229, %v237
    %v293 = vsel %vm274, %v231, %v239
    %v294 = vsel %vm274, %v233, %v241
    %v295 = vsel %vm274, %v219, %v227
    %v296 = vsel %vm274, %v221, %v229
    %v297 = vsel %vm274, %v223, %v231
    %v298 = vsel %vm274, %v225, %v233
    %v299 = vsel %vm274, %v267, %v219
    %v300 = vsel %vm274, %v269, %v221
    %v301 = vsel %vm274, %v271, %v223
    %v302 = vsel %vm274, %v273, %v225
    %303 = vrot.lane.b32.xlu0 %v18, 124
    %v304 = vpop.permute.xlu0 %303
    %305 = vrot.lane.b32.xlu0 %v25, 124
    %v306 = vpop.permute.xlu0 %305
    %307 = vrot.lane.b32.xlu0 %v32, 124
    %v308 = vpop.permute.xlu0 %307
    %309 = vrot.lane.b32.xlu0 %v39, 124
    %v310 = vpop.permute.xlu0 %309
    %311 = vrot.lane.b32.xlu0 %v19, 124
    %v312 = vpop.permute.xlu0 %311
    %313 = vrot.lane.b32.xlu0 %v26, 124
    %v314 = vpop.permute.xlu0 %313
    %315 = vrot.lane.b32.xlu0 %v33, 124
    %v316 = vpop.permute.xlu0 %315
    %317 = vrot.lane.b32.xlu0 %v40, 124
    %v318 = vpop.permute.xlu0 %317
    %319 = vrot.lane.b32.xlu0 %v20, 124
    %v320 = vpop.permute.xlu0 %319
    %321 = vrot.lane.b32.xlu0 %v27, 124
    %v322 = vpop.permute.xlu0 %321
    %323 = vrot.lane.b32.xlu0 %v34, 124
    %v324 = vpop.permute.xlu0 %323
    %325 = vrot.lane.b32.xlu0 %v41, 124
    %v326 = vpop.permute.xlu0 %325
    %327 = vrot.lane.b32.xlu0 %v21, 124
    %v328 = vpop.permute.xlu0 %327
    %329 = vrot.lane.b32.xlu0 %v28, 124
    %v330 = vpop.permute.xlu0 %329
    %331 = vrot.lane.b32.xlu0 %v35, 124
    %v332 = vpop.permute.xlu0 %331
    %333 = vrot.lane.b32.xlu0 %v42, 124
    %v334 = vpop.permute.xlu0 %333
    %335 = vrot.lane.b32.xlu0 %v22, 124
    %v336 = vpop.permute.xlu0 %335
    %337 = vrot.lane.b32.xlu0 %v29, 124
    %v338 = vpop.permute.xlu0 %337
    %339 = vrot.lane.b32.xlu0 %v36, 124
    %v340 = vpop.permute.xlu0 %339
    %341 = vrot.lane.b32.xlu0 %v43, 124
    %v342 = vpop.permute.xlu0 %341
    %343 = vrot.lane.b32.xlu0 %v23, 124
    %v344 = vpop.permute.xlu0 %343
    %345 = vrot.lane.b32.xlu0 %v30, 124
    %v346 = vpop.permute.xlu0 %345
    %347 = vrot.lane.b32.xlu0 %v37, 124
    %v348 = vpop.permute.xlu0 %347
    %349 = vrot.lane.b32.xlu0 %v44, 124
    %v350 = vpop.permute.xlu0 %349
    %351 = vrot.lane.b32.xlu0 %v24, 124
    %v352 = vpop.permute.xlu0 %351
    %353 = vrot.lane.b32.xlu0 %v31, 124
    %v354 = vpop.permute.xlu0 %353
    %355 = vrot.lane.b32.xlu0 %v38, 124
    %v356 = vpop.permute.xlu0 %355
    %357 = vrot.lane.b32.xlu0 %v45, 124
    %v358 = vpop.permute.xlu0 %357
    %vm359 = vcmp.lt.s32.totalorder %v103, 124
    %v360 = vsel %vm359, %v344, %v352
    %v361 = vsel %vm359, %v346, %v354
    %v362 = vsel %vm359, %v348, %v356
    %v363 = vsel %vm359, %v350, %v358
    %v364 = vsel %vm359, %v336, %v344
    %v365 = vsel %vm359, %v338, %v346
    %v366 = vsel %vm359, %v340, %v348
    %v367 = vsel %vm359, %v342, %v350
    %v368 = vsel %vm359, %v328, %v336
    %v369 = vsel %vm359, %v330, %v338
    %v370 = vsel %vm359, %v332, %v340
    %v371 = vsel %vm359, %v334, %v342
    %v372 = vsel %vm359, %v320, %v328
    %v373 = vsel %vm359, %v322, %v330
    %v374 = vsel %vm359, %v324, %v332
    %v375 = vsel %vm359, %v326, %v334
    %v376 = vsel %vm359, %v312, %v320
    %v377 = vsel %vm359, %v314, %v322
    %v378 = vsel %vm359, %v316, %v324
    %v379 = vsel %vm359, %v318, %v326
    %v380 = vsel %vm359, %v304, %v312
    %v381 = vsel %vm359, %v306, %v314
    %v382 = vsel %vm359, %v308, %v316
    %v383 = vsel %vm359, %v310, %v318
    %v384 = vsel %vm359, %v352, %v304
    %v385 = vsel %vm359, %v354, %v306
    %v386 = vsel %vm359, %v356, %v308
    %v387 = vsel %vm359, %v358, %v310
    %vm416 = vcmask 1043456
    %v417 = vrot.slane %v125, 4
    %v418 = vrot.slane %v121, 4
    %v419 = vrot.slane %v117, 4
    %v420 = vrot.slane %v113, 4
    %v421 = vrot.slane %v109, 4
    %v422 = vrot.slane %v105, 4
    %v423 = vrot.slane %v129, 4
    %v424 = vrot.slane %v126, 4
    %v425 = vsel %vm416, %v417, %v424
    %v426 = vrot.slane %v122, 4
    %v427 = vsel %vm416, %v418, %v426
    %v428 = vrot.slane %v118, 4
    %v429 = vsel %vm416, %v419, %v428
    %v430 = vrot.slane %v114, 4
    %v431 = vsel %vm416, %v420, %v430
    %v432 = vrot.slane %v110, 4
    %v433 = vsel %vm416, %v421, %v432
    %v434 = vrot.slane %v106, 4
    %v435 = vsel %vm416, %v422, %v434
    %v436 = vrot.slane %v130, 4
    %v437 = vsel %vm416, %v423, %v436
    %v438 = vrot.slane %v127, 4
    %v439 = vsel %vm416, %v424, %v438
    %v440 = vrot.slane %v123, 4
    %v441 = vsel %vm416, %v426, %v440
    %v442 = vrot.slane %v119, 4
    %v443 = vsel %vm416, %v428, %v442
    %v444 = vrot.slane %v115, 4
    %v445 = vsel %vm416, %v430, %v444
    %v446 = vrot.slane %v111, 4
    %v447 = vsel %vm416, %v432, %v446
    %v448 = vrot.slane %v107, 4
    %v449 = vsel %vm416, %v434, %v448
    %v450 = vrot.slane %v131, 4
    %v451 = vsel %vm416, %v436, %v450
    %v452 = vrot.slane %v128, 4
    %v453 = vsel %vm416, %v438, %v452
    %v454 = vrot.slane %v124, 4
    %v455 = vsel %vm416, %v440, %v454
    %v456 = vrot.slane %v120, 4
    %v457 = vsel %vm416, %v442, %v456
    %v458 = vrot.slane %v116, 4
    %v459 = vsel %vm416, %v444, %v458
    %v460 = vrot.slane %v112, 4
    %v461 = vsel %vm416, %v446, %v460
    %v462 = vrot.slane %v108, 4
    %v463 = vsel %vm416, %v448, %v462
    %v464 = vrot.slane %v132, 4
    %v465 = vsel %vm416, %v450, %v464
    %v522 = vrot.slane %v295, 4
    %v523 = vrot.slane %v291, 4
    %v524 = vrot.slane %v287, 4
    %v525 = vrot.slane %v283, 4
    %v526 = vrot.slane %v279, 4
    %v527 = vrot.slane %v275, 4
    %v528 = vrot.slane %v299, 4
    %v529 = vrot.slane %v296, 4
    %v530 = vsel %vm416, %v522, %v529
    %v531 = vrot.slane %v292, 4
    %v532 = vsel %vm416, %v523, %v531
    %v533 = vrot.slane %v288, 4
    %v534 = vsel %vm416, %v524, %v533
    %v535 = vrot.slane %v284, 4
    %v536 = vsel %vm416, %v525, %v535
    %v537 = vrot.slane %v280, 4
    %v538 = vsel %vm416, %v526, %v537
    %v539 = vrot.slane %v276, 4
    %v540 = vsel %vm416, %v527, %v539
    %v541 = vrot.slane %v300, 4
    %v542 = vsel %vm416, %v528, %v541
    %v543 = vrot.slane %v297, 4
    %v544 = vsel %vm416, %v529, %v543
    %v545 = vrot.slane %v293, 4
    %v546 = vsel %vm416, %v531, %v545
    %v547 = vrot.slane %v289, 4
    %v548 = vsel %vm416, %v533, %v547
    %v549 = vrot.slane %v285, 4
    %v550 = vsel %vm416, %v535, %v549
    %v551 = vrot.slane %v281, 4
    %v552 = vsel %vm416, %v537, %v551
    %v553 = vrot.slane %v277, 4
    %v554 = vsel %vm416, %v539, %v553
    %v555 = vrot.slane %v301, 4
    %v556 = vsel %vm416, %v541, %v555
    %v557 = vrot.slane %v298, 4
    %v558 = vsel %vm416, %v543, %v557
    %v559 = vrot.slane %v294, 4
    %v560 = vsel %vm416, %v545, %v559
    %v561 = vrot.slane %v290, 4
    %v562 = vsel %vm416, %v547, %v561
    %v563 = vrot.slane %v286, 4
    %v564 = vsel %vm416, %v549, %v563
    %v565 = vrot.slane %v282, 4
    %v566 = vsel %vm416, %v551, %v565
    %v567 = vrot.slane %v278, 4
    %v568 = vsel %vm416, %v553, %v567
    %v569 = vrot.slane %v302, 4
    %v570 = vsel %vm416, %v555, %v569
    %v599 = vsel %vm416, %v39, %v417
    %v600 = vsel %vm416, %v40, %v418
    %v601 = vsel %vm416, %v41, %v419
    %v602 = vsel %vm416, %v42, %v420
    %v603 = vsel %vm416, %v43, %v421
    %v604 = vsel %vm416, %v44, %v422
    %v605 = vsel %vm416, %v45, %v423
    %v606 = vsel %vm416, %v213, %v522
    %v607 = vsel %vm416, %v209, %v523
    %v608 = vsel %vm416, %v205, %v524
    %v609 = vsel %vm416, %v201, %v525
    %v610 = vsel %vm416, %v197, %v526
    %v611 = vsel %vm416, %v193, %v527
    %v612 = vsel %vm416, %v217, %v528
    %v613 = vld [vmem:[%s1] sm:$0xff]
    %v614 = vld [vmem:[%s1 + $0x8] sm:$0xff]
    %v615 = vld [vmem:[%s1 + $0x10] sm:$0xff]
    %v616 = vld [vmem:[%s1 + $0x18] sm:$0xff]
    %v617 = vld [vmem:[%s1 + $0x20] sm:$0xff]
    %v618 = vld [vmem:[%s1 + $0x28] sm:$0xff]
    %v619 = vld [vmem:[%s1 + $0x30] sm:$0xff]
    %v620 = vld [vmem:[%s1 + $0x38] sm:$0xff]
    %v621 = vld [vmem:[%s1 + $0x40] sm:$0xff]
    %v622 = vld [vmem:[%s1 + $0x48] sm:$0xff]
    %v623 = vld [vmem:[%s1 + $0x50] sm:$0xff]
    %v624 = vld [vmem:[%s1 + $0x58] sm:$0xff]
    %v625 = vld [vmem:[%s1 + $0x60] sm:$0xff]
    %v626 = vld [vmem:[%s1 + $0x68] sm:$0xff]
    %v627 = vld [vmem:[%s1 + $0x70] sm:$0xff]
    %v628 = vld [vmem:[%s1 + $0x78] sm:$0xff]
    %v629 = vld [vmem:[%s1 + $0x80] sm:$0xff]
    %v630 = vld [vmem:[%s1 + $0x88] sm:$0xff]
    %v631 = vld [vmem:[%s1 + $0x90] sm:$0xff]
    %v632 = vld [vmem:[%s1 + $0x98] sm:$0xff]
    %v633 = vld [vmem:[%s1 + $0xa0] sm:$0xff]
    %v634 = vld [vmem:[%s1 + $0xa8] sm:$0xff]
    %v635 = vld [vmem:[%s1 + $0xb0] sm:$0xff]
    %v636 = vld [vmem:[%s1 + $0xb8] sm:$0xff]
    %vm637 = vcmask 97280
    %v639 = vsel %vm637, %v614, 0
    %v642 = vsel %vm637, %v616, 0
    %v645 = vsel %vm637, %v618, 0
    %v648 = vsel %vm637, %v620, 0
    %v651 = vsel %vm637, %v622, 0
    %v654 = vsel %vm637, %v624, 0
    %v657 = vsel %vm637, %v626, 0
    %v660 = vsel %vm637, %v628, 0
    %v663 = vsel %vm637, %v630, 0
    %v666 = vsel %vm637, %v632, 0
    %v669 = vsel %vm637, %v634, 0
    %v672 = vsel %vm637, %v636, 0
    %v675 = vsel %vm416, %v383, 0
    %v678 = vsel %vm416, %v379, 0
    %v681 = vsel %vm416, %v375, 0
    %v684 = vsel %vm416, %v371, 0
    %v687 = vsel %vm416, %v367, 0
    %v690 = vsel %vm416, %v363, 0
    %v693 = vsel %vm416, %v387, 0
    %695 = vmatprep.subr.mxu0 %v377
    %696 = vmatpush1.msra.mxu0 %v381
    %697 = vmatprep.subr.mxu0 %v376
    %698 = vmatpush1.msra.mxu0 %v380
    %699 = vmatprep.subr.mxu0 %v560
    %700 = vmatpush1.msra.mxu0 %v558
    %701 = vmatprep.subr.mxu0 %v546
    %702 = vmatpush1.msra.mxu0 %v544
    %703 = vmatprep.subr.mxu0 %v532
    %704 = vmatpush1.msra.mxu0 %v530
    %705 = vmatprep.subr.mxu0 %v607
    %706 = vmatpush1.msra.mxu0 %v606
    %707 = vmatprep.subr.mxu0 %v208
    %708 = vmatpush1.msra.mxu0 %v212
    %709 = vmatprep.subr.mxu0 %v207
    %710 = vmatpush1.msra.mxu0 %v211
    %711 = vmatprep.subr.mxu0 %v206
    %712 = vmatpush1.msra.mxu0 %v210
    %713 = vmatprep.subr.mxu0 %v455
    %714 = vmatpush1.msra.mxu0 %v453
    %715 = vmatprep.subr.mxu0 %v441
    %716 = vmatpush1.msra.mxu0 %v439
    %717 = vmatprep.subr.mxu0 %v427
    %718 = vmatpush1.msra.mxu0 %v425
    %719 = vmatprep.subr.mxu0 %v600
    %720 = vmatpush1.msra.mxu0 %v599
    %721 = vmatprep.subr.mxu0 %v33
    %722 = vmatpush1.msra.mxu0 %v32
    %723 = vmatprep.subr.mxu0 %v26
    %724 = vmatpush1.msra.mxu0 %v25
    %725 = vmatprep.subr.mxu0 %v19
    %726 = vmatpush1.msra.mxu0 %v18
    %727 = vmatprep.subr.mxu0 0.0
    %728 = vmatpush2.msra.mxu0 0.0
    %729 = vmatprep.subr.mxu0 0.0
    %730 = vmatpush2.msra.mxu0 0.0
    %731 = vmatprep.subr.mxu0 0.0
    %732 = vmatpush2.msra.mxu0 0.0
    %733 = vmatprep.subr.mxu0 0.0
    %734 = vmatpush2.msra.mxu0 0.0
    %735 = vmatprep.subr.mxu0 0.0
    %736 = vmatpush2.msra.mxu0 0.0
    %737 = vmatprep.subr.mxu0 0.0
    %738 = vmatpush2.msra.mxu0 0.0
    %739 = vmatprep.subr.mxu0 0.0
    %740 = vmatpush2.msra.mxu0 0.0
    %741 = vmatprep.subr.mxu0 0.0
    %742 = vmatpush2.msra.mxu0 0.0
    %743 = vmatprep.subr.mxu0 0.0
    %744 = vmatpush2.msra.mxu0 0.0
    %745 = vmatprep.subr.mxu0 0.0
    %746 = vmatpush2.msra.mxu0 0.0
    %747 = vmatprep.subr.mxu0 0.0
    %748 = vmatpush2.msra.mxu0 0.0
    %749 = vmatprep.subr.mxu0 0.0
    %750 = vmatpush2.msra.mxu0 0.0
    %751 = vmatprep.subr.mxu0 0.0
    %752 = vmatpush2.msra.mxu0 0.0
    %753 = vmatprep.subr.mxu0 0.0
    %754 = vmatpush2.msra.mxu0 0.0
    %755 = vmatprep.subr.mxu0 %v678
    %756 = vmatpush2.msra.mxu0 %v675
    %757 = vmatprep.subr.mxu0 %v378
    %758 = vmatpush2.msra.mxu0 %v382
    %759 = vmatprep.mubr.f32.mxu0 %v639
    %760 = vmatmul.mubr.f32.gmra.mxu0 %v613
    %v761 = vpop.f32.mrf.mxu0
    %v762 = vadd.f32 0.0, %v761
    %v763 = vpop.f32.mrf.mxu0
    %v764 = vadd.f32 0.0, %v763
    %765 = vmatprep.mubr.f32.mxu0 %v642
    %766 = vmatmul.mubr.f32.gmra.mxu0 %v615
    %v767 = vpop.f32.mrf.mxu0
    %v768 = vadd.f32 0.0, %v767
    %v769 = vpop.f32.mrf.mxu0
    %v770 = vadd.f32 0.0, %v769
    %771 = vmatprep.mubr.f32.mxu0 %v645
    %772 = vmatmul.mubr.f32.gmra.mxu0 %v617
    %v773 = vpop.f32.mrf.mxu0
    %v774 = vadd.f32 0.0, %v773
    %v775 = vpop.f32.mrf.mxu0
    %v776 = vadd.f32 0.0, %v775
    %777 = vmatprep.mubr.f32.mxu0 %v648
    %778 = vmatmul.mubr.f32.gmra.mxu0 %v619
    %v779 = vpop.f32.mrf.mxu0
    %v780 = vadd.f32 0.0, %v779
    %v781 = vpop.f32.mrf.mxu0
    %v782 = vadd.f32 0.0, %v781
    %783 = vmatprep.mubr.f32.mxu0 %v651
    %784 = vmatmul.mubr.f32.gmra.mxu0 %v621
    %v785 = vpop.f32.mrf.mxu0
    %v786 = vadd.f32 0.0, %v785
    %v787 = vpop.f32.mrf.mxu0
    %v788 = vadd.f32 0.0, %v787
    %789 = vmatprep.mubr.f32.mxu0 %v654
    %790 = vmatmul.mubr.f32.gmra.mxu0 %v623
    %v791 = vpop.f32.mrf.mxu0
    %v792 = vadd.f32 0.0, %v791
    %v793 = vpop.f32.mrf.mxu0
    %v794 = vadd.f32 0.0, %v793
    %795 = vmatprep.mubr.f32.mxu0 %v657
    %796 = vmatmul.mubr.f32.gmra.mxu0 %v625
    %v797 = vpop.f32.mrf.mxu0
    %v798 = vadd.f32 0.0, %v797
    %v799 = vpop.f32.mrf.mxu0
    %v800 = vadd.f32 0.0, %v799
    %801 = vmatprep.mubr.f32.mxu0 %v660
    %802 = vmatmul.mubr.f32.gmra.mxu0 %v627
    %v803 = vpop.f32.mrf.mxu0
    %v804 = vadd.f32 0.0, %v803
    %v805 = vpop.f32.mrf.mxu0
    %v806 = vadd.f32 0.0, %v805
    %807 = vmatprep.mubr.f32.mxu0 %v663
    %808 = vmatmul.mubr.f32.gmra.mxu0 %v629
    %v809 = vpop.f32.mrf.mxu0
    %v810 = vadd.f32 0.0, %v809
    %v811 = vpop.f32.mrf.mxu0
    %v812 = vadd.f32 0.0, %v811
    %813 = vmatprep.mubr.f32.mxu0 %v666
    %814 = vmatmul.mubr.f32.gmra.mxu0 %v631
    %v815 = vpop.f32.mrf.mxu0
    %v816 = vadd.f32 0.0, %v815
    %v817 = vpop.f32.mrf.mxu0
    %v818 = vadd.f32 0.0, %v817
    %819 = vmatprep.mubr.f32.mxu0 %v669
    %820 = vmatmul.mubr.f32.gmra.mxu0 %v633
    %v821 = vpop.f32.mrf.mxu0
    %v822 = vadd.f32 0.0, %v821
    %v823 = vpop.f32.mrf.mxu0
    %v824 = vadd.f32 0.0, %v823
    %825 = vmatprep.mubr.f32.mxu0 %v672
    %826 = vmatmul.mubr.f32.gmra.mxu0 %v635
    %v827 = vpop.f32.mrf.mxu0
    %v828 = vadd.f32 0.0, %v827
    %v829 = vpop.f32.mrf.mxu0
    %v830 = vadd.f32 0.0, %v829
    %831 = vdwg.mxu0
    %832 = vmatprep.subr.mxu0 %v369
    %833 = vmatpush1.msra.mxu0 %v373
    %834 = vmatprep.subr.mxu0 %v368
    %835 = vmatpush1.msra.mxu0 %v372
    %836 = vmatprep.subr.mxu0 %v564
    %837 = vmatpush1.msra.mxu0 %v562
    %838 = vmatprep.subr.mxu0 %v550
    %839 = vmatpush1.msra.mxu0 %v548
    %840 = vmatprep.subr.mxu0 %v536
    %841 = vmatpush1.msra.mxu0 %v534
    %842 = vmatprep.subr.mxu0 %v609
    %843 = vmatpush1.msra.mxu0 %v608
    %844 = vmatprep.subr.mxu0 %v200
    %845 = vmatpush1.msra.mxu0 %v204
    %846 = vmatprep.subr.mxu0 %v199
    %847 = vmatpush1.msra.mxu0 %v203
    %848 = vmatprep.subr.mxu0 %v198
    %849 = vmatpush1.msra.mxu0 %v202
    %850 = vmatprep.subr.mxu0 %v459
    %851 = vmatpush1.msra.mxu0 %v457
    %852 = vmatprep.subr.mxu0 %v445
    %853 = vmatpush1.msra.mxu0 %v443
    %854 = vmatprep.subr.mxu0 %v431
    %855 = vmatpush1.msra.mxu0 %v429
    %856 = vmatprep.subr.mxu0 %v602
    %857 = vmatpush1.msra.mxu0 %v601
    %858 = vmatprep.subr.mxu0 %v35
    %859 = vmatpush1.msra.mxu0 %v34
    %860 = vmatprep.subr.mxu0 %v28
    %861 = vmatpush1.msra.mxu0 %v27
    %862 = vmatprep.subr.mxu0 %v21
    %863 = vmatpush1.msra.mxu0 %v20
    %864 = vmatprep.subr.mxu0 0.0
    %865 = vmatpush2.msra.mxu0 0.0
    %866 = vmatprep.subr.mxu0 0.0
    %867 = vmatpush2.msra.mxu0 0.0
    %868 = vmatprep.subr.mxu0 0.0
    %869 = vmatpush2.msra.mxu0 0.0
    %870 = vmatprep.subr.mxu0 0.0
    %871 = vmatpush2.msra.mxu0 0.0
    %872 = vmatprep.subr.mxu0 0.0
    %873 = vmatpush2.msra.mxu0 0.0
    %874 = vmatprep.subr.mxu0 0.0
    %875 = vmatpush2.msra.mxu0 0.0
    %876 = vmatprep.subr.mxu0 0.0
    %877 = vmatpush2.msra.mxu0 0.0
    %878 = vmatprep.subr.mxu0 0.0
    %879 = vmatpush2.msra.mxu0 0.0
    %880 = vmatprep.subr.mxu0 0.0
    %881 = vmatpush2.msra.mxu0 0.0
    %882 = vmatprep.subr.mxu0 0.0
    %883 = vmatpush2.msra.mxu0 0.0
    %884 = vmatprep.subr.mxu0 0.0
    %885 = vmatpush2.msra.mxu0 0.0
    %886 = vmatprep.subr.mxu0 0.0
    %887 = vmatpush2.msra.mxu0 0.0
    %888 = vmatprep.subr.mxu0 0.0
    %889 = vmatpush2.msra.mxu0 0.0
    %890 = vmatprep.subr.mxu0 0.0
    %891 = vmatpush2.msra.mxu0 0.0
    %892 = vmatprep.subr.mxu0 %v684
    %893 = vmatpush2.msra.mxu0 %v681
    %894 = vmatprep.subr.mxu0 %v370
    %895 = vmatpush2.msra.mxu0 %v374
    %896 = vmatprep.mubr.f32.mxu0 %v639
    %897 = vmatmul.mubr.f32.gmra.mxu0 %v613
    %v898 = vpop.f32.mrf.mxu0
    %v899 = vadd.f32 0.0, %v898
    %v900 = vpop.f32.mrf.mxu0
    %v901 = vadd.f32 0.0, %v900
    %902 = vmatprep.mubr.f32.mxu0 %v642
    %903 = vmatmul.mubr.f32.gmra.mxu0 %v615
    %v904 = vpop.f32.mrf.mxu0
    %v905 = vadd.f32 0.0, %v904
    %v906 = vpop.f32.mrf.mxu0
    %v907 = vadd.f32 0.0, %v906
    %908 = vmatprep.mubr.f32.mxu0 %v645
    %909 = vmatmul.mubr.f32.gmra.mxu0 %v617
    %v910 = vpop.f32.mrf.mxu0
    %v911 = vadd.f32 0.0, %v910
    %v912 = vpop.f32.mrf.mxu0
    %v913 = vadd.f32 0.0, %v912
    %914 = vmatprep.mubr.f32.mxu0 %v648
    %915 = vmatmul.mubr.f32.gmra.mxu0 %v619
    %v916 = vpop.f32.mrf.mxu0
    %v917 = vadd.f32 0.0, %v916
    %v918 = vpop.f32.mrf.mxu0
    %v919 = vadd.f32 0.0, %v918
    %920 = vmatprep.mubr.f32.mxu0 %v651
    %921 = vmatmul.mubr.f32.gmra.mxu0 %v621
    %v922 = vpop.f32.mrf.mxu0
    %v923 = vadd.f32 0.0, %v922
    %v924 = vpop.f32.mrf.mxu0
    %v925 = vadd.f32 0.0, %v924
    %926 = vmatprep.mubr.f32.mxu0 %v654
    %927 = vmatmul.mubr.f32.gmra.mxu0 %v623
    %v928 = vpop.f32.mrf.mxu0
    %v929 = vadd.f32 0.0, %v928
    %v930 = vpop.f32.mrf.mxu0
    %v931 = vadd.f32 0.0, %v930
    %932 = vmatprep.mubr.f32.mxu0 %v657
    %933 = vmatmul.mubr.f32.gmra.mxu0 %v625
    %v934 = vpop.f32.mrf.mxu0
    %v935 = vadd.f32 0.0, %v934
    %v936 = vpop.f32.mrf.mxu0
    %v937 = vadd.f32 0.0, %v936
    %938 = vmatprep.mubr.f32.mxu0 %v660
    %939 = vmatmul.mubr.f32.gmra.mxu0 %v627
    %v940 = vpop.f32.mrf.mxu0
    %v941 = vadd.f32 0.0, %v940
    %v942 = vpop.f32.mrf.mxu0
    %v943 = vadd.f32 0.0, %v942
    %944 = vmatprep.mubr.f32.mxu0 %v663
    %945 = vmatmul.mubr.f32.gmra.mxu0 %v629
    %v946 = vpop.f32.mrf.mxu0
    %v947 = vadd.f32 0.0, %v946
    %v948 = vpop.f32.mrf.mxu0
    %v949 = vadd.f32 0.0, %v948
    %950 = vmatprep.mubr.f32.mxu0 %v666
    %951 = vmatmul.mubr.f32.gmra.mxu0 %v631
    %v952 = vpop.f32.mrf.mxu0
    %v953 = vadd.f32 0.0, %v952
    %v954 = vpop.f32.mrf.mxu0
    %v955 = vadd.f32 0.0, %v954
    %956 = vmatprep.mubr.f32.mxu0 %v669
    %957 = vmatmul.mubr.f32.gmra.mxu0 %v633
    %v958 = vpop.f32.mrf.mxu0
    %v959 = vadd.f32 0.0, %v958
    %v960 = vpop.f32.mrf.mxu0
    %v961 = vadd.f32 0.0, %v960
    %962 = vmatprep.mubr.f32.mxu0 %v672
    %963 = vmatmul.mubr.f32.gmra.mxu0 %v635
    %v964 = vpop.f32.mrf.mxu0
    %v965 = vadd.f32 0.0, %v964
    %v966 = vpop.f32.mrf.mxu0
    %v967 = vadd.f32 0.0, %v966
    %968 = vdwg.mxu0
    %969 = vmatprep.subr.mxu0 %v361
    %970 = vmatpush1.msra.mxu0 %v365
    %971 = vmatprep.subr.mxu0 %v360
    %972 = vmatpush1.msra.mxu0 %v364
    %973 = vmatprep.subr.mxu0 %v568
    %974 = vmatpush1.msra.mxu0 %v566
    %975 = vmatprep.subr.mxu0 %v554
    %976 = vmatpush1.msra.mxu0 %v552
    %977 = vmatprep.subr.mxu0 %v540
    %978 = vmatpush1.msra.mxu0 %v538
    %979 = vmatprep.subr.mxu0 %v611
    %980 = vmatpush1.msra.mxu0 %v610
    %981 = vmatprep.subr.mxu0 %v192
    %982 = vmatpush1.msra.mxu0 %v196
    %983 = vmatprep.subr.mxu0 %v191
    %984 = vmatpush1.msra.mxu0 %v195
    %985 = vmatprep.subr.mxu0 %v190
    %986 = vmatpush1.msra.mxu0 %v194
    %987 = vmatprep.subr.mxu0 %v463
    %988 = vmatpush1.msra.mxu0 %v461
    %989 = vmatprep.subr.mxu0 %v449
    %990 = vmatpush1.msra.mxu0 %v447
    %991 = vmatprep.subr.mxu0 %v435
    %992 = vmatpush1.msra.mxu0 %v433
    %993 = vmatprep.subr.mxu0 %v604
    %994 = vmatpush1.msra.mxu0 %v603
    %995 = vmatprep.subr.mxu0 %v37
    %996 = vmatpush1.msra.mxu0 %v36
    %997 = vmatprep.subr.mxu0 %v30
    %998 = vmatpush1.msra.mxu0 %v29
    %999 = vmatprep.subr.mxu0 %v23
    %1000 = vmatpush1.msra.mxu0 %v22
    %1001 = vmatprep.subr.mxu0 0.0
    %1002 = vmatpush2.msra.mxu0 0.0
    %1003 = vmatprep.subr.mxu0 0.0
    %1004 = vmatpush2.msra.mxu0 0.0
    %1005 = vmatprep.subr.mxu0 0.0
    %1006 = vmatpush2.msra.mxu0 0.0
    %1007 = vmatprep.subr.mxu0 0.0
    %1008 = vmatpush2.msra.mxu0 0.0
    %1009 = vmatprep.subr.mxu0 0.0
    %1010 = vmatpush2.msra.mxu0 0.0
    %1011 = vmatprep.subr.mxu0 0.0
    %1012 = vmatpush2.msra.mxu0 0.0
    %1013 = vmatprep.subr.mxu0 0.0
    %1014 = vmatpush2.msra.mxu0 0.0
    %1015 = vmatprep.subr.mxu0 0.0
    %1016 = vmatpush2.msra.mxu0 0.0
    %1017 = vmatprep.subr.mxu0 0.0
    %1018 = vmatpush2.msra.mxu0 0.0
    %1019 = vmatprep.subr.mxu0 0.0
    %1020 = vmatpush2.msra.mxu0 0.0
    %1021 = vmatprep.subr.mxu0 0.0
    %1022 = vmatpush2.msra.mxu0 0.0
    %1023 = vmatprep.subr.mxu0 0.0
    %1024 = vmatpush2.msra.mxu0 0.0
    %1025 = vmatprep.subr.mxu0 0.0
    %1026 = vmatpush2.msra.mxu0 0.0
    %1027 = vmatprep.subr.mxu0 0.0
    %1028 = vmatpush2.msra.mxu0 0.0
    %1029 = vmatprep.subr.mxu0 %v690
    %1030 = vmatpush2.msra.mxu0 %v687
    %1031 = vmatprep.subr.mxu0 %v362
    %1032 = vmatpush2.msra.mxu0 %v366
    %1033 = vmatprep.mubr.f32.mxu0 %v639
    %1034 = vmatmul.mubr.f32.gmra.mxu0 %v613
    %v1035 = vpop.f32.mrf.mxu0
    %v1036 = vadd.f32 0.0, %v1035
    %v1037 = vpop.f32.mrf.mxu0
    %v1038 = vadd.f32 0.0, %v1037
    %1039 = vmatprep.mubr.f32.mxu0 %v642
    %1040 = vmatmul.mubr.f32.gmra.mxu0 %v615
    %v1041 = vpop.f32.mrf.mxu0
    %v1042 = vadd.f32 0.0, %v1041
    %v1043 = vpop.f32.mrf.mxu0
    %v1044 = vadd.f32 0.0, %v1043
    %1045 = vmatprep.mubr.f32.mxu0 %v645
    %1046 = vmatmul.mubr.f32.gmra.mxu0 %v617
    %v1047 = vpop.f32.mrf.mxu0
    %v1048 = vadd.f32 0.0, %v1047
    %v1049 = vpop.f32.mrf.mxu0
    %v1050 = vadd.f32 0.0, %v1049
    %1051 = vmatprep.mubr.f32.mxu0 %v648
    %1052 = vmatmul.mubr.f32.gmra.mxu0 %v619
    %v1053 = vpop.f32.mrf.mxu0
    %v1054 = vadd.f32 0.0, %v1053
    %v1055 = vpop.f32.mrf.mxu0
    %v1056 = vadd.f32 0.0, %v1055
    %1057 = vmatprep.mubr.f32.mxu0 %v651
    %1058 = vmatmul.mubr.f32.gmra.mxu0 %v621
    %v1059 = vpop.f32.mrf.mxu0
    %v1060 = vadd.f32 0.0, %v1059
    %v1061 = vpop.f32.mrf.mxu0
    %v1062 = vadd.f32 0.0, %v1061
    %1063 = vmatprep.mubr.f32.mxu0 %v654
    %1064 = vmatmul.mubr.f32.gmra.mxu0 %v623
    %v1065 = vpop.f32.mrf.mxu0
    %v1066 = vadd.f32 0.0, %v1065
    %v1067 = vpop.f32.mrf.mxu0
    %v1068 = vadd.f32 0.0, %v1067
    %1069 = vmatprep.mubr.f32.mxu0 %v657
    %1070 = vmatmul.mubr.f32.gmra.mxu0 %v625
    %v1071 = vpop.f32.mrf.mxu0
    %v1072 = vadd.f32 0.0, %v1071
    %v1073 = vpop.f32.mrf.mxu0
    %v1074 = vadd.f32 0.0, %v1073
    %1075 = vmatprep.mubr.f32.mxu0 %v660
    %1076 = vmatmul.mubr.f32.gmra.mxu0 %v627
    %v1077 = vpop.f32.mrf.mxu0
    %v1078 = vadd.f32 0.0, %v1077
    %v1079 = vpop.f32.mrf.mxu0
    %v1080 = vadd.f32 0.0, %v1079
    %1081 = vmatprep.mubr.f32.mxu0 %v663
    %1082 = vmatmul.mubr.f32.gmra.mxu0 %v629
    %v1083 = vpop.f32.mrf.mxu0
    %v1084 = vadd.f32 0.0, %v1083
    %v1085 = vpop.f32.mrf.mxu0
    %v1086 = vadd.f32 0.0, %v1085
    %1087 = vmatprep.mubr.f32.mxu0 %v666
    %1088 = vmatmul.mubr.f32.gmra.mxu0 %v631
    %v1089 = vpop.f32.mrf.mxu0
    %v1090 = vadd.f32 0.0, %v1089
    %v1091 = vpop.f32.mrf.mxu0
    %v1092 = vadd.f32 0.0, %v1091
    %1093 = vmatprep.mubr.f32.mxu0 %v669
    %1094 = vmatmul.mubr.f32.gmra.mxu0 %v633
    %v1095 = vpop.f32.mrf.mxu0
    %v1096 = vadd.f32 0.0, %v1095
    %v1097 = vpop.f32.mrf.mxu0
    %v1098 = vadd.f32 0.0, %v1097
    %1099 = vmatprep.mubr.f32.mxu0 %v672
    %1100 = vmatmul.mubr.f32.gmra.mxu0 %v635
    %v1101 = vpop.f32.mrf.mxu0
    %v1102 = vadd.f32 0.0, %v1101
    %v1103 = vpop.f32.mrf.mxu0
    %v1104 = vadd.f32 0.0, %v1103
    %1105 = vdwg.mxu0
    %1106 = vmatprep.subr.mxu0 0.0
    %1107 = vmatpush1.msra.mxu0 %v385
    %1108 = vmatprep.subr.mxu0 0.0
    %1109 = vmatpush1.msra.mxu0 %v384
    %1110 = vmatprep.subr.mxu0 0.0
    %1111 = vmatpush1.msra.mxu0 %v570
    %1112 = vmatprep.subr.mxu0 0.0
    %1113 = vmatpush1.msra.mxu0 %v556
    %1114 = vmatprep.subr.mxu0 0.0
    %1115 = vmatpush1.msra.mxu0 %v542
    %1116 = vmatprep.subr.mxu0 0.0
    %1117 = vmatpush1.msra.mxu0 %v612
    %1118 = vmatprep.subr.mxu0 0.0
    %1119 = vmatpush1.msra.mxu0 %v216
    %1120 = vmatprep.subr.mxu0 0.0
    %1121 = vmatpush1.msra.mxu0 %v215
    %1122 = vmatprep.subr.mxu0 0.0
    %1123 = vmatpush1.msra.mxu0 %v214
    %1124 = vmatprep.subr.mxu0 0.0
    %1125 = vmatpush1.msra.mxu0 %v465
    %1126 = vmatprep.subr.mxu0 0.0
    %1127 = vmatpush1.msra.mxu0 %v451
    %1128 = vmatprep.subr.mxu0 0.0
    %1129 = vmatpush1.msra.mxu0 %v437
    %1130 = vmatprep.subr.mxu0 0.0
    %1131 = vmatpush1.msra.mxu0 %v605
    %1132 = vmatprep.subr.mxu0 0.0
    %1133 = vmatpush1.msra.mxu0 %v38
    %1134 = vmatprep.subr.mxu0 0.0
    %1135 = vmatpush1.msra.mxu0 %v31
    %1136 = vmatprep.subr.mxu0 0.0
    %1137 = vmatpush1.msra.mxu0 %v24
    %1138 = vmatprep.subr.mxu0 0.0
    %1139 = vmatpush2.msra.mxu0 0.0
    %1140 = vmatprep.subr.mxu0 0.0
    %1141 = vmatpush2.msra.mxu0 0.0
    %1142 = vmatprep.subr.mxu0 0.0
    %1143 = vmatpush2.msra.mxu0 0.0
    %1144 = vmatprep.subr.mxu0 0.0
    %1145 = vmatpush2.msra.mxu0 0.0
    %1146 = vmatprep.subr.mxu0 0.0
    %1147 = vmatpush2.msra.mxu0 0.0
    %1148 = vmatprep.subr.mxu0 0.0
    %1149 = vmatpush2.msra.mxu0 0.0
    %1150 = vmatprep.subr.mxu0 0.0
    %1151 = vmatpush2.msra.mxu0 0.0
    %1152 = vmatprep.subr.mxu0 0.0
    %1153 = vmatpush2.msra.mxu0 0.0
    %1154 = vmatprep.subr.mxu0 0.0
    %1155 = vmatpush2.msra.mxu0 0.0
    %1156 = vmatprep.subr.mxu0 0.0
    %1157 = vmatpush2.msra.mxu0 0.0
    %1158 = vmatprep.subr.mxu0 0.0
    %1159 = vmatpush2.msra.mxu0 0.0
    %1160 = vmatprep.subr.mxu0 0.0
    %1161 = vmatpush2.msra.mxu0 0.0
    %1162 = vmatprep.subr.mxu0 0.0
    %1163 = vmatpush2.msra.mxu0 0.0
    %1164 = vmatprep.subr.mxu0 0.0
    %1165 = vmatpush2.msra.mxu0 0.0
    %1166 = vmatprep.subr.mxu0 0.0
    %1167 = vmatpush2.msra.mxu0 %v693
    %1168 = vmatprep.subr.mxu0 0.0
    %1169 = vmatpush2.msra.mxu0 %v386
    %1170 = vmatprep.mubr.f32.mxu0 %v639
    %1171 = vmatmul.mubr.f32.gmra.mxu0 %v613
    %v1172 = vpop.f32.mrf.mxu0
    %v1173 = vadd.f32 0.0, %v1172
    %v1174 = vpop.f32.mrf.mxu0
    %1175 = vmatprep.mubr.f32.mxu0 %v642
    %1176 = vmatmul.mubr.f32.gmra.mxu0 %v615
    %v1177 = vpop.f32.mrf.mxu0
    %v1178 = vadd.f32 0.0, %v1177
    %v1179 = vpop.f32.mrf.mxu0
    %1180 = vmatprep.mubr.f32.mxu0 %v645
    %1181 = vmatmul.mubr.f32.gmra.mxu0 %v617
    %v1182 = vpop.f32.mrf.mxu0
    %v1183 = vadd.f32 0.0, %v1182
    %v1184 = vpop.f32.mrf.mxu0
    %1185 = vmatprep.mubr.f32.mxu0 %v648
    %1186 = vmatmul.mubr.f32.gmra.mxu0 %v619
    %v1187 = vpop.f32.mrf.mxu0
    %v1188 = vadd.f32 0.0, %v1187
    %v1189 = vpop.f32.mrf.mxu0
    %1190 = vmatprep.mubr.f32.mxu0 %v651
    %1191 = vmatmul.mubr.f32.gmra.mxu0 %v621
    %v1192 = vpop.f32.mrf.mxu0
    %v1193 = vadd.f32 0.0, %v1192
    %v1194 = vpop.f32.mrf.mxu0
    %1195 = vmatprep.mubr.f32.mxu0 %v654
    %1196 = vmatmul.mubr.f32.gmra.mxu0 %v623
    %v1197 = vpop.f32.mrf.mxu0
    %v1198 = vadd.f32 0.0, %v1197
    %v1199 = vpop.f32.mrf.mxu0
    %1200 = vmatprep.mubr.f32.mxu0 %v657
    %1201 = vmatmul.mubr.f32.gmra.mxu0 %v625
    %v1202 = vpop.f32.mrf.mxu0
    %v1203 = vadd.f32 0.0, %v1202
    %v1204 = vpop.f32.mrf.mxu0
    %1205 = vmatprep.mubr.f32.mxu0 %v660
    %1206 = vmatmul.mubr.f32.gmra.mxu0 %v627
    %v1207 = vpop.f32.mrf.mxu0
    %v1208 = vadd.f32 0.0, %v1207
    %v1209 = vpop.f32.mrf.mxu0
    %1210 = vmatprep.mubr.f32.mxu0 %v663
    %1211 = vmatmul.mubr.f32.gmra.mxu0 %v629
    %v1212 = vpop.f32.mrf.mxu0
    %v1213 = vadd.f32 0.0, %v1212
    %v1214 = vpop.f32.mrf.mxu0
    %1215 = vmatprep.mubr.f32.mxu0 %v666
    %1216 = vmatmul.mubr.f32.gmra.mxu0 %v631
    %v1217 = vpop.f32.mrf.mxu0
    %v1218 = vadd.f32 0.0, %v1217
    %v1219 = vpop.f32.mrf.mxu0
    %1220 = vmatprep.mubr.f32.mxu0 %v669
    %1221 = vmatmul.mubr.f32.gmra.mxu0 %v633
    %v1222 = vpop.f32.mrf.mxu0
    %v1223 = vadd.f32 0.0, %v1222
    %v1224 = vpop.f32.mrf.mxu0
    %1225 = vmatprep.mubr.f32.mxu0 %v672
    %1226 = vmatmul.mubr.f32.gmra.mxu0 %v635
    %v1227 = vpop.f32.mrf.mxu0
    %v1228 = vadd.f32 0.0, %v1227
    %v1229 = vpop.f32.mrf.mxu0
    %1230 = vdwg.mxu0
    %v1231 = vmax.f32 %v762, %v798
    %v1232 = vmax.f32 %v764, %v800
    %v1233 = vmax.f32 %v899, %v935
    %v1234 = vmax.f32 %v901, %v937
    %v1235 = vmax.f32 %v1036, %v1072
    %v1236 = vmax.f32 %v1038, %v1074
    %v1237 = vmax.f32 %v1173, %v1203
    %v1238 = vmax.f32 %v768, %v804
    %v1239 = vmax.f32 %v770, %v806
    %v1240 = vmax.f32 %v905, %v941
    %v1241 = vmax.f32 %v907, %v943
    %v1242 = vmax.f32 %v1042, %v1078
    %v1243 = vmax.f32 %v1044, %v1080
    %v1244 = vmax.f32 %v1178, %v1208
    %v1245 = vmax.f32 %v774, %v810
    %v1246 = vmax.f32 %v776, %v812
    %v1247 = vmax.f32 %v911, %v947
    %v1248 = vmax.f32 %v913, %v949
    %v1249 = vmax.f32 %v1048, %v1084
    %v1250 = vmax.f32 %v1050, %v1086
    %v1251 = vmax.f32 %v1183, %v1213
    %v1252 = vmax.f32 %v780, %v816
    %v1253 = vmax.f32 %v782, %v818
    %v1254 = vmax.f32 %v917, %v953
    %v1255 = vmax.f32 %v919, %v955
    %v1256 = vmax.f32 %v1054, %v1090
    %v1257 = vmax.f32 %v1056, %v1092
    %v1258 = vmax.f32 %v1188, %v1218
    %v1259 = vmax.f32 %v786, %v822
    %v1260 = vmax.f32 %v788, %v824
    %v1261 = vmax.f32 %v923, %v959
    %v1262 = vmax.f32 %v925, %v961
    %v1263 = vmax.f32 %v1060, %v1096
    %v1264 = vmax.f32 %v1062, %v1098
    %v1265 = vmax.f32 %v1193, %v1223
    %v1266 = vmax.f32 %v792, %v828
    %v1267 = vmax.f32 %v794, %v830
    %v1268 = vmax.f32 %v929, %v965
    %v1269 = vmax.f32 %v931, %v967
    %v1270 = vmax.f32 %v1066, %v1102
    %v1271 = vmax.f32 %v1068, %v1104
    %v1272 = vmax.f32 %v1198, %v1228
    %1273 = vrot.lane.b32.xlu0 %v1231, 127
    %v1274 = vpop.permute.xlu0 %1273
    %1275 = vrot.lane.b32.xlu0 %v1238, 127
    %v1276 = vpop.permute.xlu0 %1275
    %1277 = vrot.lane.b32.xlu0 %v1245, 127
    %v1278 = vpop.permute.xlu0 %1277
    %1279 = vrot.lane.b32.xlu0 %v1252, 127
    %v1280 = vpop.permute.xlu0 %1279
    %1281 = vrot.lane.b32.xlu0 %v1259, 127
    %v1282 = vpop.permute.xlu0 %1281
    %1283 = vrot.lane.b32.xlu0 %v1266, 127
    %v1284 = vpop.permute.xlu0 %1283
    %1285 = vrot.lane.b32.xlu0 %v1232, 127
    %v1286 = vpop.permute.xlu0 %1285
    %1287 = vrot.lane.b32.xlu0 %v1239, 127
    %v1288 = vpop.permute.xlu0 %1287
    %1289 = vrot.lane.b32.xlu0 %v1246, 127
    %v1290 = vpop.permute.xlu0 %1289
    %1291 = vrot.lane.b32.xlu0 %v1253, 127
    %v1292 = vpop.permute.xlu0 %1291
    %1293 = vrot.lane.b32.xlu0 %v1260, 127
    %v1294 = vpop.permute.xlu0 %1293
    %1295 = vrot.lane.b32.xlu0 %v1267, 127
    %v1296 = vpop.permute.xlu0 %1295
    %1297 = vrot.lane.b32.xlu0 %v1233, 127
    %v1298 = vpop.permute.xlu0 %1297
    %1299 = vrot.lane.b32.xlu0 %v1240, 127
    %v1300 = vpop.permute.xlu0 %1299
    %1301 = vrot.lane.b32.xlu0 %v1247, 127
    %v1302 = vpop.permute.xlu0 %1301
    %1303 = vrot.lane.b32.xlu0 %v1254, 127
    %v1304 = vpop.permute.xlu0 %1303
    %1305 = vrot.lane.b32.xlu0 %v1261, 127
    %v1306 = vpop.permute.xlu0 %1305
    %1307 = vrot.lane.b32.xlu0 %v1268, 127
    %v1308 = vpop.permute.xlu0 %1307
    %1309 = vrot.lane.b32.xlu0 %v1234, 127
    %v1310 = vpop.permute.xlu0 %1309
    %1311 = vrot.lane.b32.xlu0 %v1241, 127
    %v1312 = vpop.permute.xlu0 %1311
    %1313 = vrot.lane.b32.xlu0 %v1248, 127
    %v1314 = vpop.permute.xlu0 %1313
    %1315 = vrot.lane.b32.xlu0 %v1255, 127
    %v1316 = vpop.permute.xlu0 %1315
    %1317 = vrot.lane.b32.xlu0 %v1262, 127
    %v1318 = vpop.permute.xlu0 %1317
    %1319 = vrot.lane.b32.xlu0 %v1269, 127
    %v1320 = vpop.permute.xlu0 %1319
    %1321 = vrot.lane.b32.xlu0 %v1235, 127
    %v1322 = vpop.permute.xlu0 %1321
    %1323 = vrot.lane.b32.xlu0 %v1242, 127
    %v1324 = vpop.permute.xlu0 %1323
    %1325 = vrot.lane.b32.xlu0 %v1249, 127
    %v1326 = vpop.permute.xlu0 %1325
    %1327 = vrot.lane.b32.xlu0 %v1256, 127
    %v1328 = vpop.permute.xlu0 %1327
    %1329 = vrot.lane.b32.xlu0 %v1263, 127
    %v1330 = vpop.permute.xlu0 %1329
    %1331 = vrot.lane.b32.xlu0 %v1270, 127
    %v1332 = vpop.permute.xlu0 %1331
    %1333 = vrot.lane.b32.xlu0 %v1236, 127
    %v1334 = vpop.permute.xlu0 %1333
    %1335 = vrot.lane.b32.xlu0 %v1243, 127
    %v1336 = vpop.permute.xlu0 %1335
    %1337 = vrot.lane.b32.xlu0 %v1250, 127
    %v1338 = vpop.permute.xlu0 %1337
    %1339 = vrot.lane.b32.xlu0 %v1257, 127
    %v1340 = vpop.permute.xlu0 %1339
    %1341 = vrot.lane.b32.xlu0 %v1264, 127
    %v1342 = vpop.permute.xlu0 %1341
    %1343 = vrot.lane.b32.xlu0 %v1271, 127
    %v1344 = vpop.permute.xlu0 %1343
    %1345 = vrot.lane.b32.xlu0 %v1237, 127
    %v1346 = vpop.permute.xlu0 %1345
    %1347 = vrot.lane.b32.xlu0 %v1244, 127
    %v1348 = vpop.permute.xlu0 %1347
    %1349 = vrot.lane.b32.xlu0 %v1251, 127
    %v1350 = vpop.permute.xlu0 %1349
    %1351 = vrot.lane.b32.xlu0 %v1258, 127
    %v1352 = vpop.permute.xlu0 %1351
    %1353 = vrot.lane.b32.xlu0 %v1265, 127
    %v1354 = vpop.permute.xlu0 %1353
    %1355 = vrot.lane.b32.xlu0 %v1272, 127
    %v1356 = vpop.permute.xlu0 %1355
    %v1357 = vsel %vm104, %v1334, %v1346
    %v1358 = vsel %vm104, %v1336, %v1348
    %v1359 = vsel %vm104, %v1338, %v1350
    %v1360 = vsel %vm104, %v1340, %v1352
    %v1361 = vsel %vm104, %v1342, %v1354
    %v1362 = vsel %vm104, %v1344, %v1356
    %v1363 = vsel %vm104, %v1322, %v1334
    %v1364 = vsel %vm104, %v1324, %v1336
    %v1365 = vsel %vm104, %v1326, %v1338
    %v1366 = vsel %vm104, %v1328, %v1340
    %v1367 = vsel %vm104, %v1330, %v1342
    %v1368 = vsel %vm104, %v1332, %v1344
    %v1369 = vsel %vm104, %v1310, %v1322
    %v1370 = vsel %vm104, %v1312, %v1324
    %v1371 = vsel %vm104, %v1314, %v1326
    %v1372 = vsel %vm104, %v1316, %v1328
    %v1373 = vsel %vm104, %v1318, %v1330
    %v1374 = vsel %vm104, %v1320, %v1332
    %v1375 = vsel %vm104, %v1298, %v1310
    %v1376 = vsel %vm104, %v1300, %v1312
    %v1377 = vsel %vm104, %v1302, %v1314
    %v1378 = vsel %vm104, %v1304, %v1316
    %v1379 = vsel %vm104, %v1306, %v1318
    %v1380 = vsel %vm104, %v1308, %v1320
    %v1381 = vsel %vm104, %v1286, %v1298
    %v1382 = vsel %vm104, %v1288, %v1300
    %v1383 = vsel %vm104, %v1290, %v1302
    %v1384 = vsel %vm104, %v1292, %v1304
    %v1385 = vsel %vm104, %v1294, %v1306
    %v1386 = vsel %vm104, %v1296, %v1308
    %v1387 = vsel %vm104, %v1274, %v1286
    %v1388 = vsel %vm104, %v1276, %v1288
    %v1389 = vsel %vm104, %v1278, %v1290
    %v1390 = vsel %vm104, %v1280, %v1292
    %v1391 = vsel %vm104, %v1282, %v1294
    %v1392 = vsel %vm104, %v1284, %v1296
    %v1393 = vsel %vm104, %v1346, %v1274
    %v1394 = vsel %vm104, %v1348, %v1276
    %v1395 = vsel %vm104, %v1350, %v1278
    %v1396 = vsel %vm104, %v1352, %v1280
    %v1397 = vsel %vm104, %v1354, %v1282
    %v1398 = vsel %vm104, %v1356, %v1284
    %v1399 = vmax.f32 %v1231, %v1387
    %v1400 = vmax.f32 %v1232, %v1381
    %v1401 = vmax.f32 %v1233, %v1375
    %v1402 = vmax.f32 %v1234, %v1369
    %v1403 = vmax.f32 %v1235, %v1363
    %v1404 = vmax.f32 %v1236, %v1357
    %v1405 = vmax.f32 %v1237, %v1393
    %v1406 = vmax.f32 %v1238, %v1388
    %v1407 = vmax.f32 %v1239, %v1382
    %v1408 = vmax.f32 %v1240, %v1376
    %v1409 = vmax.f32 %v1241, %v1370
    %v1410 = vmax.f32 %v1242, %v1364
    %v1411 = vmax.f32 %v1243, %v1358
    %v1412 = vmax.f32 %v1244, %v1394
    %v1413 = vmax.f32 %v1245, %v1389
    %v1414 = vmax.f32 %v1246, %v1383
    %v1415 = vmax.f32 %v1247, %v1377
    %v1416 = vmax.f32 %v1248, %v1371
    %v1417 = vmax.f32 %v1249, %v1365
    %v1418 = vmax.f32 %v1250, %v1359
    %v1419 = vmax.f32 %v1251, %v1395
    %v1420 = vmax.f32 %v1252, %v1390
    %v1421 = vmax.f32 %v1253, %v1384
    %v1422 = vmax.f32 %v1254, %v1378
    %v1423 = vmax.f32 %v1255, %v1372
    %v1424 = vmax.f32 %v1256, %v1366
    %v1425 = vmax.f32 %v1257, %v1360
    %v1426 = vmax.f32 %v1258, %v1396
    %v1427 = vmax.f32 %v1259, %v1391
    %v1428 = vmax.f32 %v1260, %v1385
    %v1429 = vmax.f32 %v1261, %v1379
    %v1430 = vmax.f32 %v1262, %v1373
    %v1431 = vmax.f32 %v1263, %v1367
    %v1432 = vmax.f32 %v1264, %v1361
    %v1433 = vmax.f32 %v1265, %v1397
    %v1434 = vmax.f32 %v1266, %v1392
    %v1435 = vmax.f32 %v1267, %v1386
    %v1436 = vmax.f32 %v1268, %v1380
    %v1437 = vmax.f32 %v1269, %v1374
    %v1438 = vmax.f32 %v1270, %v1368
    %v1439 = vmax.f32 %v1271, %v1362
    %v1440 = vmax.f32 %v1272, %v1398
    %v1441 = vmax.f32 %v1399, 0.0
    %v1442 = vmax.f32 %v1400, 0.0
    %v1443 = vmax.f32 %v1401, 0.0
    %v1444 = vmax.f32 %v1402, 0.0
    %v1445 = vmax.f32 %v1403, 0.0
    %v1446 = vmax.f32 %v1404, 0.0
    %v1447 = vmax.f32 %v1405, 0.0
    %v1448 = vmax.f32 %v1406, 0.0
    %v1449 = vmax.f32 %v1407, 0.0
    %v1450 = vmax.f32 %v1408, 0.0
    %v1451 = vmax.f32 %v1409, 0.0
    %v1452 = vmax.f32 %v1410, 0.0
    %v1453 = vmax.f32 %v1411, 0.0
    %v1454 = vmax.f32 %v1412, 0.0
    %v1455 = vmax.f32 %v1413, 0.0
    %v1456 = vmax.f32 %v1414, 0.0
    %v1457 = vmax.f32 %v1415, 0.0
    %v1458 = vmax.f32 %v1416, 0.0
    %v1459 = vmax.f32 %v1417, 0.0
    %v1460 = vmax.f32 %v1418, 0.0
    %v1461 = vmax.f32 %v1419, 0.0
    %v1462 = vmax.f32 %v1420, 0.0
    %v1463 = vmax.f32 %v1421, 0.0
    %v1464 = vmax.f32 %v1422, 0.0
    %v1465 = vmax.f32 %v1423, 0.0
    %v1466 = vmax.f32 %v1424, 0.0
    %v1467 = vmax.f32 %v1425, 0.0
    %v1468 = vmax.f32 %v1426, 0.0
    %v1469 = vmax.f32 %v1427, 0.0
    %v1470 = vmax.f32 %v1428, 0.0
    %v1471 = vmax.f32 %v1429, 0.0
    %v1472 = vmax.f32 %v1430, 0.0
    %v1473 = vmax.f32 %v1431, 0.0
    %v1474 = vmax.f32 %v1432, 0.0
    %v1475 = vmax.f32 %v1433, 0.0
    %v1476 = vmax.f32 %v1434, 0.0
    %v1477 = vmax.f32 %v1435, 0.0
    %v1478 = vmax.f32 %v1436, 0.0
    %v1479 = vmax.f32 %v1437, 0.0
    %v1480 = vmax.f32 %v1438, 0.0
    %v1481 = vmax.f32 %v1439, 0.0
    %v1482 = vmax.f32 %v1440, 0.0
    %1483 = vrot.lane.b32.xlu0 %v1441, 126
    %v1484 = vpop.permute.xlu0 %1483
    %1485 = vrot.lane.b32.xlu0 %v1448, 126
    %v1486 = vpop.permute.xlu0 %1485
    %1487 = vrot.lane.b32.xlu0 %v1455, 126
    %v1488 = vpop.permute.xlu0 %1487
    %1489 = vrot.lane.b32.xlu0 %v1462, 126
    %v1490 = vpop.permute.xlu0 %1489
    %1491 = vrot.lane.b32.xlu0 %v1469, 126
    %v1492 = vpop.permute.xlu0 %1491
    %1493 = vrot.lane.b32.xlu0 %v1476, 126
    %v1494 = vpop.permute.xlu0 %1493
    %1495 = vrot.lane.b32.xlu0 %v1442, 126
    %v1496 = vpop.permute.xlu0 %1495
    %1497 = vrot.lane.b32.xlu0 %v1449, 126
    %v1498 = vpop.permute.xlu0 %1497
    %1499 = vrot.lane.b32.xlu0 %v1456, 126
    %v1500 = vpop.permute.xlu0 %1499
    %1501 = vrot.lane.b32.xlu0 %v1463, 126
    %v1502 = vpop.permute.xlu0 %1501
    %1503 = vrot.lane.b32.xlu0 %v1470, 126
    %v1504 = vpop.permute.xlu0 %1503
    %1505 = vrot.lane.b32.xlu0 %v1477, 126
    %v1506 = vpop.permute.xlu0 %1505
    %1507 = vrot.lane.b32.xlu0 %v1443, 126
    %v1508 = vpop.permute.xlu0 %1507
    %1509 = vrot.lane.b32.xlu0 %v1450, 126
    %v1510 = vpop.permute.xlu0 %1509
    %1511 = vrot.lane.b32.xlu0 %v1457, 126
    %v1512 = vpop.permute.xlu0 %1511
    %1513 = vrot.lane.b32.xlu0 %v1464, 126
    %v1514 = vpop.permute.xlu0 %1513
    %1515 = vrot.lane.b32.xlu0 %v1471, 126
    %v1516 = vpop.permute.xlu0 %1515
    %1517 = vrot.lane.b32.xlu0 %v1478, 126
    %v1518 = vpop.permute.xlu0 %1517
    %1519 = vrot.lane.b32.xlu0 %v1444, 126
    %v1520 = vpop.permute.xlu0 %1519
    %1521 = vrot.lane.b32.xlu0 %v1451, 126
    %v1522 = vpop.permute.xlu0 %1521
    %1523 = vrot.lane.b32.xlu0 %v1458, 126
    %v1524 = vpop.permute.xlu0 %1523
    %1525 = vrot.lane.b32.xlu0 %v1465, 126
    %v1526 = vpop.permute.xlu0 %1525
    %1527 = vrot.lane.b32.xlu0 %v1472, 126
    %v1528 = vpop.permute.xlu0 %1527
    %1529 = vrot.lane.b32.xlu0 %v1479, 126
    %v1530 = vpop.permute.xlu0 %1529
    %1531 = vrot.lane.b32.xlu0 %v1445, 126
    %v1532 = vpop.permute.xlu0 %1531
    %1533 = vrot.lane.b32.xlu0 %v1452, 126
    %v1534 = vpop.permute.xlu0 %1533
    %1535 = vrot.lane.b32.xlu0 %v1459, 126
    %v1536 = vpop.permute.xlu0 %1535
    %1537 = vrot.lane.b32.xlu0 %v1466, 126
    %v1538 = vpop.permute.xlu0 %1537
    %1539 = vrot.lane.b32.xlu0 %v1473, 126
    %v1540 = vpop.permute.xlu0 %1539
    %1541 = vrot.lane.b32.xlu0 %v1480, 126
    %v1542 = vpop.permute.xlu0 %1541
    %1543 = vrot.lane.b32.xlu0 %v1446, 126
    %v1544 = vpop.permute.xlu0 %1543
    %1545 = vrot.lane.b32.xlu0 %v1453, 126
    %v1546 = vpop.permute.xlu0 %1545
    %1547 = vrot.lane.b32.xlu0 %v1460, 126
    %v1548 = vpop.permute.xlu0 %1547
    %1549 = vrot.lane.b32.xlu0 %v1467, 126
    %v1550 = vpop.permute.xlu0 %1549
    %1551 = vrot.lane.b32.xlu0 %v1474, 126
    %v1552 = vpop.permute.xlu0 %1551
    %1553 = vrot.lane.b32.xlu0 %v1481, 126
    %v1554 = vpop.permute.xlu0 %1553
    %1555 = vrot.lane.b32.xlu0 %v1447, 126
    %v1556 = vpop.permute.xlu0 %1555
    %1557 = vrot.lane.b32.xlu0 %v1454, 126
    %v1558 = vpop.permute.xlu0 %1557
    %1559 = vrot.lane.b32.xlu0 %v1461, 126
    %v1560 = vpop.permute.xlu0 %1559
    %1561 = vrot.lane.b32.xlu0 %v1468, 126
    %v1562 = vpop.permute.xlu0 %1561
    %1563 = vrot.lane.b32.xlu0 %v1475, 126
    %v1564 = vpop.permute.xlu0 %1563
    %1565 = vrot.lane.b32.xlu0 %v1482, 126
    %v1566 = vpop.permute.xlu0 %1565
    %v1567 = vsel %vm189, %v1544, %v1556
    %v1568 = vsel %vm189, %v1546, %v1558
    %v1569 = vsel %vm189, %v1548, %v1560
    %v1570 = vsel %vm189, %v1550, %v1562
    %v1571 = vsel %vm189, %v1552, %v1564
    %v1572 = vsel %vm189, %v1554, %v1566
    %v1573 = vsel %vm189, %v1532, %v1544
    %v1574 = vsel %vm189, %v1534, %v1546
    %v1575 = vsel %vm189, %v1536, %v1548
    %v1576 = vsel %vm189, %v1538, %v1550
    %v1577 = vsel %vm189, %v1540, %v1552
    %v1578 = vsel %vm189, %v1542, %v1554
    %v1579 = vsel %vm189, %v1520, %v1532
    %v1580 = vsel %vm189, %v1522, %v1534
    %v1581 = vsel %vm189, %v1524, %v1536
    %v1582 = vsel %vm189, %v1526, %v1538
    %v1583 = vsel %vm189, %v1528, %v1540
    %v1584 = vsel %vm189, %v1530, %v1542
    %v1585 = vsel %vm189, %v1508, %v1520
    %v1586 = vsel %vm189, %v1510, %v1522
    %v1587 = vsel %vm189, %v1512, %v1524
    %v1588 = vsel %vm189, %v1514, %v1526
    %v1589 = vsel %vm189, %v1516, %v1528
    %v1590 = vsel %vm189, %v1518, %v1530
    %v1591 = vsel %vm189, %v1496, %v1508
    %v1592 = vsel %vm189, %v1498, %v1510
    %v1593 = vsel %vm189, %v1500, %v1512
    %v1594 = vsel %vm189, %v1502, %v1514
    %v1595 = vsel %vm189, %v1504, %v1516
    %v1596 = vsel %vm189, %v1506, %v1518
    %v1597 = vsel %vm189, %v1484, %v1496
    %v1598 = vsel %vm189, %v1486, %v1498
    %v1599 = vsel %vm189, %v1488, %v1500
    %v1600 = vsel %vm189, %v1490, %v1502
    %v1601 = vsel %vm189, %v1492, %v1504
    %v1602 = vsel %vm189, %v1494, %v1506
    %v1603 = vsel %vm189, %v1556, %v1484
    %v1604 = vsel %vm189, %v1558, %v1486
    %v1605 = vsel %vm189, %v1560, %v1488
    %v1606 = vsel %vm189, %v1562, %v1490
    %v1607 = vsel %vm189, %v1564, %v1492
    %v1608 = vsel %vm189, %v1566, %v1494
    %1609 = vrot.lane.b32.xlu0 %v1441, 124
    %v1610 = vpop.permute.xlu0 %1609
    %1611 = vrot.lane.b32.xlu0 %v1448, 124
    %v1612 = vpop.permute.xlu0 %1611
    %1613 = vrot.lane.b32.xlu0 %v1455, 124
    %v1614 = vpop.permute.xlu0 %1613
    %1615 = vrot.lane.b32.xlu0 %v1462, 124
    %v1616 = vpop.permute.xlu0 %1615
    %1617 = vrot.lane.b32.xlu0 %v1469, 124
    %v1618 = vpop.permute.xlu0 %1617
    %1619 = vrot.lane.b32.xlu0 %v1476, 124
    %v1620 = vpop.permute.xlu0 %1619
    %1621 = vrot.lane.b32.xlu0 %v1442, 124
    %v1622 = vpop.permute.xlu0 %1621
    %1623 = vrot.lane.b32.xlu0 %v1449, 124
    %v1624 = vpop.permute.xlu0 %1623
    %1625 = vrot.lane.b32.xlu0 %v1456, 124
    %v1626 = vpop.permute.xlu0 %1625
    %1627 = vrot.lane.b32.xlu0 %v1463, 124
    %v1628 = vpop.permute.xlu0 %1627
    %1629 = vrot.lane.b32.xlu0 %v1470, 124
    %v1630 = vpop.permute.xlu0 %1629
    %1631 = vrot.lane.b32.xlu0 %v1477, 124
    %v1632 = vpop.permute.xlu0 %1631
    %1633 = vrot.lane.b32.xlu0 %v1443, 124
    %v1634 = vpop.permute.xlu0 %1633
    %1635 = vrot.lane.b32.xlu0 %v1450, 124
    %v1636 = vpop.permute.xlu0 %1635
    %1637 = vrot.lane.b32.xlu0 %v1457, 124
    %v1638 = vpop.permute.xlu0 %1637
    %1639 = vrot.lane.b32.xlu0 %v1464, 124
    %v1640 = vpop.permute.xlu0 %1639
    %1641 = vrot.lane.b32.xlu0 %v1471, 124
    %v1642 = vpop.permute.xlu0 %1641
    %1643 = vrot.lane.b32.xlu0 %v1478, 124
    %v1644 = vpop.permute.xlu0 %1643
    %1645 = vrot.lane.b32.xlu0 %v1444, 124
    %v1646 = vpop.permute.xlu0 %1645
    %1647 = vrot.lane.b32.xlu0 %v1451, 124
    %v1648 = vpop.permute.xlu0 %1647
    %1649 = vrot.lane.b32.xlu0 %v1458, 124
    %v1650 = vpop.permute.xlu0 %1649
    %1651 = vrot.lane.b32.xlu0 %v1465, 124
    %v1652 = vpop.permute.xlu0 %1651
    %1653 = vrot.lane.b32.xlu0 %v1472, 124
    %v1654 = vpop.permute.xlu0 %1653
    %1655 = vrot.lane.b32.xlu0 %v1479, 124
    %v1656 = vpop.permute.xlu0 %1655
    %1657 = vrot.lane.b32.xlu0 %v1445, 124
    %v1658 = vpop.permute.xlu0 %1657
    %1659 = vrot.lane.b32.xlu0 %v1452, 124
    %v1660 = vpop.permute.xlu0 %1659
    %1661 = vrot.lane.b32.xlu0 %v1459, 124
    %v1662 = vpop.permute.xlu0 %1661
    %1663 = vrot.lane.b32.xlu0 %v1466, 124
    %v1664 = vpop.permute.xlu0 %1663
    %1665 = vrot.lane.b32.xlu0 %v1473, 124
    %v1666 = vpop.permute.xlu0 %1665
    %1667 = vrot.lane.b32.xlu0 %v1480, 124
    %v1668 = vpop.permute.xlu0 %1667
    %1669 = vrot.lane.b32.xlu0 %v1446, 124
    %v1670 = vpop.permute.xlu0 %1669
    %1671 = vrot.lane.b32.xlu0 %v1453, 124
    %v1672 = vpop.permute.xlu0 %1671
    %1673 = vrot.lane.b32.xlu0 %v1460, 124
    %v1674 = vpop.permute.xlu0 %1673
    %1675 = vrot.lane.b32.xlu0 %v1467, 124
    %v1676 = vpop.permute.xlu0 %1675
    %1677 = vrot.lane.b32.xlu0 %v1474, 124
    %v1678 = vpop.permute.xlu0 %1677
    %1679 = vrot.lane.b32.xlu0 %v1481, 124
    %v1680 = vpop.permute.xlu0 %1679
    %1681 = vrot.lane.b32.xlu0 %v1447, 124
    %v1682 = vpop.permute.xlu0 %1681
    %1683 = vrot.lane.b32.xlu0 %v1454, 124
    %v1684 = vpop.permute.xlu0 %1683
    %1685 = vrot.lane.b32.xlu0 %v1461, 124
    %v1686 = vpop.permute.xlu0 %1685
    %1687 = vrot.lane.b32.xlu0 %v1468, 124
    %v1688 = vpop.permute.xlu0 %1687
    %1689 = vrot.lane.b32.xlu0 %v1475, 124
    %v1690 = vpop.permute.xlu0 %1689
    %1691 = vrot.lane.b32.xlu0 %v1482, 124
    %v1692 = vpop.permute.xlu0 %1691
    %v1693 = vsel %vm359, %v1670, %v1682
    %v1694 = vsel %vm359, %v1672, %v1684
    %v1695 = vsel %vm359, %v1674, %v1686
    %v1696 = vsel %vm359, %v1676, %v1688
    %v1697 = vsel %vm359, %v1678, %v1690
    %v1698 = vsel %vm359, %v1680, %v1692
    %v1699 = vsel %vm359, %v1658, %v1670
    %v1700 = vsel %vm359, %v1660, %v1672
    %v1701 = vsel %vm359, %v1662, %v1674
    %v1702 = vsel %vm359, %v1664, %v1676
    %v1703 = vsel %vm359, %v1666, %v1678
    %v1704 = vsel %vm359, %v1668, %v1680
    %v1705 = vsel %vm359, %v1646, %v1658
    %v1706 = vsel %vm359, %v1648, %v1660
    %v1707 = vsel %vm359, %v1650, %v1662
    %v1708 = vsel %vm359, %v1652, %v1664
    %v1709 = vsel %vm359, %v1654, %v1666
    %v1710 = vsel %vm359, %v1656, %v1668
    %v1711 = vsel %vm359, %v1634, %v1646
    %v1712 = vsel %vm359, %v1636, %v1648
    %v1713 = vsel %vm359, %v1638, %v1650
    %v1714 = vsel %vm359, %v1640, %v1652
    %v1715 = vsel %vm359, %v1642, %v1654
    %v1716 = vsel %vm359, %v1644, %v1656
    %v1717 = vsel %vm359, %v1622, %v1634
    %v1718 = vsel %vm359, %v1624, %v1636
    %v1719 = vsel %vm359, %v1626, %v1638
    %v1720 = vsel %vm359, %v1628, %v1640
    %v1721 = vsel %vm359, %v1630, %v1642
    %v1722 = vsel %vm359, %v1632, %v1644
    %v1723 = vsel %vm359, %v1610, %v1622
    %v1724 = vsel %vm359, %v1612, %v1624
    %v1725 = vsel %vm359, %v1614, %v1626
    %v1726 = vsel %vm359, %v1616, %v1628
    %v1727 = vsel %vm359, %v1618, %v1630
    %v1728 = vsel %vm359, %v1620, %v1632
    %v1729 = vsel %vm359, %v1682, %v1610
    %v1730 = vsel %vm359, %v1684, %v1612
    %v1731 = vsel %vm359, %v1686, %v1614
    %v1732 = vsel %vm359, %v1688, %v1616
    %v1733 = vsel %vm359, %v1690, %v1618
    %v1734 = vsel %vm359, %v1692, %v1620
    %v1735 = vld [vmem:[%s2] sm:$0xff]
    %v1736 = vld [vmem:[%s2 + $0x8] sm:$0xff]
    %v1737 = vld [vmem:[%s2 + $0x10] sm:$0xff]
    %v1738 = vld [vmem:[%s2 + $0x18] sm:$0xff]
    %v1739 = vld [vmem:[%s2 + $0x20] sm:$0xf]
    %v1740 = vld [vmem:[%s2 + $0x28] sm:$0xf]
    %vm1741 = vcmask 130048
    %v1743 = vsel %vm1741, %v1736, 0
    %v1746 = vsel %vm1741, %v1738, 0
    %v1749 = vsel %vm1741, %v1740, 0
    %1751 = vmatprep.subr.mxu0 %v1720
    %1752 = vmatpush1.msra.mxu0 %v1726
    %1753 = vmatprep.subr.mxu0 %v1719
    %1754 = vmatpush1.msra.mxu0 %v1725
    %1755 = vmatprep.subr.mxu0 %v1718
    %1756 = vmatpush1.msra.mxu0 %v1724
    %1757 = vmatprep.subr.mxu0 %v1717
    %1758 = vmatpush1.msra.mxu0 %v1723
    %1759 = vmatprep.subr.mxu0 %v1596
    %1760 = vmatpush1.msra.mxu0 %v1602
    %1761 = vmatprep.subr.mxu0 %v1595
    %1762 = vmatpush1.msra.mxu0 %v1601
    %1763 = vmatprep.subr.mxu0 %v1594
    %1764 = vmatpush1.msra.mxu0 %v1600
    %1765 = vmatprep.subr.mxu0 %v1593
    %1766 = vmatpush1.msra.mxu0 %v1599
    %1767 = vmatprep.subr.mxu0 %v1592
    %1768 = vmatpush1.msra.mxu0 %v1598
    %1769 = vmatprep.subr.mxu0 %v1591
    %1770 = vmatpush1.msra.mxu0 %v1597
    %1771 = vmatprep.subr.mxu0 %v1477
    %1772 = vmatpush1.msra.mxu0 %v1476
    %1773 = vmatprep.subr.mxu0 %v1470
    %1774 = vmatpush1.msra.mxu0 %v1469
    %1775 = vmatprep.subr.mxu0 %v1463
    %1776 = vmatpush1.msra.mxu0 %v1462
    %1777 = vmatprep.subr.mxu0 %v1456
    %1778 = vmatpush1.msra.mxu0 %v1455
    %1779 = vmatprep.subr.mxu0 %v1449
    %1780 = vmatpush1.msra.mxu0 %v1448
    %1781 = vmatprep.subr.mxu0 %v1442
    %1782 = vmatpush1.msra.mxu0 %v1441
    %1783 = vmatprep.subr.mxu0 0.0
    %1784 = vmatpush2.msra.mxu0 0.0
    %1785 = vmatprep.subr.mxu0 0.0
    %1786 = vmatpush2.msra.mxu0 0.0
    %1787 = vmatprep.subr.mxu0 0.0
    %1788 = vmatpush2.msra.mxu0 0.0
    %1789 = vmatprep.subr.mxu0 0.0
    %1790 = vmatpush2.msra.mxu0 0.0
    %1791 = vmatprep.subr.mxu0 0.0
    %1792 = vmatpush2.msra.mxu0 0.0
    %1793 = vmatprep.subr.mxu0 0.0
    %1794 = vmatpush2.msra.mxu0 0.0
    %1795 = vmatprep.subr.mxu0 0.0
    %1796 = vmatpush2.msra.mxu0 0.0
    %1797 = vmatprep.subr.mxu0 0.0
    %1798 = vmatpush2.msra.mxu0 0.0
    %1799 = vmatprep.subr.mxu0 0.0
    %1800 = vmatpush2.msra.mxu0 0.0
    %1801 = vmatprep.subr.mxu0 0.0
    %1802 = vmatpush2.msra.mxu0 0.0
    %1803 = vmatprep.subr.mxu0 0.0
    %1804 = vmatpush2.msra.mxu0 0.0
    %1805 = vmatprep.subr.mxu0 0.0
    %1806 = vmatpush2.msra.mxu0 0.0
    %1807 = vmatprep.subr.mxu0 0.0
    %1808 = vmatpush2.msra.mxu0 0.0
    %1809 = vmatprep.subr.mxu0 0.0
    %1810 = vmatpush2.msra.mxu0 0.0
    %1811 = vmatprep.subr.mxu0 %v1722
    %1812 = vmatpush2.msra.mxu0 %v1728
    %1813 = vmatprep.subr.mxu0 %v1721
    %1814 = vmatpush2.msra.mxu0 %v1727
    %1815 = vmatprep.mubr.f32.mxu0 %v1743
    %1816 = vmatmul.mubr.f32.gmra.mxu0 %v1735
    %v1817 = vpop.f32.mrf.mxu0
    %v1818 = vadd.f32 0.0, %v1817
    %v1819 = vpop.f32.mrf.mxu0
    %v1820 = vadd.f32 0.0, %v1819
    %1821 = vmatprep.mubr.f32.mxu0 %v1746
    %1822 = vmatmul.mubr.f32.gmra.mxu0 %v1737
    %v1823 = vpop.f32.mrf.mxu0
    %v1824 = vadd.f32 0.0, %v1823
    %v1825 = vpop.f32.mrf.mxu0
    %v1826 = vadd.f32 0.0, %v1825
    %1827 = vmatprep.mubr.f32.mxu0 %v1749
    %1828 = vmatmul.mubr.f32.gmra.mxu0 %v1739
    %v1829 = vpop.f32.mrf.mxu0
    %v1830 = vadd.f32 0.0, %v1829
    %v1831 = vpop.f32.mrf.mxu0
    %v1832 = vadd.f32 0.0, %v1831
    %1833 = vdwg.mxu0
    %1834 = vmatprep.subr.mxu0 %v1708
    %1835 = vmatpush1.msra.mxu0 %v1714
    %1836 = vmatprep.subr.mxu0 %v1707
    %1837 = vmatpush1.msra.mxu0 %v1713
    %1838 = vmatprep.subr.mxu0 %v1706
    %1839 = vmatpush1.msra.mxu0 %v1712
    %1840 = vmatprep.subr.mxu0 %v1705
    %1841 = vmatpush1.msra.mxu0 %v1711
    %1842 = vmatprep.subr.mxu0 %v1584
    %1843 = vmatpush1.msra.mxu0 %v1590
    %1844 = vmatprep.subr.mxu0 %v1583
    %1845 = vmatpush1.msra.mxu0 %v1589
    %1846 = vmatprep.subr.mxu0 %v1582
    %1847 = vmatpush1.msra.mxu0 %v1588
    %1848 = vmatprep.subr.mxu0 %v1581
    %1849 = vmatpush1.msra.mxu0 %v1587
    %1850 = vmatprep.subr.mxu0 %v1580
    %1851 = vmatpush1.msra.mxu0 %v1586
    %1852 = vmatprep.subr.mxu0 %v1579
    %1853 = vmatpush1.msra.mxu0 %v1585
    %1854 = vmatprep.subr.mxu0 %v1479
    %1855 = vmatpush1.msra.mxu0 %v1478
    %1856 = vmatprep.subr.mxu0 %v1472
    %1857 = vmatpush1.msra.mxu0 %v1471
    %1858 = vmatprep.subr.mxu0 %v1465
    %1859 = vmatpush1.msra.mxu0 %v1464
    %1860 = vmatprep.subr.mxu0 %v1458
    %1861 = vmatpush1.msra.mxu0 %v1457
    %1862 = vmatprep.subr.mxu0 %v1451
    %1863 = vmatpush1.msra.mxu0 %v1450
    %1864 = vmatprep.subr.mxu0 %v1444
    %1865 = vmatpush1.msra.mxu0 %v1443
    %1866 = vmatprep.subr.mxu0 0.0
    %1867 = vmatpush2.msra.mxu0 0.0
    %1868 = vmatprep.subr.mxu0 0.0
    %1869 = vmatpush2.msra.mxu0 0.0
    %1870 = vmatprep.subr.mxu0 0.0
    %1871 = vmatpush2.msra.mxu0 0.0
    %1872 = vmatprep.subr.mxu0 0.0
    %1873 = vmatpush2.msra.mxu0 0.0
    %1874 = vmatprep.subr.mxu0 0.0
    %1875 = vmatpush2.msra.mxu0 0.0
    %1876 = vmatprep.subr.mxu0 0.0
    %1877 = vmatpush2.msra.mxu0 0.0
    %1878 = vmatprep.subr.mxu0 0.0
    %1879 = vmatpush2.msra.mxu0 0.0
    %1880 = vmatprep.subr.mxu0 0.0
    %1881 = vmatpush2.msra.mxu0 0.0
    %1882 = vmatprep.subr.mxu0 0.0
    %1883 = vmatpush2.msra.mxu0 0.0
    %1884 = vmatprep.subr.mxu0 0.0
    %1885 = vmatpush2.msra.mxu0 0.0
    %1886 = vmatprep.subr.mxu0 0.0
    %1887 = vmatpush2.msra.mxu0 0.0
    %1888 = vmatprep.subr.mxu0 0.0
    %1889 = vmatpush2.msra.mxu0 0.0
    %1890 = vmatprep.subr.mxu0 0.0
    %1891 = vmatpush2.msra.mxu0 0.0
    %1892 = vmatprep.subr.mxu0 0.0
    %1893 = vmatpush2.msra.mxu0 0.0
    %1894 = vmatprep.subr.mxu0 %v1710
    %1895 = vmatpush2.msra.mxu0 %v1716
    %1896 = vmatprep.subr.mxu0 %v1709
    %1897 = vmatpush2.msra.mxu0 %v1715
    %1898 = vmatprep.mubr.f32.mxu0 %v1743
    %1899 = vmatmul.mubr.f32.gmra.mxu0 %v1735
    %v1900 = vpop.f32.mrf.mxu0
    %v1901 = vadd.f32 0.0, %v1900
    %v1902 = vpop.f32.mrf.mxu0
    %v1903 = vadd.f32 0.0, %v1902
    %1904 = vmatprep.mubr.f32.mxu0 %v1746
    %1905 = vmatmul.mubr.f32.gmra.mxu0 %v1737
    %v1906 = vpop.f32.mrf.mxu0
    %v1907 = vadd.f32 0.0, %v1906
    %v1908 = vpop.f32.mrf.mxu0
    %v1909 = vadd.f32 0.0, %v1908
    %1910 = vmatprep.mubr.f32.mxu0 %v1749
    %1911 = vmatmul.mubr.f32.gmra.mxu0 %v1739
    %v1912 = vpop.f32.mrf.mxu0
    %v1913 = vadd.f32 0.0, %v1912
    %v1914 = vpop.f32.mrf.mxu0
    %v1915 = vadd.f32 0.0, %v1914
    %1916 = vdwg.mxu0
    %1917 = vmatprep.subr.mxu0 %v1696
    %1918 = vmatpush1.msra.mxu0 %v1702
    %1919 = vmatprep.subr.mxu0 %v1695
    %1920 = vmatpush1.msra.mxu0 %v1701
    %1921 = vmatprep.subr.mxu0 %v1694
    %1922 = vmatpush1.msra.mxu0 %v1700
    %1923 = vmatprep.subr.mxu0 %v1693
    %1924 = vmatpush1.msra.mxu0 %v1699
    %1925 = vmatprep.subr.mxu0 %v1572
    %1926 = vmatpush1.msra.mxu0 %v1578
    %1927 = vmatprep.subr.mxu0 %v1571
    %1928 = vmatpush1.msra.mxu0 %v1577
    %1929 = vmatprep.subr.mxu0 %v1570
    %1930 = vmatpush1.msra.mxu0 %v1576
    %1931 = vmatprep.subr.mxu0 %v1569
    %1932 = vmatpush1.msra.mxu0 %v1575
    %1933 = vmatprep.subr.mxu0 %v1568
    %1934 = vmatpush1.msra.mxu0 %v1574
    %1935 = vmatprep.subr.mxu0 %v1567
    %1936 = vmatpush1.msra.mxu0 %v1573
    %1937 = vmatprep.subr.mxu0 %v1481
    %1938 = vmatpush1.msra.mxu0 %v1480
    %1939 = vmatprep.subr.mxu0 %v1474
    %1940 = vmatpush1.msra.mxu0 %v1473
    %1941 = vmatprep.subr.mxu0 %v1467
    %1942 = vmatpush1.msra.mxu0 %v1466
    %1943 = vmatprep.subr.mxu0 %v1460
    %1944 = vmatpush1.msra.mxu0 %v1459
    %1945 = vmatprep.subr.mxu0 %v1453
    %1946 = vmatpush1.msra.mxu0 %v1452
    %1947 = vmatprep.subr.mxu0 %v1446
    %1948 = vmatpush1.msra.mxu0 %v1445
    %1949 = vmatprep.subr.mxu0 0.0
    %1950 = vmatpush2.msra.mxu0 0.0
    %1951 = vmatprep.subr.mxu0 0.0
    %1952 = vmatpush2.msra.mxu0 0.0
    %1953 = vmatprep.subr.mxu0 0.0
    %1954 = vmatpush2.msra.mxu0 0.0
    %1955 = vmatprep.subr.mxu0 0.0
    %1956 = vmatpush2.msra.mxu0 0.0
    %1957 = vmatprep.subr.mxu0 0.0
    %1958 = vmatpush2.msra.mxu0 0.0
    %1959 = vmatprep.subr.mxu0 0.0
    %1960 = vmatpush2.msra.mxu0 0.0
    %1961 = vmatprep.subr.mxu0 0.0
    %1962 = vmatpush2.msra.mxu0 0.0
    %1963 = vmatprep.subr.mxu0 0.0
    %1964 = vmatpush2.msra.mxu0 0.0
    %1965 = vmatprep.subr.mxu0 0.0
    %1966 = vmatpush2.msra.mxu0 0.0
    %1967 = vmatprep.subr.mxu0 0.0
    %1968 = vmatpush2.msra.mxu0 0.0
    %1969 = vmatprep.subr.mxu0 0.0
    %1970 = vmatpush2.msra.mxu0 0.0
    %1971 = vmatprep.subr.mxu0 0.0
    %1972 = vmatpush2.msra.mxu0 0.0
    %1973 = vmatprep.subr.mxu0 0.0
    %1974 = vmatpush2.msra.mxu0 0.0
    %1975 = vmatprep.subr.mxu0 0.0
    %1976 = vmatpush2.msra.mxu0 0.0
    %1977 = vmatprep.subr.mxu0 %v1698
    %1978 = vmatpush2.msra.mxu0 %v1704
    %1979 = vmatprep.subr.mxu0 %v1697
    %1980 = vmatpush2.msra.mxu0 %v1703
    %1981 = vmatprep.mubr.f32.mxu0 %v1743
    %1982 = vmatmul.mubr.f32.gmra.mxu0 %v1735
    %v1983 = vpop.f32.mrf.mxu0
    %v1984 = vadd.f32 0.0, %v1983
    %v1985 = vpop.f32.mrf.mxu0
    %v1986 = vadd.f32 0.0, %v1985
    %1987 = vmatprep.mubr.f32.mxu0 %v1746
    %1988 = vmatmul.mubr.f32.gmra.mxu0 %v1737
    %v1989 = vpop.f32.mrf.mxu0
    %v1990 = vadd.f32 0.0, %v1989
    %v1991 = vpop.f32.mrf.mxu0
    %v1992 = vadd.f32 0.0, %v1991
    %1993 = vmatprep.mubr.f32.mxu0 %v1749
    %1994 = vmatmul.mubr.f32.gmra.mxu0 %v1739
    %v1995 = vpop.f32.mrf.mxu0
    %v1996 = vadd.f32 0.0, %v1995
    %v1997 = vpop.f32.mrf.mxu0
    %v1998 = vadd.f32 0.0, %v1997
    %1999 = vdwg.mxu0
    %2000 = vmatprep.subr.mxu0 0.0
    %2001 = vmatpush1.msra.mxu0 %v1732
    %2002 = vmatprep.subr.mxu0 0.0
    %2003 = vmatpush1.msra.mxu0 %v1731
    %2004 = vmatprep.subr.mxu0 0.0
    %2005 = vmatpush1.msra.mxu0 %v1730
    %2006 = vmatprep.subr.mxu0 0.0
    %2007 = vmatpush1.msra.mxu0 %v1729
    %2008 = vmatprep.subr.mxu0 0.0
    %2009 = vmatpush1.msra.mxu0 %v1608
    %2010 = vmatprep.subr.mxu0 0.0
    %2011 = vmatpush1.msra.mxu0 %v1607
    %2012 = vmatprep.subr.mxu0 0.0
    %2013 = vmatpush1.msra.mxu0 %v1606
    %2014 = vmatprep.subr.mxu0 0.0
    %2015 = vmatpush1.msra.mxu0 %v1605
    %2016 = vmatprep.subr.mxu0 0.0
    %2017 = vmatpush1.msra.mxu0 %v1604
    %2018 = vmatprep.subr.mxu0 0.0
    %2019 = vmatpush1.msra.mxu0 %v1603
    %2020 = vmatprep.subr.mxu0 0.0
    %2021 = vmatpush1.msra.mxu0 %v1482
    %2022 = vmatprep.subr.mxu0 0.0
    %2023 = vmatpush1.msra.mxu0 %v1475
    %2024 = vmatprep.subr.mxu0 0.0
    %2025 = vmatpush1.msra.mxu0 %v1468
    %2026 = vmatprep.subr.mxu0 0.0
    %2027 = vmatpush1.msra.mxu0 %v1461
    %2028 = vmatprep.subr.mxu0 0.0
    %2029 = vmatpush1.msra.mxu0 %v1454
    %2030 = vmatprep.subr.mxu0 0.0
    %2031 = vmatpush1.msra.mxu0 %v1447
    %2032 = vmatprep.subr.mxu0 0.0
    %2033 = vmatpush2.msra.mxu0 0.0
    %2034 = vmatprep.subr.mxu0 0.0
    %2035 = vmatpush2.msra.mxu0 0.0
    %2036 = vmatprep.subr.mxu0 0.0
    %2037 = vmatpush2.msra.mxu0 0.0
    %2038 = vmatprep.subr.mxu0 0.0
    %2039 = vmatpush2.msra.mxu0 0.0
    %2040 = vmatprep.subr.mxu0 0.0
    %2041 = vmatpush2.msra.mxu0 0.0
    %2042 = vmatprep.subr.mxu0 0.0
    %2043 = vmatpush2.msra.mxu0 0.0
    %2044 = vmatprep.subr.mxu0 0.0
    %2045 = vmatpush2.msra.mxu0 0.0
    %2046 = vmatprep.subr.mxu0 0.0
    %2047 = vmatpush2.msra.mxu0 0.0
    %2048 = vmatprep.subr.mxu0 0.0
    %2049 = vmatpush2.msra.mxu0 0.0
    %2050 = vmatprep.subr.mxu0 0.0
    %2051 = vmatpush2.msra.mxu0 0.0
    %2052 = vmatprep.subr.mxu0 0.0
    %2053 = vmatpush2.msra.mxu0 0.0
    %2054 = vmatprep.subr.mxu0 0.0
    %2055 = vmatpush2.msra.mxu0 0.0
    %2056 = vmatprep.subr.mxu0 0.0
    %2057 = vmatpush2.msra.mxu0 0.0
    %2058 = vmatprep.subr.mxu0 0.0
    %2059 = vmatpush2.msra.mxu0 0.0
    %2060 = vmatprep.subr.mxu0 0.0
    %2061 = vmatpush2.msra.mxu0 %v1734
    %2062 = vmatprep.subr.mxu0 0.0
    %2063 = vmatpush2.msra.mxu0 %v1733
    %2064 = vmatprep.mubr.f32.mxu0 %v1743
    %2065 = vmatmul.mubr.f32.gmra.mxu0 %v1735
    %v2066 = vpop.f32.mrf.mxu0
    %v2067 = vadd.f32 0.0, %v2066
    %v2068 = vpop.f32.mrf.mxu0
    %2069 = vmatprep.mubr.f32.mxu0 %v1746
    %2070 = vmatmul.mubr.f32.gmra.mxu0 %v1737
    %v2071 = vpop.f32.mrf.mxu0
    %v2072 = vadd.f32 0.0, %v2071
    %v2073 = vpop.f32.mrf.mxu0
    %2074 = vmatprep.mubr.f32.mxu0 %v1749
    %2075 = vmatmul.mubr.f32.gmra.mxu0 %v1739
    %v2076 = vpop.f32.mrf.mxu0
    %v2077 = vadd.f32 0.0, %v2076
    %v2078 = vpop.f32.mrf.mxu0
    %2079 = vdwg.mxu0
    %s2080 = scalar_lea.vmem %s2, 48
    %v2081 = vld [vmem:[%s2080] sm:$0xff]
    %v2082 = vld [vmem:[%s2080 + $0x8] sm:$0xff]
    %v2083 = vld [vmem:[%s2080 + $0x10] sm:$0xff]
    %v2084 = vld [vmem:[%s2080 + $0x18] sm:$0xff]
    %v2085 = vld [vmem:[%s2080 + $0x20] sm:$0xf]
    %v2086 = vld [vmem:[%s2080 + $0x28] sm:$0xf]
    %v2088 = vsel %vm1741, %v2082, 0
    %v2091 = vsel %vm1741, %v2084, 0
    %v2094 = vsel %vm1741, %v2086, 0
    %2096 = vmatprep.subr.mxu0 %v1720
    %2097 = vmatpush1.msra.mxu0 %v1726
    %2098 = vmatprep.subr.mxu0 %v1719
    %2099 = vmatpush1.msra.mxu0 %v1725
    %2100 = vmatprep.subr.mxu0 %v1718
    %2101 = vmatpush1.msra.mxu0 %v1724
    %2102 = vmatprep.subr.mxu0 %v1717
    %2103 = vmatpush1.msra.mxu0 %v1723
    %2104 = vmatprep.subr.mxu0 %v1596
    %2105 = vmatpush1.msra.mxu0 %v1602
    %2106 = vmatprep.subr.mxu0 %v1595
    %2107 = vmatpush1.msra.mxu0 %v1601
    %2108 = vmatprep.subr.mxu0 %v1594
    %2109 = vmatpush1.msra.mxu0 %v1600
    %2110 = vmatprep.subr.mxu0 %v1593
    %2111 = vmatpush1.msra.mxu0 %v1599
    %2112 = vmatprep.subr.mxu0 %v1592
    %2113 = vmatpush1.msra.mxu0 %v1598
    %2114 = vmatprep.subr.mxu0 %v1591
    %2115 = vmatpush1.msra.mxu0 %v1597
    %2116 = vmatprep.subr.mxu0 %v1477
    %2117 = vmatpush1.msra.mxu0 %v1476
    %2118 = vmatprep.subr.mxu0 %v1470
    %2119 = vmatpush1.msra.mxu0 %v1469
    %2120 = vmatprep.subr.mxu0 %v1463
    %2121 = vmatpush1.msra.mxu0 %v1462
    %2122 = vmatprep.subr.mxu0 %v1456
    %2123 = vmatpush1.msra.mxu0 %v1455
    %2124 = vmatprep.subr.mxu0 %v1449
    %2125 = vmatpush1.msra.mxu0 %v1448
    %2126 = vmatprep.subr.mxu0 %v1442
    %2127 = vmatpush1.msra.mxu0 %v1441
    %2128 = vmatprep.subr.mxu0 0.0
    %2129 = vmatpush2.msra.mxu0 0.0
    %2130 = vmatprep.subr.mxu0 0.0
    %2131 = vmatpush2.msra.mxu0 0.0
    %2132 = vmatprep.subr.mxu0 0.0
    %2133 = vmatpush2.msra.mxu0 0.0
    %2134 = vmatprep.subr.mxu0 0.0
    %2135 = vmatpush2.msra.mxu0 0.0
    %2136 = vmatprep.subr.mxu0 0.0
    %2137 = vmatpush2.msra.mxu0 0.0
    %2138 = vmatprep.subr.mxu0 0.0
    %2139 = vmatpush2.msra.mxu0 0.0
    %2140 = vmatprep.subr.mxu0 0.0
    %2141 = vmatpush2.msra.mxu0 0.0
    %2142 = vmatprep.subr.mxu0 0.0
    %2143 = vmatpush2.msra.mxu0 0.0
    %2144 = vmatprep.subr.mxu0 0.0
    %2145 = vmatpush2.msra.mxu0 0.0
    %2146 = vmatprep.subr.mxu0 0.0
    %2147 = vmatpush2.msra.mxu0 0.0
    %2148 = vmatprep.subr.mxu0 0.0
    %2149 = vmatpush2.msra.mxu0 0.0
    %2150 = vmatprep.subr.mxu0 0.0
    %2151 = vmatpush2.msra.mxu0 0.0
    %2152 = vmatprep.subr.mxu0 0.0
    %2153 = vmatpush2.msra.mxu0 0.0
    %2154 = vmatprep.subr.mxu0 0.0
    %2155 = vmatpush2.msra.mxu0 0.0
    %2156 = vmatprep.subr.mxu0 %v1722
    %2157 = vmatpush2.msra.mxu0 %v1728
    %2158 = vmatprep.subr.mxu0 %v1721
    %2159 = vmatpush2.msra.mxu0 %v1727
    %2160 = vmatprep.mubr.f32.mxu0 %v2088
    %2161 = vmatmul.mubr.f32.gmra.mxu0 %v2081
    %v2162 = vpop.f32.mrf.mxu0
    %v2163 = vadd.f32 0.0, %v2162
    %v2164 = vpop.f32.mrf.mxu0
    %v2165 = vadd.f32 0.0, %v2164
    %2166 = vmatprep.mubr.f32.mxu0 %v2091
    %2167 = vmatmul.mubr.f32.gmra.mxu0 %v2083
    %v2168 = vpop.f32.mrf.mxu0
    %v2169 = vadd.f32 0.0, %v2168
    %v2170 = vpop.f32.mrf.mxu0
    %v2171 = vadd.f32 0.0, %v2170
    %2172 = vmatprep.mubr.f32.mxu0 %v2094
    %2173 = vmatmul.mubr.f32.gmra.mxu0 %v2085
    %v2174 = vpop.f32.mrf.mxu0
    %v2175 = vadd.f32 0.0, %v2174
    %v2176 = vpop.f32.mrf.mxu0
    %v2177 = vadd.f32 0.0, %v2176
    %2178 = vdwg.mxu0
    %2179 = vmatprep.subr.mxu0 %v1708
    %2180 = vmatpush1.msra.mxu0 %v1714
    %2181 = vmatprep.subr.mxu0 %v1707
    %2182 = vmatpush1.msra.mxu0 %v1713
    %2183 = vmatprep.subr.mxu0 %v1706
    %2184 = vmatpush1.msra.mxu0 %v1712
    %2185 = vmatprep.subr.mxu0 %v1705
    %2186 = vmatpush1.msra.mxu0 %v1711
    %2187 = vmatprep.subr.mxu0 %v1584
    %2188 = vmatpush1.msra.mxu0 %v1590
    %2189 = vmatprep.subr.mxu0 %v1583
    %2190 = vmatpush1.msra.mxu0 %v1589
    %2191 = vmatprep.subr.mxu0 %v1582
    %2192 = vmatpush1.msra.mxu0 %v1588
    %2193 = vmatprep.subr.mxu0 %v1581
    %2194 = vmatpush1.msra.mxu0 %v1587
    %2195 = vmatprep.subr.mxu0 %v1580
    %2196 = vmatpush1.msra.mxu0 %v1586
    %2197 = vmatprep.subr.mxu0 %v1579
    %2198 = vmatpush1.msra.mxu0 %v1585
    %2199 = vmatprep.subr.mxu0 %v1479
    %2200 = vmatpush1.msra.mxu0 %v1478
    %2201 = vmatprep.subr.mxu0 %v1472
    %2202 = vmatpush1.msra.mxu0 %v1471
    %2203 = vmatprep.subr.mxu0 %v1465
    %2204 = vmatpush1.msra.mxu0 %v1464
    %2205 = vmatprep.subr.mxu0 %v1458
    %2206 = vmatpush1.msra.mxu0 %v1457
    %2207 = vmatprep.subr.mxu0 %v1451
    %2208 = vmatpush1.msra.mxu0 %v1450
    %2209 = vmatprep.subr.mxu0 %v1444
    %2210 = vmatpush1.msra.mxu0 %v1443
    %2211 = vmatprep.subr.mxu0 0.0
    %2212 = vmatpush2.msra.mxu0 0.0
    %2213 = vmatprep.subr.mxu0 0.0
    %2214 = vmatpush2.msra.mxu0 0.0
    %2215 = vmatprep.subr.mxu0 0.0
    %2216 = vmatpush2.msra.mxu0 0.0
    %2217 = vmatprep.subr.mxu0 0.0
    %2218 = vmatpush2.msra.mxu0 0.0
    %2219 = vmatprep.subr.mxu0 0.0
    %2220 = vmatpush2.msra.mxu0 0.0
    %2221 = vmatprep.subr.mxu0 0.0
    %2222 = vmatpush2.msra.mxu0 0.0
    %2223 = vmatprep.subr.mxu0 0.0
    %2224 = vmatpush2.msra.mxu0 0.0
    %2225 = vmatprep.subr.mxu0 0.0
    %2226 = vmatpush2.msra.mxu0 0.0
    %2227 = vmatprep.subr.mxu0 0.0
    %2228 = vmatpush2.msra.mxu0 0.0
    %2229 = vmatprep.subr.mxu0 0.0
    %2230 = vmatpush2.msra.mxu0 0.0
    %2231 = vmatprep.subr.mxu0 0.0
    %2232 = vmatpush2.msra.mxu0 0.0
    %2233 = vmatprep.subr.mxu0 0.0
    %2234 = vmatpush2.msra.mxu0 0.0
    %2235 = vmatprep.subr.mxu0 0.0
    %2236 = vmatpush2.msra.mxu0 0.0
    %2237 = vmatprep.subr.mxu0 0.0
    %2238 = vmatpush2.msra.mxu0 0.0
    %2239 = vmatprep.subr.mxu0 %v1710
    %2240 = vmatpush2.msra.mxu0 %v1716
    %2241 = vmatprep.subr.mxu0 %v1709
    %2242 = vmatpush2.msra.mxu0 %v1715
    %2243 = vmatprep.mubr.f32.mxu0 %v2088
    %2244 = vmatmul.mubr.f32.gmra.mxu0 %v2081
    %v2245 = vpop.f32.mrf.mxu0
    %v2246 = vadd.f32 0.0, %v2245
    %v2247 = vpop.f32.mrf.mxu0
    %v2248 = vadd.f32 0.0, %v2247
    %2249 = vmatprep.mubr.f32.mxu0 %v2091
    %2250 = vmatmul.mubr.f32.gmra.mxu0 %v2083
    %v2251 = vpop.f32.mrf.mxu0
    %v2252 = vadd.f32 0.0, %v2251
    %v2253 = vpop.f32.mrf.mxu0
    %v2254 = vadd.f32 0.0, %v2253
    %2255 = vmatprep.mubr.f32.mxu0 %v2094
    %2256 = vmatmul.mubr.f32.gmra.mxu0 %v2085
    %v2257 = vpop.f32.mrf.mxu0
    %v2258 = vadd.f32 0.0, %v2257
    %v2259 = vpop.f32.mrf.mxu0
    %v2260 = vadd.f32 0.0, %v2259
    %2261 = vdwg.mxu0
    %2262 = vmatprep.subr.mxu0 %v1696
    %2263 = vmatpush1.msra.mxu0 %v1702
    %2264 = vmatprep.subr.mxu0 %v1695
    %2265 = vmatpush1.msra.mxu0 %v1701
    %2266 = vmatprep.subr.mxu0 %v1694
    %2267 = vmatpush1.msra.mxu0 %v1700
    %2268 = vmatprep.subr.mxu0 %v1693
    %2269 = vmatpush1.msra.mxu0 %v1699
    %2270 = vmatprep.subr.mxu0 %v1572
    %2271 = vmatpush1.msra.mxu0 %v1578
    %2272 = vmatprep.subr.mxu0 %v1571
    %2273 = vmatpush1.msra.mxu0 %v1577
    %2274 = vmatprep.subr.mxu0 %v1570
    %2275 = vmatpush1.msra.mxu0 %v1576
    %2276 = vmatprep.subr.mxu0 %v1569
    %2277 = vmatpush1.msra.mxu0 %v1575
    %2278 = vmatprep.subr.mxu0 %v1568
    %2279 = vmatpush1.msra.mxu0 %v1574
    %2280 = vmatprep.subr.mxu0 %v1567
    %2281 = vmatpush1.msra.mxu0 %v1573
    %2282 = vmatprep.subr.mxu0 %v1481
    %2283 = vmatpush1.msra.mxu0 %v1480
    %2284 = vmatprep.subr.mxu0 %v1474
    %2285 = vmatpush1.msra.mxu0 %v1473
    %2286 = vmatprep.subr.mxu0 %v1467
    %2287 = vmatpush1.msra.mxu0 %v1466
    %2288 = vmatprep.subr.mxu0 %v1460
    %2289 = vmatpush1.msra.mxu0 %v1459
    %2290 = vmatprep.subr.mxu0 %v1453
    %2291 = vmatpush1.msra.mxu0 %v1452
    %2292 = vmatprep.subr.mxu0 %v1446
    %2293 = vmatpush1.msra.mxu0 %v1445
    %2294 = vmatprep.subr.mxu0 0.0
    %2295 = vmatpush2.msra.mxu0 0.0
    %2296 = vmatprep.subr.mxu0 0.0
    %2297 = vmatpush2.msra.mxu0 0.0
    %2298 = vmatprep.subr.mxu0 0.0
    %2299 = vmatpush2.msra.mxu0 0.0
    %2300 = vmatprep.subr.mxu0 0.0
    %2301 = vmatpush2.msra.mxu0 0.0
    %2302 = vmatprep.subr.mxu0 0.0
    %2303 = vmatpush2.msra.mxu0 0.0
    %2304 = vmatprep.subr.mxu0 0.0
    %2305 = vmatpush2.msra.mxu0 0.0
    %2306 = vmatprep.subr.mxu0 0.0
    %2307 = vmatpush2.msra.mxu0 0.0
    %2308 = vmatprep.subr.mxu0 0.0
    %2309 = vmatpush2.msra.mxu0 0.0
    %2310 = vmatprep.subr.mxu0 0.0
    %2311 = vmatpush2.msra.mxu0 0.0
    %2312 = vmatprep.subr.mxu0 0.0
    %2313 = vmatpush2.msra.mxu0 0.0
    %2314 = vmatprep.subr.mxu0 0.0
    %2315 = vmatpush2.msra.mxu0 0.0
    %2316 = vmatprep.subr.mxu0 0.0
    %2317 = vmatpush2.msra.mxu0 0.0
    %2318 = vmatprep.subr.mxu0 0.0
    %2319 = vmatpush2.msra.mxu0 0.0
    %2320 = vmatprep.subr.mxu0 0.0
    %2321 = vmatpush2.msra.mxu0 0.0
    %2322 = vmatprep.subr.mxu0 %v1698
    %2323 = vmatpush2.msra.mxu0 %v1704
    %2324 = vmatprep.subr.mxu0 %v1697
    %2325 = vmatpush2.msra.mxu0 %v1703
    %2326 = vmatprep.mubr.f32.mxu0 %v2088
    %2327 = vmatmul.mubr.f32.gmra.mxu0 %v2081
    %v2328 = vpop.f32.mrf.mxu0
    %v2329 = vadd.f32 0.0, %v2328
    %v2330 = vpop.f32.mrf.mxu0
    %v2331 = vadd.f32 0.0, %v2330
    %2332 = vmatprep.mubr.f32.mxu0 %v2091
    %2333 = vmatmul.mubr.f32.gmra.mxu0 %v2083
    %v2334 = vpop.f32.mrf.mxu0
    %v2335 = vadd.f32 0.0, %v2334
    %v2336 = vpop.f32.mrf.mxu0
    %v2337 = vadd.f32 0.0, %v2336
    %2338 = vmatprep.mubr.f32.mxu0 %v2094
    %2339 = vmatmul.mubr.f32.gmra.mxu0 %v2085
    %v2340 = vpop.f32.mrf.mxu0
    %v2341 = vadd.f32 0.0, %v2340
    %v2342 = vpop.f32.mrf.mxu0
    %v2343 = vadd.f32 0.0, %v2342
    %2344 = vdwg.mxu0
    %2345 = vmatprep.subr.mxu0 0.0
    %2346 = vmatpush1.msra.mxu0 %v1732
    %2347 = vmatprep.subr.mxu0 0.0
    %2348 = vmatpush1.msra.mxu0 %v1731
    %2349 = vmatprep.subr.mxu0 0.0
    %2350 = vmatpush1.msra.mxu0 %v1730
    %2351 = vmatprep.subr.mxu0 0.0
    %2352 = vmatpush1.msra.mxu0 %v1729
    %2353 = vmatprep.subr.mxu0 0.0
    %2354 = vmatpush1.msra.mxu0 %v1608
    %2355 = vmatprep.subr.mxu0 0.0
    %2356 = vmatpush1.msra.mxu0 %v1607
    %2357 = vmatprep.subr.mxu0 0.0
    %2358 = vmatpush1.msra.mxu0 %v1606
    %2359 = vmatprep.subr.mxu0 0.0
    %2360 = vmatpush1.msra.mxu0 %v1605
    %2361 = vmatprep.subr.mxu0 0.0
    %2362 = vmatpush1.msra.mxu0 %v1604
    %2363 = vmatprep.subr.mxu0 0.0
    %2364 = vmatpush1.msra.mxu0 %v1603
    %2365 = vmatprep.subr.mxu0 0.0
    %2366 = vmatpush1.msra.mxu0 %v1482
    %2367 = vmatprep.subr.mxu0 0.0
    %2368 = vmatpush1.msra.mxu0 %v1475
    %2369 = vmatprep.subr.mxu0 0.0
    %2370 = vmatpush1.msra.mxu0 %v1468
    %2371 = vmatprep.subr.mxu0 0.0
    %2372 = vmatpush1.msra.mxu0 %v1461
    %2373 = vmatprep.subr.mxu0 0.0
    %2374 = vmatpush1.msra.mxu0 %v1454
    %2375 = vmatprep.subr.mxu0 0.0
    %2376 = vmatpush1.msra.mxu0 %v1447
    %2377 = vmatprep.subr.mxu0 0.0
    %2378 = vmatpush2.msra.mxu0 0.0
    %2379 = vmatprep.subr.mxu0 0.0
    %2380 = vmatpush2.msra.mxu0 0.0
    %2381 = vmatprep.subr.mxu0 0.0
    %2382 = vmatpush2.msra.mxu0 0.0
    %2383 = vmatprep.subr.mxu0 0.0
    %2384 = vmatpush2.msra.mxu0 0.0
    %2385 = vmatprep.subr.mxu0 0.0
    %2386 = vmatpush2.msra.mxu0 0.0
    %2387 = vmatprep.subr.mxu0 0.0
    %2388 = vmatpush2.msra.mxu0 0.0
    %2389 = vmatprep.subr.mxu0 0.0
    %2390 = vmatpush2.msra.mxu0 0.0
    %2391 = vmatprep.subr.mxu0 0.0
    %2392 = vmatpush2.msra.mxu0 0.0
    %2393 = vmatprep.subr.mxu0 0.0
    %2394 = vmatpush2.msra.mxu0 0.0
    %2395 = vmatprep.subr.mxu0 0.0
    %2396 = vmatpush2.msra.mxu0 0.0
    %2397 = vmatprep.subr.mxu0 0.0
    %2398 = vmatpush2.msra.mxu0 0.0
    %2399 = vmatprep.subr.mxu0 0.0
    %2400 = vmatpush2.msra.mxu0 0.0
    %2401 = vmatprep.subr.mxu0 0.0
    %2402 = vmatpush2.msra.mxu0 0.0
    %2403 = vmatprep.subr.mxu0 0.0
    %2404 = vmatpush2.msra.mxu0 0.0
    %2405 = vmatprep.subr.mxu0 0.0
    %2406 = vmatpush2.msra.mxu0 %v1734
    %2407 = vmatprep.subr.mxu0 0.0
    %2408 = vmatpush2.msra.mxu0 %v1733
    %2409 = vmatprep.mubr.f32.mxu0 %v2088
    %2410 = vmatmul.mubr.f32.gmra.mxu0 %v2081
    %v2411 = vpop.f32.mrf.mxu0
    %v2412 = vadd.f32 0.0, %v2411
    %v2413 = vpop.f32.mrf.mxu0
    %2414 = vmatprep.mubr.f32.mxu0 %v2091
    %2415 = vmatmul.mubr.f32.gmra.mxu0 %v2083
    %v2416 = vpop.f32.mrf.mxu0
    %v2417 = vadd.f32 0.0, %v2416
    %v2418 = vpop.f32.mrf.mxu0
    %2419 = vmatprep.mubr.f32.mxu0 %v2094
    %2420 = vmatmul.mubr.f32.gmra.mxu0 %v2085
    %v2421 = vpop.f32.mrf.mxu0
    %v2422 = vadd.f32 0.0, %v2421
    %v2423 = vpop.f32.mrf.mxu0
    %2424 = vdwg.mxu0
    %v2425 = vmax.f32 %v1818, %v2163
    %v2426 = vmax.f32 %v1820, %v2165
    %v2427 = vmax.f32 %v1901, %v2246
    %v2428 = vmax.f32 %v1903, %v2248
    %v2429 = vmax.f32 %v1984, %v2329
    %v2430 = vmax.f32 %v1986, %v2331
    %v2431 = vmax.f32 %v2067, %v2412
    %v2432 = vmax.f32 %v1824, %v2169
    %v2433 = vmax.f32 %v1826, %v2171
    %v2434 = vmax.f32 %v1907, %v2252
    %v2435 = vmax.f32 %v1909, %v2254
    %v2436 = vmax.f32 %v1990, %v2335
    %v2437 = vmax.f32 %v1992, %v2337
    %v2438 = vmax.f32 %v2072, %v2417
    %v2439 = vmax.f32 %v1830, %v2175
    %v2440 = vmax.f32 %v1832, %v2177
    %v2441 = vmax.f32 %v1913, %v2258
    %v2442 = vmax.f32 %v1915, %v2260
    %v2443 = vmax.f32 %v1996, %v2341
    %v2444 = vmax.f32 %v1998, %v2343
    %v2445 = vmax.f32 %v2077, %v2422
    %2446 = vrot.lane.b32.xlu0 %v2425, 126
    %v2447 = vpop.permute.xlu0 %2446
    %2448 = vrot.lane.b32.xlu0 %v2432, 126
    %v2449 = vpop.permute.xlu0 %2448
    %2450 = vrot.lane.b32.xlu0 %v2439, 126
    %v2451 = vpop.permute.xlu0 %2450
    %2452 = vrot.lane.b32.xlu0 %v2426, 126
    %v2453 = vpop.permute.xlu0 %2452
    %2454 = vrot.lane.b32.xlu0 %v2433, 126
    %v2455 = vpop.permute.xlu0 %2454
    %2456 = vrot.lane.b32.xlu0 %v2440, 126
    %v2457 = vpop.permute.xlu0 %2456
    %2458 = vrot.lane.b32.xlu0 %v2427, 126
    %v2459 = vpop.permute.xlu0 %2458
    %2460 = vrot.lane.b32.xlu0 %v2434, 126
    %v2461 = vpop.permute.xlu0 %2460
    %2462 = vrot.lane.b32.xlu0 %v2441, 126
    %v2463 = vpop.permute.xlu0 %2462
    %2464 = vrot.lane.b32.xlu0 %v2428, 126
    %v2465 = vpop.permute.xlu0 %2464
    %2466 = vrot.lane.b32.xlu0 %v2435, 126
    %v2467 = vpop.permute.xlu0 %2466
    %2468 = vrot.lane.b32.xlu0 %v2442, 126
    %v2469 = vpop.permute.xlu0 %2468
    %2470 = vrot.lane.b32.xlu0 %v2429, 126
    %v2471 = vpop.permute.xlu0 %2470
    %2472 = vrot.lane.b32.xlu0 %v2436, 126
    %v2473 = vpop.permute.xlu0 %2472
    %2474 = vrot.lane.b32.xlu0 %v2443, 126
    %v2475 = vpop.permute.xlu0 %2474
    %2476 = vrot.lane.b32.xlu0 %v2430, 126
    %v2477 = vpop.permute.xlu0 %2476
    %2478 = vrot.lane.b32.xlu0 %v2437, 126
    %v2479 = vpop.permute.xlu0 %2478
    %2480 = vrot.lane.b32.xlu0 %v2444, 126
    %v2481 = vpop.permute.xlu0 %2480
    %2482 = vrot.lane.b32.xlu0 %v2431, 126
    %v2483 = vpop.permute.xlu0 %2482
    %2484 = vrot.lane.b32.xlu0 %v2438, 126
    %v2485 = vpop.permute.xlu0 %2484
    %2486 = vrot.lane.b32.xlu0 %v2445, 126
    %v2487 = vpop.permute.xlu0 %2486
    %v2488 = vsel %vm189, %v2477, %v2483
    %v2489 = vsel %vm189, %v2479, %v2485
    %v2490 = vsel %vm189, %v2481, %v2487
    %v2491 = vsel %vm189, %v2471, %v2477
    %v2492 = vsel %vm189, %v2473, %v2479
    %v2493 = vsel %vm189, %v2475, %v2481
    %v2494 = vsel %vm189, %v2465, %v2471
    %v2495 = vsel %vm189, %v2467, %v2473
    %v2496 = vsel %vm189, %v2469, %v2475
    %v2497 = vsel %vm189, %v2459, %v2465
    %v2498 = vsel %vm189, %v2461, %v2467
    %v2499 = vsel %vm189, %v2463, %v2469
    %v2500 = vsel %vm189, %v2453, %v2459
    %v2501 = vsel %vm189, %v2455, %v2461
    %v2502 = vsel %vm189, %v2457, %v2463
    %v2503 = vsel %vm189, %v2447, %v2453
    %v2504 = vsel %vm189, %v2449, %v2455
    %v2505 = vsel %vm189, %v2451, %v2457
    %v2506 = vsel %vm189, %v2483, %v2447
    %v2507 = vsel %vm189, %v2485, %v2449
    %v2508 = vsel %vm189, %v2487, %v2451
    %v2509 = vmax.f32 %v2425, %v2503
    %v2510 = vmax.f32 %v2426, %v2500
    %v2511 = vmax.f32 %v2427, %v2497
    %v2512 = vmax.f32 %v2428, %v2494
    %v2513 = vmax.f32 %v2429, %v2491
    %v2514 = vmax.f32 %v2430, %v2488
    %v2515 = vmax.f32 %v2431, %v2506
    %v2516 = vmax.f32 %v2432, %v2504
    %v2517 = vmax.f32 %v2433, %v2501
    %v2518 = vmax.f32 %v2434, %v2498
    %v2519 = vmax.f32 %v2435, %v2495
    %v2520 = vmax.f32 %v2436, %v2492
    %v2521 = vmax.f32 %v2437, %v2489
    %v2522 = vmax.f32 %v2438, %v2507
    %v2523 = vmax.f32 %v2439, %v2505
    %v2524 = vmax.f32 %v2440, %v2502
    %v2525 = vmax.f32 %v2441, %v2499
    %v2526 = vmax.f32 %v2442, %v2496
    %v2527 = vmax.f32 %v2443, %v2493
    %v2528 = vmax.f32 %v2444, %v2490
    %v2529 = vmax.f32 %v2445, %v2508
    %v2530 = vmax.f32 %v2509, 0.0
    %v2531 = vmax.f32 %v2510, 0.0
    %v2532 = vmax.f32 %v2511, 0.0
    %v2533 = vmax.f32 %v2512, 0.0
    %v2534 = vmax.f32 %v2513, 0.0
    %v2535 = vmax.f32 %v2514, 0.0
    %v2536 = vmax.f32 %v2515, 0.0
    %v2537 = vmax.f32 %v2516, 0.0
    %v2538 = vmax.f32 %v2517, 0.0
    %v2539 = vmax.f32 %v2518, 0.0
    %v2540 = vmax.f32 %v2519, 0.0
    %v2541 = vmax.f32 %v2520, 0.0
    %v2542 = vmax.f32 %v2521, 0.0
    %v2543 = vmax.f32 %v2522, 0.0
    %v2544 = vmax.f32 %v2523, 0.0
    %v2545 = vmax.f32 %v2524, 0.0
    %v2546 = vmax.f32 %v2525, 0.0
    %v2547 = vmax.f32 %v2526, 0.0
    %v2548 = vmax.f32 %v2527, 0.0
    %v2549 = vmax.f32 %v2528, 0.0
    %v2550 = vmax.f32 %v2529, 0.0
    %2551 = vrot.lane.b32.xlu0 %v2530, 124
    %v2552 = vpop.permute.xlu0 %2551
    %2553 = vrot.lane.b32.xlu0 %v2537, 124
    %v2554 = vpop.permute.xlu0 %2553
    %2555 = vrot.lane.b32.xlu0 %v2544, 124
    %v2556 = vpop.permute.xlu0 %2555
    %2557 = vrot.lane.b32.xlu0 %v2531, 124
    %v2558 = vpop.permute.xlu0 %2557
    %2559 = vrot.lane.b32.xlu0 %v2538, 124
    %v2560 = vpop.permute.xlu0 %2559
    %2561 = vrot.lane.b32.xlu0 %v2545, 124
    %v2562 = vpop.permute.xlu0 %2561
    %2563 = vrot.lane.b32.xlu0 %v2532, 124
    %v2564 = vpop.permute.xlu0 %2563
    %2565 = vrot.lane.b32.xlu0 %v2539, 124
    %v2566 = vpop.permute.xlu0 %2565
    %2567 = vrot.lane.b32.xlu0 %v2546, 124
    %v2568 = vpop.permute.xlu0 %2567
    %2569 = vrot.lane.b32.xlu0 %v2533, 124
    %v2570 = vpop.permute.xlu0 %2569
    %2571 = vrot.lane.b32.xlu0 %v2540, 124
    %v2572 = vpop.permute.xlu0 %2571
    %2573 = vrot.lane.b32.xlu0 %v2547, 124
    %v2574 = vpop.permute.xlu0 %2573
    %2575 = vrot.lane.b32.xlu0 %v2534, 124
    %v2576 = vpop.permute.xlu0 %2575
    %2577 = vrot.lane.b32.xlu0 %v2541, 124
    %v2578 = vpop.permute.xlu0 %2577
    %2579 = vrot.lane.b32.xlu0 %v2548, 124
    %v2580 = vpop.permute.xlu0 %2579
    %2581 = vrot.lane.b32.xlu0 %v2535, 124
    %v2582 = vpop.permute.xlu0 %2581
    %2583 = vrot.lane.b32.xlu0 %v2542, 124
    %v2584 = vpop.permute.xlu0 %2583
    %2585 = vrot.lane.b32.xlu0 %v2549, 124
    %v2586 = vpop.permute.xlu0 %2585
    %2587 = vrot.lane.b32.xlu0 %v2536, 124
    %v2588 = vpop.permute.xlu0 %2587
    %2589 = vrot.lane.b32.xlu0 %v2543, 124
    %v2590 = vpop.permute.xlu0 %2589
    %2591 = vrot.lane.b32.xlu0 %v2550, 124
    %v2592 = vpop.permute.xlu0 %2591
    %v2593 = vsel %vm359, %v2582, %v2588
    %v2594 = vsel %vm359, %v2584, %v2590
    %v2595 = vsel %vm359, %v2586, %v2592
    %v2596 = vsel %vm359, %v2576, %v2582
    %v2597 = vsel %vm359, %v2578, %v2584
    %v2598 = vsel %vm359, %v2580, %v2586
    %v2599 = vsel %vm359, %v2570, %v2576
    %v2600 = vsel %vm359, %v2572, %v2578
    %v2601 = vsel %vm359, %v2574, %v2580
    %v2602 = vsel %vm359, %v2564, %v2570
    %v2603 = vsel %vm359, %v2566, %v2572
    %v2604 = vsel %vm359, %v2568, %v2574
    %v2605 = vsel %vm359, %v2558, %v2564
    %v2606 = vsel %vm359, %v2560, %v2566
    %v2607 = vsel %vm359, %v2562, %v2568
    %v2608 = vsel %vm359, %v2552, %v2558
    %v2609 = vsel %vm359, %v2554, %v2560
    %v2610 = vsel %vm359, %v2556, %v2562
    %v2611 = vsel %vm359, %v2588, %v2552
    %v2612 = vsel %vm359, %v2590, %v2554
    %v2613 = vsel %vm359, %v2592, %v2556
    %2614 = vrot.lane.b32.xlu0 %v2530, 120
    %v2615 = vpop.permute.xlu0 %2614
    %2616 = vrot.lane.b32.xlu0 %v2537, 120
    %v2617 = vpop.permute.xlu0 %2616
    %2618 = vrot.lane.b32.xlu0 %v2544, 120
    %v2619 = vpop.permute.xlu0 %2618
    %2620 = vrot.lane.b32.xlu0 %v2531, 120
    %v2621 = vpop.permute.xlu0 %2620
    %2622 = vrot.lane.b32.xlu0 %v2538, 120
    %v2623 = vpop.permute.xlu0 %2622
    %2624 = vrot.lane.b32.xlu0 %v2545, 120
    %v2625 = vpop.permute.xlu0 %2624
    %2626 = vrot.lane.b32.xlu0 %v2532, 120
    %v2627 = vpop.permute.xlu0 %2626
    %2628 = vrot.lane.b32.xlu0 %v2539, 120
    %v2629 = vpop.permute.xlu0 %2628
    %2630 = vrot.lane.b32.xlu0 %v2546, 120
    %v2631 = vpop.permute.xlu0 %2630
    %2632 = vrot.lane.b32.xlu0 %v2533, 120
    %v2633 = vpop.permute.xlu0 %2632
    %2634 = vrot.lane.b32.xlu0 %v2540, 120
    %v2635 = vpop.permute.xlu0 %2634
    %2636 = vrot.lane.b32.xlu0 %v2547, 120
    %v2637 = vpop.permute.xlu0 %2636
    %2638 = vrot.lane.b32.xlu0 %v2534, 120
    %v2639 = vpop.permute.xlu0 %2638
    %2640 = vrot.lane.b32.xlu0 %v2541, 120
    %v2641 = vpop.permute.xlu0 %2640
    %2642 = vrot.lane.b32.xlu0 %v2548, 120
    %v2643 = vpop.permute.xlu0 %2642
    %2644 = vrot.lane.b32.xlu0 %v2535, 120
    %v2645 = vpop.permute.xlu0 %2644
    %2646 = vrot.lane.b32.xlu0 %v2542, 120
    %v2647 = vpop.permute.xlu0 %2646
    %2648 = vrot.lane.b32.xlu0 %v2549, 120
    %v2649 = vpop.permute.xlu0 %2648
    %2650 = vrot.lane.b32.xlu0 %v2536, 120
    %v2651 = vpop.permute.xlu0 %2650
    %2652 = vrot.lane.b32.xlu0 %v2543, 120
    %v2653 = vpop.permute.xlu0 %2652
    %2654 = vrot.lane.b32.xlu0 %v2550, 120
    %v2655 = vpop.permute.xlu0 %2654
    %vm2656 = vcmp.lt.s32.totalorder %v103, 120
    %v2657 = vsel %vm2656, %v2645, %v2651
    %v2658 = vsel %vm2656, %v2647, %v2653
    %v2659 = vsel %vm2656, %v2649, %v2655
    %v2660 = vsel %vm2656, %v2639, %v2645
    %v2661 = vsel %vm2656, %v2641, %v2647
    %v2662 = vsel %vm2656, %v2643, %v2649
    %v2663 = vsel %vm2656, %v2633, %v2639
    %v2664 = vsel %vm2656, %v2635, %v2641
    %v2665 = vsel %vm2656, %v2637, %v2643
    %v2666 = vsel %vm2656, %v2627, %v2633
    %v2667 = vsel %vm2656, %v2629, %v2635
    %v2668 = vsel %vm2656, %v2631, %v2637
    %v2669 = vsel %vm2656, %v2621, %v2627
    %v2670 = vsel %vm2656, %v2623, %v2629
    %v2671 = vsel %vm2656, %v2625, %v2631
    %v2672 = vsel %vm2656, %v2615, %v2621
    %v2673 = vsel %vm2656, %v2617, %v2623
    %v2674 = vsel %vm2656, %v2619, %v2625
    %v2675 = vsel %vm2656, %v2651, %v2615
    %v2676 = vsel %vm2656, %v2653, %v2617
    %v2677 = vsel %vm2656, %v2655, %v2619
    %v2699 = vrot.slane %v2608, 4
    %v2700 = vrot.slane %v2605, 4
    %v2701 = vrot.slane %v2602, 4
    %v2702 = vrot.slane %v2599, 4
    %v2703 = vrot.slane %v2596, 4
    %v2704 = vrot.slane %v2593, 4
    %v2705 = vrot.slane %v2611, 4
    %v2706 = vrot.slane %v2609, 4
    %v2707 = vsel %vm416, %v2699, %v2706
    %v2708 = vrot.slane %v2606, 4
    %v2709 = vsel %vm416, %v2700, %v2708
    %v2710 = vrot.slane %v2603, 4
    %v2711 = vsel %vm416, %v2701, %v2710
    %v2712 = vrot.slane %v2600, 4
    %v2713 = vsel %vm416, %v2702, %v2712
    %v2714 = vrot.slane %v2597, 4
    %v2715 = vsel %vm416, %v2703, %v2714
    %v2716 = vrot.slane %v2594, 4
    %v2717 = vsel %vm416, %v2704, %v2716
    %v2718 = vrot.slane %v2612, 4
    %v2719 = vsel %vm416, %v2705, %v2718
    %v2720 = vrot.slane %v2610, 4
    %v2721 = vsel %vm416, %v2706, %v2720
    %v2722 = vrot.slane %v2607, 4
    %v2723 = vsel %vm416, %v2708, %v2722
    %v2724 = vrot.slane %v2604, 4
    %v2725 = vsel %vm416, %v2710, %v2724
    %v2726 = vrot.slane %v2601, 4
    %v2727 = vsel %vm416, %v2712, %v2726
    %v2728 = vrot.slane %v2598, 4
    %v2729 = vsel %vm416, %v2714, %v2728
    %v2730 = vrot.slane %v2595, 4
    %v2731 = vsel %vm416, %v2716, %v2730
    %v2732 = vrot.slane %v2613, 4
    %v2733 = vsel %vm416, %v2718, %v2732
    %v2755 = vsel %vm416, %v2544, %v2699
    %v2756 = vsel %vm416, %v2545, %v2700
    %v2757 = vsel %vm416, %v2546, %v2701
    %v2758 = vsel %vm416, %v2547, %v2702
    %v2759 = vsel %vm416, %v2548, %v2703
    %v2760 = vsel %vm416, %v2549, %v2704
    %v2761 = vsel %vm416, %v2550, %v2705
    %v2762 = vld [vmem:[%s3] sm:$0x3f]
    %vm2763 = vcmask 490496
    %v2765 = vsel %vm2763, %v2762, 0
    %v2768 = vsel %vm416, %v2674, 0
    %v2771 = vsel %vm416, %v2671, 0
    %v2774 = vsel %vm416, %v2668, 0
    %v2777 = vsel %vm416, %v2665, 0
    %v2780 = vsel %vm416, %v2662, 0
    %v2783 = vsel %vm416, %v2659, 0
    %v2786 = vsel %vm416, %v2677, 0
    %2788 = vmatprep.subr.mxu0 0.0
    %2789 = vmatpush1.msra.mxu0 0.0
    %2790 = vmatprep.subr.mxu0 0.0
    %2791 = vmatpush1.msra.mxu0 0.0
    %2792 = vmatprep.subr.mxu0 0.0
    %2793 = vmatpush1.msra.mxu0 0.0
    %2794 = vmatprep.subr.mxu0 0.0
    %2795 = vmatpush1.msra.mxu0 0.0
    %2796 = vmatprep.subr.mxu0 0.0
    %2797 = vmatpush1.msra.mxu0 0.0
    %2798 = vmatprep.subr.mxu0 0.0
    %2799 = vmatpush1.msra.mxu0 0.0
    %2800 = vmatprep.subr.mxu0 0.0
    %2801 = vmatpush1.msra.mxu0 0.0
    %2802 = vmatprep.subr.mxu0 0.0
    %2803 = vmatpush1.msra.mxu0 0.0
    %2804 = vmatprep.subr.mxu0 %v2771
    %2805 = vmatpush1.msra.mxu0 %v2768
    %2806 = vmatprep.subr.mxu0 %v2670
    %2807 = vmatpush1.msra.mxu0 %v2673
    %2808 = vmatprep.subr.mxu0 %v2669
    %2809 = vmatpush1.msra.mxu0 %v2672
    %2810 = vmatprep.subr.mxu0 %v2723
    %2811 = vmatpush1.msra.mxu0 %v2721
    %2812 = vmatprep.subr.mxu0 %v2709
    %2813 = vmatpush1.msra.mxu0 %v2707
    %2814 = vmatprep.subr.mxu0 %v2756
    %2815 = vmatpush1.msra.mxu0 %v2755
    %2816 = vmatprep.subr.mxu0 %v2538
    %2817 = vmatpush1.msra.mxu0 %v2537
    %2818 = vmatprep.subr.mxu0 %v2531
    %2819 = vmatpush1.msra.mxu0 %v2530
    %2820 = vmatprep.subr.mxu0 0.0
    %2821 = vmatpush2.msra.mxu0 0.0
    %2822 = vmatprep.subr.mxu0 0.0
    %2823 = vmatpush2.msra.mxu0 0.0
    %2824 = vmatprep.subr.mxu0 0.0
    %2825 = vmatpush2.msra.mxu0 0.0
    %2826 = vmatprep.subr.mxu0 0.0
    %2827 = vmatpush2.msra.mxu0 0.0
    %2828 = vmatprep.subr.mxu0 0.0
    %2829 = vmatpush2.msra.mxu0 0.0
    %2830 = vmatprep.subr.mxu0 0.0
    %2831 = vmatpush2.msra.mxu0 0.0
    %2832 = vmatprep.subr.mxu0 0.0
    %2833 = vmatpush2.msra.mxu0 0.0
    %2834 = vmatprep.subr.mxu0 0.0
    %2835 = vmatpush2.msra.mxu0 0.0
    %2836 = vmatprep.subr.mxu0 0.0
    %2837 = vmatpush2.msra.mxu0 0.0
    %2838 = vmatprep.subr.mxu0 0.0
    %2839 = vmatpush2.msra.mxu0 0.0
    %2840 = vmatprep.subr.mxu0 0.0
    %2841 = vmatpush2.msra.mxu0 0.0
    %2842 = vmatprep.subr.mxu0 0.0
    %2843 = vmatpush2.msra.mxu0 0.0
    %2844 = vmatprep.subr.mxu0 0.0
    %2845 = vmatpush2.msra.mxu0 0.0
    %2846 = vmatprep.subr.mxu0 0.0
    %2847 = vmatpush2.msra.mxu0 0.0
    %2848 = vmatprep.subr.mxu0 0.0
    %2849 = vmatpush2.msra.mxu0 0.0
    %2850 = vmatprep.subr.mxu0 0.0
    %2851 = vmatpush2.msra.mxu0 0.0
    %2852 = vmatprep.mubr.f32.mxu0 0.0
    %2853 = vmatmul.mubr.f32.gmra.mxu0 %v2765
    %v2854 = vpop.f32.mrf.mxu0
    %v2855 = vadd.f32 0.0, %v2854
    %v2856 = vpop.f32.mrf.mxu0
    %v2857 = vadd.f32 0.0, %v2856
    %2858 = vdwg.mxu0
    %2859 = vmatprep.subr.mxu0 0.0
    %2860 = vmatpush1.msra.mxu0 0.0
    %2861 = vmatprep.subr.mxu0 0.0
    %2862 = vmatpush1.msra.mxu0 0.0
    %2863 = vmatprep.subr.mxu0 0.0
    %2864 = vmatpush1.msra.mxu0 0.0
    %2865 = vmatprep.subr.mxu0 0.0
    %2866 = vmatpush1.msra.mxu0 0.0
    %2867 = vmatprep.subr.mxu0 0.0
    %2868 = vmatpush1.msra.mxu0 0.0
    %2869 = vmatprep.subr.mxu0 0.0
    %2870 = vmatpush1.msra.mxu0 0.0
    %2871 = vmatprep.subr.mxu0 0.0
    %2872 = vmatpush1.msra.mxu0 0.0
    %2873 = vmatprep.subr.mxu0 0.0
    %2874 = vmatpush1.msra.mxu0 0.0
    %2875 = vmatprep.subr.mxu0 %v2777
    %2876 = vmatpush1.msra.mxu0 %v2774
    %2877 = vmatprep.subr.mxu0 %v2664
    %2878 = vmatpush1.msra.mxu0 %v2667
    %2879 = vmatprep.subr.mxu0 %v2663
    %2880 = vmatpush1.msra.mxu0 %v2666
    %2881 = vmatprep.subr.mxu0 %v2727
    %2882 = vmatpush1.msra.mxu0 %v2725
    %2883 = vmatprep.subr.mxu0 %v2713
    %2884 = vmatpush1.msra.mxu0 %v2711
    %2885 = vmatprep.subr.mxu0 %v2758
    %2886 = vmatpush1.msra.mxu0 %v2757
    %2887 = vmatprep.subr.mxu0 %v2540
    %2888 = vmatpush1.msra.mxu0 %v2539
    %2889 = vmatprep.subr.mxu0 %v2533
    %2890 = vmatpush1.msra.mxu0 %v2532
    %2891 = vmatprep.subr.mxu0 0.0
    %2892 = vmatpush2.msra.mxu0 0.0
    %2893 = vmatprep.subr.mxu0 0.0
    %2894 = vmatpush2.msra.mxu0 0.0
    %2895 = vmatprep.subr.mxu0 0.0
    %2896 = vmatpush2.msra.mxu0 0.0
    %2897 = vmatprep.subr.mxu0 0.0
    %2898 = vmatpush2.msra.mxu0 0.0
    %2899 = vmatprep.subr.mxu0 0.0
    %2900 = vmatpush2.msra.mxu0 0.0
    %2901 = vmatprep.subr.mxu0 0.0
    %2902 = vmatpush2.msra.mxu0 0.0
    %2903 = vmatprep.subr.mxu0 0.0
    %2904 = vmatpush2.msra.mxu0 0.0
    %2905 = vmatprep.subr.mxu0 0.0
    %2906 = vmatpush2.msra.mxu0 0.0
    %2907 = vmatprep.subr.mxu0 0.0
    %2908 = vmatpush2.msra.mxu0 0.0
    %2909 = vmatprep.subr.mxu0 0.0
    %2910 = vmatpush2.msra.mxu0 0.0
    %2911 = vmatprep.subr.mxu0 0.0
    %2912 = vmatpush2.msra.mxu0 0.0
    %2913 = vmatprep.subr.mxu0 0.0
    %2914 = vmatpush2.msra.mxu0 0.0
    %2915 = vmatprep.subr.mxu0 0.0
    %2916 = vmatpush2.msra.mxu0 0.0
    %2917 = vmatprep.subr.mxu0 0.0
    %2918 = vmatpush2.msra.mxu0 0.0
    %2919 = vmatprep.subr.mxu0 0.0
    %2920 = vmatpush2.msra.mxu0 0.0
    %2921 = vmatprep.subr.mxu0 0.0
    %2922 = vmatpush2.msra.mxu0 0.0
    %2923 = vmatprep.mubr.f32.mxu0 0.0
    %2924 = vmatmul.mubr.f32.gmra.mxu0 %v2765
    %v2925 = vpop.f32.mrf.mxu0
    %v2926 = vadd.f32 0.0, %v2925
    %v2927 = vpop.f32.mrf.mxu0
    %v2928 = vadd.f32 0.0, %v2927
    %2929 = vdwg.mxu0
    %2930 = vmatprep.subr.mxu0 0.0
    %2931 = vmatpush1.msra.mxu0 0.0
    %2932 = vmatprep.subr.mxu0 0.0
    %2933 = vmatpush1.msra.mxu0 0.0
    %2934 = vmatprep.subr.mxu0 0.0
    %2935 = vmatpush1.msra.mxu0 0.0
    %2936 = vmatprep.subr.mxu0 0.0
    %2937 = vmatpush1.msra.mxu0 0.0
    %2938 = vmatprep.subr.mxu0 0.0
    %2939 = vmatpush1.msra.mxu0 0.0
    %2940 = vmatprep.subr.mxu0 0.0
    %2941 = vmatpush1.msra.mxu0 0.0
    %2942 = vmatprep.subr.mxu0 0.0
    %2943 = vmatpush1.msra.mxu0 0.0
    %2944 = vmatprep.subr.mxu0 0.0
    %2945 = vmatpush1.msra.mxu0 0.0
    %2946 = vmatprep.subr.mxu0 %v2783
    %2947 = vmatpush1.msra.mxu0 %v2780
    %2948 = vmatprep.subr.mxu0 %v2658
    %2949 = vmatpush1.msra.mxu0 %v2661
    %2950 = vmatprep.subr.mxu0 %v2657
    %2951 = vmatpush1.msra.mxu0 %v2660
    %2952 = vmatprep.subr.mxu0 %v2731
    %2953 = vmatpush1.msra.mxu0 %v2729
    %2954 = vmatprep.subr.mxu0 %v2717
    %2955 = vmatpush1.msra.mxu0 %v2715
    %2956 = vmatprep.subr.mxu0 %v2760
    %2957 = vmatpush1.msra.mxu0 %v2759
    %2958 = vmatprep.subr.mxu0 %v2542
    %2959 = vmatpush1.msra.mxu0 %v2541
    %2960 = vmatprep.subr.mxu0 %v2535
    %2961 = vmatpush1.msra.mxu0 %v2534
    %2962 = vmatprep.subr.mxu0 0.0
    %2963 = vmatpush2.msra.mxu0 0.0
    %2964 = vmatprep.subr.mxu0 0.0
    %2965 = vmatpush2.msra.mxu0 0.0
    %2966 = vmatprep.subr.mxu0 0.0
    %2967 = vmatpush2.msra.mxu0 0.0
    %2968 = vmatprep.subr.mxu0 0.0
    %2969 = vmatpush2.msra.mxu0 0.0
    %2970 = vmatprep.subr.mxu0 0.0
    %2971 = vmatpush2.msra.mxu0 0.0
    %2972 = vmatprep.subr.mxu0 0.0
    %2973 = vmatpush2.msra.mxu0 0.0
    %2974 = vmatprep.subr.mxu0 0.0
    %2975 = vmatpush2.msra.mxu0 0.0
    %2976 = vmatprep.subr.mxu0 0.0
    %2977 = vmatpush2.msra.mxu0 0.0
    %2978 = vmatprep.subr.mxu0 0.0
    %2979 = vmatpush2.msra.mxu0 0.0
    %2980 = vmatprep.subr.mxu0 0.0
    %2981 = vmatpush2.msra.mxu0 0.0
    %2982 = vmatprep.subr.mxu0 0.0
    %2983 = vmatpush2.msra.mxu0 0.0
    %2984 = vmatprep.subr.mxu0 0.0
    %2985 = vmatpush2.msra.mxu0 0.0
    %2986 = vmatprep.subr.mxu0 0.0
    %2987 = vmatpush2.msra.mxu0 0.0
    %2988 = vmatprep.subr.mxu0 0.0
    %2989 = vmatpush2.msra.mxu0 0.0
    %2990 = vmatprep.subr.mxu0 0.0
    %2991 = vmatpush2.msra.mxu0 0.0
    %2992 = vmatprep.subr.mxu0 0.0
    %2993 = vmatpush2.msra.mxu0 0.0
    %2994 = vmatprep.mubr.f32.mxu0 0.0
    %2995 = vmatmul.mubr.f32.gmra.mxu0 %v2765
    %v2996 = vpop.f32.mrf.mxu0
    %v2997 = vadd.f32 0.0, %v2996
    %v2998 = vpop.f32.mrf.mxu0
    %v2999 = vadd.f32 0.0, %v2998
    %3000 = vdwg.mxu0
    %3001 = vmatprep.subr.mxu0 0.0
    %3002 = vmatpush1.msra.mxu0 0.0
    %3003 = vmatprep.subr.mxu0 0.0
    %3004 = vmatpush1.msra.mxu0 0.0
    %3005 = vmatprep.subr.mxu0 0.0
    %3006 = vmatpush1.msra.mxu0 0.0
    %3007 = vmatprep.subr.mxu0 0.0
    %3008 = vmatpush1.msra.mxu0 0.0
    %3009 = vmatprep.subr.mxu0 0.0
    %3010 = vmatpush1.msra.mxu0 0.0
    %3011 = vmatprep.subr.mxu0 0.0
    %3012 = vmatpush1.msra.mxu0 0.0
    %3013 = vmatprep.subr.mxu0 0.0
    %3014 = vmatpush1.msra.mxu0 0.0
    %3015 = vmatprep.subr.mxu0 0.0
    %3016 = vmatpush1.msra.mxu0 0.0
    %3017 = vmatprep.subr.mxu0 0.0
    %3018 = vmatpush1.msra.mxu0 %v2786
    %3019 = vmatprep.subr.mxu0 0.0
    %3020 = vmatpush1.msra.mxu0 %v2676
    %3021 = vmatprep.subr.mxu0 0.0
    %3022 = vmatpush1.msra.mxu0 %v2675
    %3023 = vmatprep.subr.mxu0 0.0
    %3024 = vmatpush1.msra.mxu0 %v2733
    %3025 = vmatprep.subr.mxu0 0.0
    %3026 = vmatpush1.msra.mxu0 %v2719
    %3027 = vmatprep.subr.mxu0 0.0
    %3028 = vmatpush1.msra.mxu0 %v2761
    %3029 = vmatprep.subr.mxu0 0.0
    %3030 = vmatpush1.msra.mxu0 %v2543
    %3031 = vmatprep.subr.mxu0 0.0
    %3032 = vmatpush1.msra.mxu0 %v2536
    %3033 = vmatprep.subr.mxu0 0.0
    %3034 = vmatpush2.msra.mxu0 0.0
    %3035 = vmatprep.subr.mxu0 0.0
    %3036 = vmatpush2.msra.mxu0 0.0
    %3037 = vmatprep.subr.mxu0 0.0
    %3038 = vmatpush2.msra.mxu0 0.0
    %3039 = vmatprep.subr.mxu0 0.0
    %3040 = vmatpush2.msra.mxu0 0.0
    %3041 = vmatprep.subr.mxu0 0.0
    %3042 = vmatpush2.msra.mxu0 0.0
    %3043 = vmatprep.subr.mxu0 0.0
    %3044 = vmatpush2.msra.mxu0 0.0
    %3045 = vmatprep.subr.mxu0 0.0
    %3046 = vmatpush2.msra.mxu0 0.0
    %3047 = vmatprep.subr.mxu0 0.0
    %3048 = vmatpush2.msra.mxu0 0.0
    %3049 = vmatprep.subr.mxu0 0.0
    %3050 = vmatpush2.msra.mxu0 0.0
    %3051 = vmatprep.subr.mxu0 0.0
    %3052 = vmatpush2.msra.mxu0 0.0
    %3053 = vmatprep.subr.mxu0 0.0
    %3054 = vmatpush2.msra.mxu0 0.0
    %3055 = vmatprep.subr.mxu0 0.0
    %3056 = vmatpush2.msra.mxu0 0.0
    %3057 = vmatprep.subr.mxu0 0.0
    %3058 = vmatpush2.msra.mxu0 0.0
    %3059 = vmatprep.subr.mxu0 0.0
    %3060 = vmatpush2.msra.mxu0 0.0
    %3061 = vmatprep.subr.mxu0 0.0
    %3062 = vmatpush2.msra.mxu0 0.0
    %3063 = vmatprep.subr.mxu0 0.0
    %3064 = vmatpush2.msra.mxu0 0.0
    %3065 = vmatprep.mubr.f32.mxu0 0.0
    %3066 = vmatmul.mubr.f32.gmra.mxu0 %v2765
    %v3067 = vpop.f32.mrf.mxu0
    %v3068 = vadd.f32 0.0, %v3067
    %v3069 = vpop.f32.mrf.mxu0
    %3070 = vdwg.mxu0
    %v3078 = vrot.slane %v2855, 2
    %v3079 = vrot.slane %v2857, 2
    %v3080 = vrot.slane %v2926, 2
    %v3081 = vrot.slane %v2928, 2
    %v3082 = vrot.slane %v2997, 2
    %v3083 = vrot.slane %v2999, 2
    %v3084 = vrot.slane %v3068, 2
    %v3092 = vmax.f32 %v2855, %v3078
    %v3093 = vmax.f32 %v2857, %v3079
    %v3094 = vmax.f32 %v2926, %v3080
    %v3095 = vmax.f32 %v2928, %v3081
    %v3096 = vmax.f32 %v2997, %v3082
    %v3097 = vmax.f32 %v2999, %v3083
    %v3098 = vmax.f32 %v3068, %v3084
    %v3099 = vrot.slane %v2855, 4
    %v3100 = vrot.slane %v2857, 4
    %v3101 = vrot.slane %v2926, 4
    %v3102 = vrot.slane %v2928, 4
    %v3103 = vrot.slane %v2997, 4
    %v3104 = vrot.slane %v2999, 4
    %v3105 = vrot.slane %v3068, 4
    %v3113 = vmax.f32 %v3092, %v3099
    %v3114 = vmax.f32 %v3093, %v3100
    %v3115 = vmax.f32 %v3094, %v3101
    %v3116 = vmax.f32 %v3095, %v3102
    %v3117 = vmax.f32 %v3096, %v3103
    %v3118 = vmax.f32 %v3097, %v3104
    %v3119 = vmax.f32 %v3098, %v3105
    %3120 = vrot.lane.b32.xlu0 %v3113, 124
    %v3121 = vpop.permute.xlu0 %3120
    %3122 = vrot.lane.b32.xlu0 %v3114, 124
    %v3123 = vpop.permute.xlu0 %3122
    %3124 = vrot.lane.b32.xlu0 %v3115, 124
    %v3125 = vpop.permute.xlu0 %3124
    %3126 = vrot.lane.b32.xlu0 %v3116, 124
    %v3127 = vpop.permute.xlu0 %3126
    %3128 = vrot.lane.b32.xlu0 %v3117, 124
    %v3129 = vpop.permute.xlu0 %3128
    %3130 = vrot.lane.b32.xlu0 %v3118, 124
    %v3131 = vpop.permute.xlu0 %3130
    %3132 = vrot.lane.b32.xlu0 %v3119, 124
    %v3133 = vpop.permute.xlu0 %3132
    %v3134 = vsel %vm359, %v3131, %v3133
    %v3135 = vsel %vm359, %v3129, %v3131
    %v3136 = vsel %vm359, %v3127, %v3129
    %v3137 = vsel %vm359, %v3125, %v3127
    %v3138 = vsel %vm359, %v3123, %v3125
    %v3139 = vsel %vm359, %v3121, %v3123
    %v3140 = vsel %vm359, %v3133, %v3121
    %v3141 = vmax.f32 %v3113, %v3139
    %v3142 = vmax.f32 %v3114, %v3138
    %v3143 = vmax.f32 %v3115, %v3137
    %v3144 = vmax.f32 %v3116, %v3136
    %v3145 = vmax.f32 %v3117, %v3135
    %v3146 = vmax.f32 %v3118, %v3134
    %v3147 = vmax.f32 %v3119, %v3140
    %3148 = vrot.lane.b32.xlu0 %v3113, 120
    %v3149 = vpop.permute.xlu0 %3148
    %3150 = vrot.lane.b32.xlu0 %v3114, 120
    %v3151 = vpop.permute.xlu0 %3150
    %3152 = vrot.lane.b32.xlu0 %v3115, 120
    %v3153 = vpop.permute.xlu0 %3152
    %3154 = vrot.lane.b32.xlu0 %v3116, 120
    %v3155 = vpop.permute.xlu0 %3154
    %3156 = vrot.lane.b32.xlu0 %v3117, 120
    %v3157 = vpop.permute.xlu0 %3156
    %3158 = vrot.lane.b32.xlu0 %v3118, 120
    %v3159 = vpop.permute.xlu0 %3158
    %3160 = vrot.lane.b32.xlu0 %v3119, 120
    %v3161 = vpop.permute.xlu0 %3160
    %v3162 = vsel %vm2656, %v3159, %v3161
    %v3163 = vsel %vm2656, %v3157, %v3159
    %v3164 = vsel %vm2656, %v3155, %v3157
    %v3165 = vsel %vm2656, %v3153, %v3155
    %v3166 = vsel %vm2656, %v3151, %v3153
    %v3167 = vsel %vm2656, %v3149, %v3151
    %v3168 = vsel %vm2656, %v3161, %v3149
    %v3169 = vmax.f32 %v3141, %v3167
    %v3170 = vmax.f32 %v3142, %v3166
    %v3171 = vmax.f32 %v3143, %v3165
    %v3172 = vmax.f32 %v3144, %v3164
    %v3173 = vmax.f32 %v3145, %v3163
    %v3174 = vmax.f32 %v3146, %v3162
    %v3175 = vmax.f32 %v3147, %v3168
    %v3183 = vrot.slane %v3169, 1
    %v3184 = vrot.slane %v3170, 1
    %v3185 = vrot.slane %v3171, 1
    %v3186 = vrot.slane %v3172, 1
    %v3187 = vrot.slane %v3173, 1
    %v3188 = vrot.slane %v3174, 1
    %v3189 = vrot.slane %v3175, 1
    %v3197 = vmax.f32 %v3169, %v3183
    %v3198 = vmax.f32 %v3170, %v3184
    %v3199 = vmax.f32 %v3171, %v3185
    %v3200 = vmax.f32 %v3172, %v3186
    %v3201 = vmax.f32 %v3173, %v3187
    %v3202 = vmax.f32 %v3174, %v3188
    %v3203 = vmax.f32 %v3175, %v3189
    %v3204 = vsub.f32 %v3169, %v3197
    %v3205 = vsub.f32 %v3170, %v3198
    %v3206 = vsub.f32 %v3171, %v3199
    %v3207 = vsub.f32 %v3172, %v3200
    %v3208 = vsub.f32 %v3173, %v3201
    %v3209 = vsub.f32 %v3174, %v3202
    %v3210 = vsub.f32 %v3175, %v3203
    %v3211 = vmul.f32 %v3204, 1.442695
    %v3212 = vpow.pop %v3211
    %v3213 = vmul.f32 %v3205, 1.442695
    %v3214 = vpow.pop %v3213
    %v3215 = vmul.f32 %v3206, 1.442695
    %v3216 = vpow.pop %v3215
    %v3217 = vmul.f32 %v3207, 1.442695
    %v3218 = vpow.pop %v3217
    %v3219 = vmul.f32 %v3208, 1.442695
    %v3220 = vpow.pop %v3219
    %v3221 = vmul.f32 %v3209, 1.442695
    %v3222 = vpow.pop %v3221
    %v3223 = vmul.f32 %v3210, 1.442695
    %v3224 = vpow.pop %v3223
    %v3232 = vrot.slane %v3197, 7
    %v3233 = vrot.slane %v3198, 7
    %v3234 = vrot.slane %v3199, 7
    %v3235 = vrot.slane %v3200, 7
    %v3236 = vrot.slane %v3201, 7
    %v3237 = vrot.slane %v3202, 7
    %v3238 = vrot.slane %v3203, 7
    %v3246 = vsub.f32 %v3169, %v3232
    %v3247 = vsub.f32 %v3170, %v3233
    %v3248 = vsub.f32 %v3171, %v3234
    %v3249 = vsub.f32 %v3172, %v3235
    %v3250 = vsub.f32 %v3173, %v3236
    %v3251 = vsub.f32 %v3174, %v3237
    %v3252 = vsub.f32 %v3175, %v3238
    %v3253 = vmul.f32 %v3246, 1.442695
    %v3254 = vpow.pop %v3253
    %v3255 = vmul.f32 %v3247, 1.442695
    %v3256 = vpow.pop %v3255
    %v3257 = vmul.f32 %v3248, 1.442695
    %v3258 = vpow.pop %v3257
    %v3259 = vmul.f32 %v3249, 1.442695
    %v3260 = vpow.pop %v3259
    %v3261 = vmul.f32 %v3250, 1.442695
    %v3262 = vpow.pop %v3261
    %v3263 = vmul.f32 %v3251, 1.442695
    %v3264 = vpow.pop %v3263
    %v3265 = vmul.f32 %v3252, 1.442695
    %v3266 = vpow.pop %v3265
    %v3274 = vrot.slane %v3254, 1
    %v3275 = vrot.slane %v3256, 1
    %v3276 = vrot.slane %v3258, 1
    %v3277 = vrot.slane %v3260, 1
    %v3278 = vrot.slane %v3262, 1
    %v3279 = vrot.slane %v3264, 1
    %v3280 = vrot.slane %v3266, 1
    %v3288 = vadd.f32 %v3212, %v3274
    %v3289 = vadd.f32 %v3214, %v3275
    %v3290 = vadd.f32 %v3216, %v3276
    %v3291 = vadd.f32 %v3218, %v3277
    %v3292 = vadd.f32 %v3220, %v3278
    %v3293 = vadd.f32 %v3222, %v3279
    %v3294 = vadd.f32 %v3224, %v3280
    %v3295 = vlog2.pop %v3288
    %v3296 = vmul.f32 %v3295, 0.6931472
    %v3297 = vlog2.pop %v3289
    %v3298 = vmul.f32 %v3297, 0.6931472
    %v3299 = vlog2.pop %v3290
    %v3300 = vmul.f32 %v3299, 0.6931472
    %v3301 = vlog2.pop %v3291
    %v3302 = vmul.f32 %v3301, 0.6931472
    %v3303 = vlog2.pop %v3292
    %v3304 = vmul.f32 %v3303, 0.6931472
    %v3305 = vlog2.pop %v3293
    %v3306 = vmul.f32 %v3305, 0.6931472
    %v3307 = vlog2.pop %v3294
    %v3308 = vmul.f32 %v3307, 0.6931472
    %v3309 = vadd.f32 %v3197, %v3296
    %v3310 = vadd.f32 %v3198, %v3298
    %v3311 = vadd.f32 %v3199, %v3300
    %v3312 = vadd.f32 %v3200, %v3302
    %v3313 = vadd.f32 %v3201, %v3304
    %v3314 = vadd.f32 %v3202, %v3306
    %v3315 = vadd.f32 %v3203, %v3308
    %v3316 = vsub.f32 %v3169, %v3309
    %v3317 = vsub.f32 %v3170, %v3310
    %v3318 = vsub.f32 %v3171, %v3311
    %v3319 = vsub.f32 %v3172, %v3312
    %v3320 = vsub.f32 %v3173, %v3313
    %v3321 = vsub.f32 %v3174, %v3314
    %v3322 = vsub.f32 %v3175, %v3315
    %v3330 = vrot.slane %v3309, 7
    %v3331 = vrot.slane %v3310, 7
    %v3332 = vrot.slane %v3311, 7
    %v3333 = vrot.slane %v3312, 7
    %v3334 = vrot.slane %v3313, 7
    %v3335 = vrot.slane %v3314, 7
    %v3336 = vrot.slane %v3315, 7
    %v3344 = vsub.f32 %v3169, %v3330
    %v3345 = vsub.f32 %v3170, %v3331
    %v3346 = vsub.f32 %v3171, %v3332
    %v3347 = vsub.f32 %v3172, %v3333
    %v3348 = vsub.f32 %v3173, %v3334
    %v3349 = vsub.f32 %v3174, %v3335
    %v3350 = vsub.f32 %v3175, %v3336
    %vm3351 = vcmask 1040384
    %v3352 = vsel %vm3351, %v3316, %v3344
    %v3353 = vsel %vm3351, %v3317, %v3345
    %v3354 = vsel %vm3351, %v3318, %v3346
    %v3355 = vsel %vm3351, %v3319, %v3347
    %v3356 = vsel %vm3351, %v3320, %v3348
    %v3357 = vsel %vm3351, %v3321, %v3349
    %v3358 = vsel %vm3351, %v3322, %v3350
    %v3366 = vcombine.low %v3352, %v3353
    %v3367 = vcombine.low %v3354, %v3355
    %v3369 = vunpack.c.l.s4 1983009808
    %v3370 = vunpack.c.0.s8 %v3369
    %v3371 = vlaneseq
    %v3372 = vshrl.u32 %v3371, 7
    %v3373 = vsub.s32 %v3370, %v3372
    %v3374 = vrot.slane %v3366, %v3373
    %v3376 = vunpack.c.l.s4 1983009808
    %v3377 = vunpack.c.0.s8 %v3376
    %v3378 = vlaneseq
    %v3379 = vshrl.u32 %v3378, 7
    %v3380 = vsub.s32 %v3377, %v3379
    %v3381 = vrot.slane %v3367, %v3380
    %v3382 = vcombine.low %v3374, %v3381
    %v3383 = vcombine.low %v3356, %v3357
    %v3385 = vunpack.c.l.s4 1983009808
    %v3386 = vunpack.c.0.s8 %v3385
    %v3387 = vlaneseq
    %v3388 = vshrl.u32 %v3387, 7
    %v3389 = vsub.s32 %v3386, %v3388
    %v3390 = vrot.slane %v3383, %v3389
    %v3392 = vunpack.c.l.s4 1983009808
    %v3393 = vunpack.c.0.s8 %v3392
    %v3394 = vlaneseq
    %v3395 = vshrl.u32 %v3394, 7
    %v3396 = vsub.s32 %v3393, %v3395
    %v3397 = vrot.slane %v3358, %v3396
    %v3398 = vcombine.low %v3390, %v3397
    %3401 = vst [vmem:[#allocation2] sm:$0xff] %v3382
    %3402 = vst [vmem:[#allocation2 + $0x8] sm:$0x3f] %v3398
    // Predicated region
    $region18: #{tpu_custom_call.1} parent=1 // pred_check
      _
    $region19: #{tpu_custom_call.1} parent=1 // pred_check_branch
      %3404 = sbr.rel (0) target = $region21
    $region20: #{tpu_custom_call.1} parent=1 // pred_region
      %s3406 = ssub.s32 224, 224
      %3407 = vsyncadd [#allocation3], %s3406
      %s3409 = sshll.u32 [#allocation2], 4
      %s3410 = int_to_ptr.vmem [resolvable:$true] %s3409
      %3412 = dma.vmem_to_hbm [thread:$0]  %s3410, 224, %s4, [#allocation3]
    $region21: #{tpu_custom_call.1} parent=1 // pred_fallthru
      _
    // Predicated region
    $region22: #{tpu_custom_call.1} parent=1 // pred_check
      _
    $region23: #{tpu_custom_call.1} parent=1 // pred_check_branch
      %3414 = sbr.rel (0) target = $region25
    $region24: #{tpu_custom_call.1} parent=1 // pred_region
      %3415 = dma.done [#allocation3], 224
    $region25: #{tpu_custom_call.1} parent=1 // pred_fallthru
      _
    %3416 = vsyncpa [#allocation3], 1

</llo_original>
